<compile_context>
chip_gen: v6e
topology: v6e:2x2x1
jax: 0.10.0
libtpu: 0.0.40
codegen_flags: <defaults>
</compile_context>

<pallas_src>
import jax
import jax.numpy as jnp
from jax.experimental import pallas as pl
from jax.experimental.pallas import tpu as pltpu


# ----------------------------------------------------------------------------
# Fused Pallas kernel: 4x (2x2 stride-2 conv as matmul + bias + ReLU).
# One grid step processes `rb` independent 16x16 input tiles ("roots").
#
# Layout (per block, channels on sublanes, positions on lanes):
#   stage-0 input patches : (4*Cin, 64*rb)  lanes = (b0,a0, b1,a1, b2,a2, r)
#   stage-0 activations   : (C0,    64*rb)  lanes = (b0,a0, b1,a1, b2,a2, r)
#   stage-1 activations   : (C1,    16*rb)  lanes = (b1,a1, b2,a2, r)
#   stage-2 activations   : (C2,     4*rb)  lanes = (b2,a2, r)
#   stage-3 activations   : (C3,       rb)  lanes = (r)
# where (b*,a*) are the per-level 2x2 child bits and r the root index.
# Because the child pair is always the most-significant lane bits, each
# space-to-depth is 4 contiguous, 128-aligned lane slabs stacked on the
# channel (sublane) axis -- i.e. one cheap concatenate, then one matmul.
# ----------------------------------------------------------------------------
def _fused_pyramid_kernel(p0_ref, w0_ref, b0_ref, w1_ref, b1_ref,
                          w2_ref, b2_ref, w3_ref, b3_ref,
                          o0_ref, o1_ref, o2_ref, o3_ref):
    rb = o3_ref.shape[1]                       # roots in this block (>= 128)

    def stage(w_ref, b_ref, patches):
        # (Cout, K) bf16 @ (K, L) bf16 -> f32 accumulate, f32 bias + ReLU.
        acc = jnp.dot(w_ref[...], patches, preferred_element_type=jnp.float32)
        return jnp.maximum(acc + b_ref[...], 0.0)

    def regroup(act, lanes):
        # child (2x2) index is the most significant lane bit-pair: slice the
        # 4 lane-aligned child slabs and stack them on the channel axis.
        return jnp.concatenate(
            [act[:, k * lanes:(k + 1) * lanes] for k in range(4)], axis=0)

    a0 = stage(w0_ref, b0_ref, p0_ref[...])                       # (C0, 64*rb)
    o0_ref[...] = a0.astype(o0_ref.dtype)

    a1 = stage(w1_ref, b1_ref,
               regroup(a0, 16 * rb).astype(jnp.bfloat16))          # (C1, 16*rb)
    o1_ref[...] = a1.astype(o1_ref.dtype)

    a2 = stage(w2_ref, b2_ref,
               regroup(a1, 4 * rb).astype(jnp.bfloat16))           # (C2, 4*rb)
    o2_ref[...] = a2.astype(o2_ref.dtype)

    a3 = stage(w3_ref, b3_ref,
               regroup(a2, rb).astype(jnp.bfloat16))                # (C3, rb)
    o3_ref[...] = a3.astype(o3_ref.dtype)


def _choose_rb(num_roots):
    """Pick (roots-per-block rb, number-of-blocks NB).

    rb is a multiple of 128 (lane-dense stores), capped at 1024 so the live
    per-step footprint stays well inside 32 MiB scoped VMEM on every
    generation (v7x has only 64 MiB physical). Prefer NB >= 2 so v7x megacore
    ("parallel" grid axis) can shard both TensorCores.
    """
    m = -(-num_roots // 128)                     # 128-root groups (rounded up)
    divs = [d for d in (8, 6, 5, 4, 3, 2, 1) if m % d == 0]
    for d in divs:
        if m // d >= 2:
            return 128 * d, m // d
    return 128 * divs[0], m // divs[0]


# ----------------------------------------------------------------------------
# JIT wrapper: pack input once (in bf16), run the fused kernel, decode outputs.
# ----------------------------------------------------------------------------
@jax.jit
def _pyramid_forward(x, params):
    (w0, b0), (w1, b1), (w2, b2), (w3, b3) = params
    N, Cin, H, W = x.shape
    assert H % 16 == 0 and W % 16 == 0, "H and W must be multiples of 16"
    HR, WR = H // 16, W // 16
    R = N * HR * WR                                    # independent 16x16 roots
    C0, C1, C2, C3 = w0.shape[0], w1.shape[0], w2.shape[0], w3.shape[0]

    rb, NB = _choose_rb(R)
    R_pad = rb * NB

    # ---- pack NCHW -> (4*Cin, NB*64*rb) bf16, slot-major lanes per block ----
    # h = hr*16 + b2*8 + b1*4 + b0*2 + kh ; w = wr*16 + a2*8 + a1*4 + a0*2 + kw
    xb = x.astype(jnp.bfloat16)                        # bf16 BEFORE the packing pass
    xr = xb.reshape(N, Cin, HR, 2, 2, 2, 2, WR, 2, 2, 2, 2)
    # dims: 0 N, 1 Cin, 2 HR, 3 b2, 4 b1, 5 b0, 6 kh, 7 WR, 8 a2, 9 a1, 10 a0, 11 kw
    p = xr.transpose(6, 11, 1, 5, 10, 4, 9, 3, 8, 0, 2, 7)
    # -> (kh, kw, Cin, b0, a0, b1, a1, b2, a2, N, HR, WR)
    p = p.reshape(4 * Cin, 64, R)
    if R_pad != R:
        p = jnp.pad(p, ((0, 0), (0, 0), (0, R_pad - R)))
    p = (p.reshape(4 * Cin, 64, NB, rb).transpose(0, 2, 1, 3)
          .reshape(4 * Cin, NB * 64 * rb))

    def full_spec(arr):
        return pl.BlockSpec(arr.shape, lambda i: (0, 0))

    out_shape = (
        jax.ShapeDtypeStruct((C0, NB * 64 * rb), jnp.bfloat16),
        jax.ShapeDtypeStruct((C1, NB * 16 * rb), jnp.bfloat16),
        jax.ShapeDtypeStruct((C2, NB * 4 * rb), jnp.bfloat16),
        jax.ShapeDtypeStruct((C3, NB * rb), jnp.bfloat16),
    )
    o0, o1, o2, o3 = pl.pallas_call(
        _fused_pyramid_kernel,
        out_shape=out_shape,
        grid=(NB,),
        in_specs=(
            pl.BlockSpec((4 * Cin, 64 * rb), lambda i: (0, i)),
            full_spec(w0), full_spec(b0),
            full_spec(w1), full_spec(b1),
            full_spec(w2), full_spec(b2),
            full_spec(w3), full_spec(b3),
        ),
        out_specs=(
            pl.BlockSpec((C0, 64 * rb), lambda i: (0, i)),
            pl.BlockSpec((C1, 16 * rb), lambda i: (0, i)),
            pl.BlockSpec((C2, 4 * rb), lambda i: (0, i)),
            pl.BlockSpec((C3, rb), lambda i: (0, i)),
        ),
        compiler_params=pltpu.CompilerParams(
            dimension_semantics=("parallel",),
            vmem_limit_bytes=32 * 1024 * 1024),
    )(p, w0, b0, w1, b1, w2, b2, w3, b3)

    # ---- decode slot-ordered kernel outputs to NCHW f32 ----
    def decode(o, ch, pairs):
        side = 1 << pairs                                  # spatial side per root
        t = o.reshape((ch, NB) + (2,) * (2 * pairs) + (rb,))
        b_axes = tuple(2 + 2 * j for j in reversed(range(pairs)))
        a_axes = tuple(3 + 2 * j for j in reversed(range(pairs)))
        perm = (1, 2 + 2 * pairs, 0) + b_axes + a_axes
        t = t.transpose(perm).reshape(R_pad, ch, side, side)[:R]
        t = t.reshape(N, HR, WR, ch, side, side).transpose(0, 3, 1, 4, 2, 5)
        return t.reshape(N, ch, HR * side, WR * side).astype(jnp.float32)

    return decode(o0, C0, 3), decode(o1, C1, 2), decode(o2, C2, 1), decode(o3, C3, 0)


# ----------------------------------------------------------------------------
# Wrapper mirroring TimmBackboneWrapper.forward semantics
# ----------------------------------------------------------------------------
class TimmBackboneWrapperPallas:
    """Synthetic stand-in for timm.create_model(..., features_only=True).

    Produces a 4-level feature pyramid ('0'..'3'); each level halves the
    spatial resolution and changes the channel count, like a timm
    features_only backbone. Weights are deterministic (PRNGKey-based).
    """

    def __init__(self, in_channels=3, stage_channels=(8, 16, 32, 64),
                 output_layers=None, seed=42):
        assert len(stage_channels) == 4
        self.output_layers = output_layers if output_layers else ["0", "1", "2", "3"]
        self.in_channels = in_channels
        self.stage_channels = tuple(stage_channels)

        key = jax.random.PRNGKey(seed)
        self.raw_params = []
        cin = in_channels
        for cout in stage_channels:
            key, kw, kb = jax.random.split(key, 3)
            w = jax.random.normal(kw, (2, 2, cin, cout), jnp.float32) * 0.1
            b = jax.random.normal(kb, (cout,), jnp.float32) * 0.01
            self.raw_params.append((w, b))
            cin = cout

        # Kernel-ready params: (Cout, 4*Cin) bf16 transposed weights (channels
        # on sublanes) and (Cout, 1) f32 biases broadcast along lanes.
        kp = []
        for (w, b) in self.raw_params:
            cin_s, cout_s = w.shape[2], w.shape[3]
            w_t = jnp.transpose(w.reshape(4 * cin_s, cout_s)).astype(jnp.bfloat16)
            b_c = b.reshape(cout_s, 1).astype(jnp.float32)
            kp.append((w_t, b_c))
        self.kernel_params = tuple(kp)

    def forward(self, x, layers=None):
        if layers is None:
            layers = self.output_layers
        feats = _pyramid_forward(x, self.kernel_params)
        feature_dict = {str(i): f for i, f in enumerate(feats)}
        return {layer: feature_dict[layer] for layer in layers if layer in feature_dict}

    __call__ = forward


# ----------------------------------------------------------------------------
# Plain-JAX reference (same bf16-in / f32-accumulate math) for validation.
# ----------------------------------------------------------------------------
def _reference_features(x, raw_params):
    h = jnp.transpose(x.astype(jnp.float32), (0, 2, 3, 1))  # NHWC
    feats = []
    for (w, b) in raw_params:
        N, H, W, C = h.shape
        OH, OW = H // 2, W // 2
        cout = w.shape[-1]
        patches = (h.reshape(N, OH, 2, OW, 2, C)
                   .transpose(0, 1, 3, 2, 4, 5)
                   .reshape(N * OH * OW, 4 * C))
        y = jnp.dot(patches.astype(jnp.bfloat16),
                    w.reshape(4 * C, cout).astype(jnp.bfloat16),
                    preferred_element_type=jnp.float32) + b.reshape(1, cout)
        y = jnp.maximum(y, 0.0)
        h = y.reshape(N, OH, OW, cout)
        feats.append(jnp.transpose(h, (0, 3, 1, 2)))
    return feats


# ----------------------------------------------------------------------------
if __name__ == "__main__":
    backbone = TimmBackboneWrapperPallas(in_channels=3,
                                         stage_channels=(8, 16, 32, 64))
    key = jax.random.PRNGKey(0)

    # Small canonical test (R=2, exercises root padding, single grid step) and
    # a larger one exercising the multi-block grid path (R=640 -> 5 steps).
    for shape in [(2, 3, 16, 16), (2, 3, 256, 320)]:
        key, sub = jax.random.split(key)
        x = jax.random.normal(sub, shape, jnp.float32)

        out = jax.block_until_ready(backbone(x))          # dict '0'..'3' -> NCHW

        N, _, H, W = shape
        for i, name in enumerate(["0", "1", "2", "3"]):
            cs = backbone.stage_channels[i]
            exp = (N, cs, H >> (i + 1), W >> (i + 1))
            assert out[name].shape == exp, (name, out[name].shape, exp)
            assert bool(jnp.all(jnp.isfinite(out[name])))

        ref = _reference_features(x, backbone.raw_params)
        for i, name in enumerate(["0", "1", "2", "3"]):
            err = float(jnp.max(jnp.abs(out[name] - ref[i])))
            assert err < 2e-2, (shape, name, err)

    print("KERNEL_OK")
</pallas_src>

<mosaic_0001>
module attributes {stable_mosaic.version = 11 : i64} {
  func.func @_fused_pyramid_kernel(%arg0: i32, %arg1: memref<12x8192xbf16, #tpu.memory_space<vmem>>, %arg2: memref<8x12xbf16, #tpu.memory_space<vmem>>, %arg3: memref<8x1xf32, #tpu.memory_space<vmem>>, %arg4: memref<16x32xbf16, #tpu.memory_space<vmem>>, %arg5: memref<16x1xf32, #tpu.memory_space<vmem>>, %arg6: memref<32x64xbf16, #tpu.memory_space<vmem>>, %arg7: memref<32x1xf32, #tpu.memory_space<vmem>>, %arg8: memref<64x128xbf16, #tpu.memory_space<vmem>>, %arg9: memref<64x1xf32, #tpu.memory_space<vmem>>, %arg10: memref<8x8192xbf16, #tpu.memory_space<vmem>>, %arg11: memref<16x2048xbf16, #tpu.memory_space<vmem>>, %arg12: memref<32x512xbf16, #tpu.memory_space<vmem>>, %arg13: memref<64x128xbf16, #tpu.memory_space<vmem>>) attributes {dimension_semantics = [#tpu.dimension_semantics<parallel>], iteration_bounds = array<i64: 1>, scalar_prefetch = 0 : i64, scratch_operands = 0 : i64, tpu.core_type = #tpu.core_type<tc>, window_params = [{transform_indices = @transform_0, window_bounds = array<i64: 12, 8192>}, {pipeline_mode = #tpu.pipeline_mode<synchronous>, transform_indices = @transform_1, window_bounds = array<i64: 8, 12>}, {pipeline_mode = #tpu.pipeline_mode<synchronous>, transform_indices = @transform_2, window_bounds = array<i64: 8, 1>}, {pipeline_mode = #tpu.pipeline_mode<synchronous>, transform_indices = @transform_3, window_bounds = array<i64: 16, 32>}, {pipeline_mode = #tpu.pipeline_mode<synchronous>, transform_indices = @transform_4, window_bounds = array<i64: 16, 1>}, {pipeline_mode = #tpu.pipeline_mode<synchronous>, transform_indices = @transform_5, window_bounds = array<i64: 32, 64>}, {pipeline_mode = #tpu.pipeline_mode<synchronous>, transform_indices = @transform_6, window_bounds = array<i64: 32, 1>}, {pipeline_mode = #tpu.pipeline_mode<synchronous>, transform_indices = @transform_7, window_bounds = array<i64: 64, 128>}, {pipeline_mode = #tpu.pipeline_mode<synchronous>, transform_indices = @transform_8, window_bounds = array<i64: 64, 1>}, {transform_indices = @transform_9, window_bounds = array<i64: 8, 8192>}, {transform_indices = @transform_10, window_bounds = array<i64: 16, 2048>}, {transform_indices = @transform_11, window_bounds = array<i64: 32, 512>}, {transform_indices = @transform_12, window_bounds = array<i64: 64, 128>}]} {
    %c0 = arith.constant 0 : index
    %c0_0 = arith.constant 0 : index
    %0 = vector.load %arg1[%c0, %c0_0] : memref<12x8192xbf16, #tpu.memory_space<vmem>>, vector<12x8192xbf16>
    %c0_1 = arith.constant 0 : index
    %c0_2 = arith.constant 0 : index
    %1 = vector.load %arg2[%c0_1, %c0_2] : memref<8x12xbf16, #tpu.memory_space<vmem>>, vector<8x12xbf16>
    %cst = arith.constant dense<0.000000e+00> : vector<8x8192xf32>
    %2 = tpu.matmul %1, %0, %cst {dimension_numbers = #tpu.dot_dimension_numbers<[1], [0], [0], [1], [0, 0, 1, 1], [], []>} : vector<8x12xbf16>, vector<12x8192xbf16>, vector<8x8192xf32> -> vector<8x8192xf32>
    %c0_3 = arith.constant 0 : index
    %c0_4 = arith.constant 0 : index
    %3 = vector.load %arg3[%c0_3, %c0_4] : memref<8x1xf32, #tpu.memory_space<vmem>>, vector<8x1xf32>
    %4 = vector.broadcast %3 : vector<8x1xf32> to vector<8x8192xf32>
    %5 = arith.addf %2, %4 : vector<8x8192xf32>
    %cst_5 = arith.constant 0.000000e+00 : f32
    %6 = vector.broadcast %cst_5 : f32 to vector<8x8192xf32>
    %7 = arith.maximumf %5, %6 : vector<8x8192xf32>
    %8 = arith.truncf %7 : vector<8x8192xf32> to vector<8x8192xbf16>
    %c0_6 = arith.constant 0 : index
    %c0_7 = arith.constant 0 : index
    %9 = vector.load %arg10[%c0_6, %c0_7] : memref<8x8192xbf16, #tpu.memory_space<vmem>>, vector<8x8192xbf16>
    tpu.vector_store %arg10[%c0_6, %c0_7], %8 {strides = array<i32>} : memref<8x8192xbf16, #tpu.memory_space<vmem>>, vector<8x8192xbf16>,
    %10 = vector.extract_strided_slice %7 {offsets = [0, 0], sizes = [8, 2048], strides = [1, 1]} : vector<8x8192xf32> to vector<8x2048xf32>
    %11 = vector.extract_strided_slice %7 {offsets = [0, 2048], sizes = [8, 2048], strides = [1, 1]} : vector<8x8192xf32> to vector<8x2048xf32>
    %12 = vector.extract_strided_slice %7 {offsets = [0, 4096], sizes = [8, 2048], strides = [1, 1]} : vector<8x8192xf32> to vector<8x2048xf32>
    %13 = vector.extract_strided_slice %7 {offsets = [0, 6144], sizes = [8, 2048], strides = [1, 1]} : vector<8x8192xf32> to vector<8x2048xf32>
    %14 = tpu.concatenate %10, %11, %12, %13 in 0 : vector<8x2048xf32>, vector<8x2048xf32>, vector<8x2048xf32>, vector<8x2048xf32> -> vector<32x2048xf32>
    %15 = arith.truncf %14 : vector<32x2048xf32> to vector<32x2048xbf16>
    %c0_8 = arith.constant 0 : index
    %c0_9 = arith.constant 0 : index
    %16 = vector.load %arg4[%c0_8, %c0_9] : memref<16x32xbf16, #tpu.memory_space<vmem>>, vector<16x32xbf16>
    %cst_10 = arith.constant dense<0.000000e+00> : vector<16x2048xf32>
    %17 = tpu.matmul %16, %15, %cst_10 {dimension_numbers = #tpu.dot_dimension_numbers<[1], [0], [0], [1], [0, 0, 1, 1], [], []>} : vector<16x32xbf16>, vector<32x2048xbf16>, vector<16x2048xf32> -> vector<16x2048xf32>
    %c0_11 = arith.constant 0 : index
    %c0_12 = arith.constant 0 : index
    %18 = vector.load %arg5[%c0_11, %c0_12] : memref<16x1xf32, #tpu.memory_space<vmem>>, vector<16x1xf32>
    %19 = vector.broadcast %18 : vector<16x1xf32> to vector<16x2048xf32>
    %20 = arith.addf %17, %19 : vector<16x2048xf32>
    %cst_13 = arith.constant 0.000000e+00 : f32
    %21 = vector.broadcast %cst_13 : f32 to vector<16x2048xf32>
    %22 = arith.maximumf %20, %21 : vector<16x2048xf32>
    %23 = arith.truncf %22 : vector<16x2048xf32> to vector<16x2048xbf16>
    %c0_14 = arith.constant 0 : index
    %c0_15 = arith.constant 0 : index
    %24 = vector.load %arg11[%c0_14, %c0_15] : memref<16x2048xbf16, #tpu.memory_space<vmem>>, vector<16x2048xbf16>
    tpu.vector_store %arg11[%c0_14, %c0_15], %23 {strides = array<i32>} : memref<16x2048xbf16, #tpu.memory_space<vmem>>, vector<16x2048xbf16>,
    %25 = vector.extract_strided_slice %22 {offsets = [0, 0], sizes = [16, 512], strides = [1, 1]} : vector<16x2048xf32> to vector<16x512xf32>
    %26 = vector.extract_strided_slice %22 {offsets = [0, 512], sizes = [16, 512], strides = [1, 1]} : vector<16x2048xf32> to vector<16x512xf32>
    %27 = vector.extract_strided_slice %22 {offsets = [0, 1024], sizes = [16, 512], strides = [1, 1]} : vector<16x2048xf32> to vector<16x512xf32>
    %28 = vector.extract_strided_slice %22 {offsets = [0, 1536], sizes = [16, 512], strides = [1, 1]} : vector<16x2048xf32> to vector<16x512xf32>
    %29 = tpu.concatenate %25, %26, %27, %28 in 0 : vector<16x512xf32>, vector<16x512xf32>, vector<16x512xf32>, vector<16x512xf32> -> vector<64x512xf32>
    %30 = arith.truncf %29 : vector<64x512xf32> to vector<64x512xbf16>
    %c0_16 = arith.constant 0 : index
    %c0_17 = arith.constant 0 : index
    %31 = vector.load %arg6[%c0_16, %c0_17] : memref<32x64xbf16, #tpu.memory_space<vmem>>, vector<32x64xbf16>
    %cst_18 = arith.constant dense<0.000000e+00> : vector<32x512xf32>
    %32 = tpu.matmul %31, %30, %cst_18 {dimension_numbers = #tpu.dot_dimension_numbers<[1], [0], [0], [1], [0, 0, 1, 1], [], []>} : vector<32x64xbf16>, vector<64x512xbf16>, vector<32x512xf32> -> vector<32x512xf32>
    %c0_19 = arith.constant 0 : index
    %c0_20 = arith.constant 0 : index
    %33 = vector.load %arg7[%c0_19, %c0_20] : memref<32x1xf32, #tpu.memory_space<vmem>>, vector<32x1xf32>
    %34 = vector.broadcast %33 : vector<32x1xf32> to vector<32x512xf32>
    %35 = arith.addf %32, %34 : vector<32x512xf32>
    %cst_21 = arith.constant 0.000000e+00 : f32
    %36 = vector.broadcast %cst_21 : f32 to vector<32x512xf32>
    %37 = arith.maximumf %35, %36 : vector<32x512xf32>
    %38 = arith.truncf %37 : vector<32x512xf32> to vector<32x512xbf16>
    %c0_22 = arith.constant 0 : index
    %c0_23 = arith.constant 0 : index
    %39 = vector.load %arg12[%c0_22, %c0_23] : memref<32x512xbf16, #tpu.memory_space<vmem>>, vector<32x512xbf16>
    tpu.vector_store %arg12[%c0_22, %c0_23], %38 {strides = array<i32>} : memref<32x512xbf16, #tpu.memory_space<vmem>>, vector<32x512xbf16>,
    %40 = vector.extract_strided_slice %37 {offsets = [0, 0], sizes = [32, 128], strides = [1, 1]} : vector<32x512xf32> to vector<32x128xf32>
    %41 = vector.extract_strided_slice %37 {offsets = [0, 128], sizes = [32, 128], strides = [1, 1]} : vector<32x512xf32> to vector<32x128xf32>
    %42 = vector.extract_strided_slice %37 {offsets = [0, 256], sizes = [32, 128], strides = [1, 1]} : vector<32x512xf32> to vector<32x128xf32>
    %43 = vector.extract_strided_slice %37 {offsets = [0, 384], sizes = [32, 128], strides = [1, 1]} : vector<32x512xf32> to vector<32x128xf32>
    %44 = tpu.concatenate %40, %41, %42, %43 in 0 : vector<32x128xf32>, vector<32x128xf32>, vector<32x128xf32>, vector<32x128xf32> -> vector<128x128xf32>
    %45 = arith.truncf %44 : vector<128x128xf32> to vector<128x128xbf16>
    %c0_24 = arith.constant 0 : index
    %c0_25 = arith.constant 0 : index
    %46 = vector.load %arg8[%c0_24, %c0_25] : memref<64x128xbf16, #tpu.memory_space<vmem>>, vector<64x128xbf16>
    %cst_26 = arith.constant dense<0.000000e+00> : vector<64x128xf32>
    %47 = tpu.matmul %46, %45, %cst_26 {dimension_numbers = #tpu.dot_dimension_numbers<[1], [0], [0], [1], [0, 0, 1, 1], [], []>} : vector<64x128xbf16>, vector<128x128xbf16>, vector<64x128xf32> -> vector<64x128xf32>
    %c0_27 = arith.constant 0 : index
    %c0_28 = arith.constant 0 : index
    %48 = vector.load %arg9[%c0_27, %c0_28] : memref<64x1xf32, #tpu.memory_space<vmem>>, vector<64x1xf32>
    %49 = vector.broadcast %48 : vector<64x1xf32> to vector<64x128xf32>
    %50 = arith.addf %47, %49 : vector<64x128xf32>
    %cst_29 = arith.constant 0.000000e+00 : f32
    %51 = vector.broadcast %cst_29 : f32 to vector<64x128xf32>
    %52 = arith.maximumf %50, %51 : vector<64x128xf32>
    %53 = arith.truncf %52 : vector<64x128xf32> to vector<64x128xbf16>
    %c0_30 = arith.constant 0 : index
    %c0_31 = arith.constant 0 : index
    %54 = vector.load %arg13[%c0_30, %c0_31] : memref<64x128xbf16, #tpu.memory_space<vmem>>, vector<64x128xbf16>
    tpu.vector_store %arg13[%c0_30, %c0_31], %53 {strides = array<i32>} : memref<64x128xbf16, #tpu.memory_space<vmem>>, vector<64x128xbf16>,
    return
  }
  func.func @transform_0(%arg0: i32) -> (i32, i32) {
    %c0_i32 = arith.constant 0 : i32
    %c0_i32_0 = arith.constant 0 : i32
    return %c0_i32, %arg0 : i32, i32
  }
  func.func @transform_1(%arg0: i32) -> (i32, i32) {
    %c0_i32 = arith.constant 0 : i32
    %c0_i32_0 = arith.constant 0 : i32
    %c0_i32_1 = arith.constant 0 : i32
    return %c0_i32, %c0_i32_0 : i32, i32
  }
  func.func @transform_2(%arg0: i32) -> (i32, i32) {
    %c0_i32 = arith.constant 0 : i32
    %c0_i32_0 = arith.constant 0 : i32
    %c0_i32_1 = arith.constant 0 : i32
    return %c0_i32, %c0_i32_0 : i32, i32
  }
  func.func @transform_3(%arg0: i32) -> (i32, i32) {
    %c0_i32 = arith.constant 0 : i32
    %c0_i32_0 = arith.constant 0 : i32
    %c0_i32_1 = arith.constant 0 : i32
    return %c0_i32, %c0_i32_0 : i32, i32
  }
  func.func @transform_4(%arg0: i32) -> (i32, i32) {
    %c0_i32 = arith.constant 0 : i32
    %c0_i32_0 = arith.constant 0 : i32
    %c0_i32_1 = arith.constant 0 : i32
    return %c0_i32, %c0_i32_0 : i32, i32
  }
  func.func @transform_5(%arg0: i32) -> (i32, i32) {
    %c0_i32 = arith.constant 0 : i32
    %c0_i32_0 = arith.constant 0 : i32
    %c0_i32_1 = arith.constant 0 : i32
    return %c0_i32, %c0_i32_0 : i32, i32
  }
  func.func @transform_6(%arg0: i32) -> (i32, i32) {
    %c0_i32 = arith.constant 0 : i32
    %c0_i32_0 = arith.constant 0 : i32
    %c0_i32_1 = arith.constant 0 : i32
    return %c0_i32, %c0_i32_0 : i32, i32
  }
  func.func @transform_7(%arg0: i32) -> (i32, i32) {
    %c0_i32 = arith.constant 0 : i32
    %c0_i32_0 = arith.constant 0 : i32
    %c0_i32_1 = arith.constant 0 : i32
    return %c0_i32, %c0_i32_0 : i32, i32
  }
  func.func @transform_8(%arg0: i32) -> (i32, i32) {
    %c0_i32 = arith.constant 0 : i32
    %c0_i32_0 = arith.constant 0 : i32
    %c0_i32_1 = arith.constant 0 : i32
    return %c0_i32, %c0_i32_0 : i32, i32
  }
  func.func @transform_9(%arg0: i32) -> (i32, i32) {
    %c0_i32 = arith.constant 0 : i32
    %c0_i32_0 = arith.constant 0 : i32
    return %c0_i32, %arg0 : i32, i32
  }
  func.func @transform_10(%arg0: i32) -> (i32, i32) {
    %c0_i32 = arith.constant 0 : i32
    %c0_i32_0 = arith.constant 0 : i32
    return %c0_i32, %arg0 : i32, i32
  }
  func.func @transform_11(%arg0: i32) -> (i32, i32) {
    %c0_i32 = arith.constant 0 : i32
    %c0_i32_0 = arith.constant 0 : i32
    return %c0_i32, %arg0 : i32, i32
  }
  func.func @transform_12(%arg0: i32) -> (i32, i32) {
    %c0_i32 = arith.constant 0 : i32
    %c0_i32_0 = arith.constant 0 : i32
    return %c0_i32, %arg0 : i32, i32
  }
}

</mosaic_0001>

<llo_original>
// kernel: _pyramid_forward.1
$region0: #{_pyramid_forward.1}
  #allocation0 [shape = 'u32[]', space=smem, size = 0x4, offset = 0x4, fixed_abs, tag = 'smem constant byte address 0x4 - core index']
  #allocation1 [shape = 'u32[144,128]{1,0:T(1,128)}', space=vmem, size = 0x12000, scoped, tag = 'internal scratch']
  %s0 = inlined_call_operand.vmem [shape: bf16[12,8192], index: 0, kind: input, shape index: {}]
  %s1 = inlined_call_operand.vmem [shape: bf16[8,12], index: 1, kind: input, shape index: {}]
  %s2 = inlined_call_operand.vmem [shape: f32[8,1], index: 2, kind: input, shape index: {}]
  %s3 = inlined_call_operand.vmem [shape: bf16[16,32], index: 3, kind: input, shape index: {}]
  %s4 = inlined_call_operand.vmem [shape: f32[16,1], index: 4, kind: input, shape index: {}]
  %s5 = inlined_call_operand.vmem [shape: bf16[32,64], index: 5, kind: input, shape index: {}]
  %s6 = inlined_call_operand.vmem [shape: f32[32,1], index: 6, kind: input, shape index: {}]
  %s7 = inlined_call_operand.vmem [shape: bf16[64,128], index: 7, kind: input, shape index: {}]
  %s8 = inlined_call_operand.vmem [shape: f32[64,1], index: 8, kind: input, shape index: {}]
  %s9 = inlined_call_operand.vmem [shape: bf16[8,8192], index: 9, kind: output, shape index: {0}]
  %s10 = inlined_call_operand.vmem [shape: bf16[16,2048], index: 10, kind: output, shape index: {1}]
  %s11 = inlined_call_operand.vmem [shape: bf16[32,512], index: 11, kind: output, shape index: {2}]
  %s12 = inlined_call_operand.vmem [shape: bf16[64,128], index: 12, kind: output, shape index: {3}]
  %13 = xla_tuple %s9, %s10, %s11, %s12
  %s14 = sld [smem:[#allocation0]]
  $region70: #{_pyramid_forward.1} parent=0
    _
  %s16 = ssub.s32 1, %s14
  %s17 = scalar_select 0, %s16, %s14
  // Predicated region
  $region2: #{_pyramid_forward.1} parent=0 // pred_check
    _
  $region3: #{_pyramid_forward.1} parent=0 // pred_check_branch
    %19 = sbr.rel (0) target = $region5
  $region4: #{_pyramid_forward.1} parent=0 // pred_region
    _
  $region5: #{_pyramid_forward.1} parent=0 // pred_fallthru
    _
  // Predicated region
  $region6: #{_pyramid_forward.1} parent=0 // pred_check
    _
  $region7: #{_pyramid_forward.1} parent=0 // pred_check_branch
    %21 = sbr.rel (0) target = $region9
  $region8: #{_pyramid_forward.1} parent=0 // pred_region
    _
  $region9: #{_pyramid_forward.1} parent=0 // pred_fallthru
    _
  // Predicated region
  $region10: #{_pyramid_forward.1} parent=0 // pred_check
    _
  $region11: #{_pyramid_forward.1} parent=0 // pred_check_branch
    %23 = sbr.rel (0) target = $region13
  $region12: #{_pyramid_forward.1} parent=0 // pred_region
    _
  $region13: #{_pyramid_forward.1} parent=0 // pred_fallthru
    _
  // Predicated region
  $region14: #{_pyramid_forward.1} parent=0 // pred_check
    _
  $region15: #{_pyramid_forward.1} parent=0 // pred_check_branch
    %25 = sbr.rel (0) target = $region17
  $region16: #{_pyramid_forward.1} parent=0 // pred_region
    _
  $region17: #{_pyramid_forward.1} parent=0 // pred_fallthru
    _
  // Predicated region
  $region18: #{_pyramid_forward.1} parent=0 // pred_check
    _
  $region19: #{_pyramid_forward.1} parent=0 // pred_check_branch
    %27 = sbr.rel (0) target = $region21
  $region20: #{_pyramid_forward.1} parent=0 // pred_region
    _
  $region21: #{_pyramid_forward.1} parent=0 // pred_fallthru
    _
  // Predicated region
  $region22: #{_pyramid_forward.1} parent=0 // pred_check
    _
  $region23: #{_pyramid_forward.1} parent=0 // pred_check_branch
    %29 = sbr.rel (0) target = $region25
  $region24: #{_pyramid_forward.1} parent=0 // pred_region
    _
  $region25: #{_pyramid_forward.1} parent=0 // pred_fallthru
    _
  // Predicated region
  $region26: #{_pyramid_forward.1} parent=0 // pred_check
    _
  $region27: #{_pyramid_forward.1} parent=0 // pred_check_branch
    %31 = sbr.rel (0) target = $region29
  $region28: #{_pyramid_forward.1} parent=0 // pred_region
    _
  $region29: #{_pyramid_forward.1} parent=0 // pred_fallthru
    _
  // Predicated region
  $region30: #{_pyramid_forward.1} parent=0 // pred_check
    _
  $region31: #{_pyramid_forward.1} parent=0 // pred_check_branch
    %33 = sbr.rel (0) target = $region33
  $region32: #{_pyramid_forward.1} parent=0 // pred_region
    _
  $region33: #{_pyramid_forward.1} parent=0 // pred_fallthru
    _
  // Predicated region
  $region34: #{_pyramid_forward.1} parent=0 // pred_check
    _
  $region35: #{_pyramid_forward.1} parent=0 // pred_check_branch
    %35 = sbr.rel (0) target = $region37
  $region36: #{_pyramid_forward.1} parent=0 // pred_region
    _
  $region37: #{_pyramid_forward.1} parent=0 // pred_fallthru
    _
  %v37 = vld [vmem:[%s0] sm:$0xff]
  %v38 = vld [vmem:[%s0 + $0x8] sm:$0xff]
  %v39 = vld [vmem:[%s0 + $0x10] sm:$0xff]
  %v40 = vld [vmem:[%s0 + $0x18] sm:$0xff]
  %v41 = vld [vmem:[%s0 + $0x20] sm:$0xff]
  %v42 = vld [vmem:[%s0 + $0x28] sm:$0xff]
  %v43 = vld [vmem:[%s0 + $0x30] sm:$0xff]
  %v44 = vld [vmem:[%s0 + $0x38] sm:$0xff]
  %v45 = vld [vmem:[%s0 + $0x40] sm:$0xff]
  %v46 = vld [vmem:[%s0 + $0x48] sm:$0xff]
  %v47 = vld [vmem:[%s0 + $0x50] sm:$0xff]
  %v48 = vld [vmem:[%s0 + $0x58] sm:$0xff]
  %v49 = vld [vmem:[%s0 + $0x60] sm:$0xff]
  %v50 = vld [vmem:[%s0 + $0x68] sm:$0xff]
  %v51 = vld [vmem:[%s0 + $0x70] sm:$0xff]
  %v52 = vld [vmem:[%s0 + $0x78] sm:$0xff]
  %v53 = vld [vmem:[%s0 + $0x80] sm:$0xff]
  %v54 = vld [vmem:[%s0 + $0x88] sm:$0xff]
  %v55 = vld [vmem:[%s0 + $0x90] sm:$0xff]
  %v56 = vld [vmem:[%s0 + $0x98] sm:$0xff]
  %v57 = vld [vmem:[%s0 + $0xa0] sm:$0xff]
  %v58 = vld [vmem:[%s0 + $0xa8] sm:$0xff]
  %v59 = vld [vmem:[%s0 + $0xb0] sm:$0xff]
  %v60 = vld [vmem:[%s0 + $0xb8] sm:$0xff]
  %v61 = vld [vmem:[%s0 + $0xc0] sm:$0xff]
  %v62 = vld [vmem:[%s0 + $0xc8] sm:$0xff]
  %v63 = vld [vmem:[%s0 + $0xd0] sm:$0xff]
  %v64 = vld [vmem:[%s0 + $0xd8] sm:$0xff]
  %v65 = vld [vmem:[%s0 + $0xe0] sm:$0xff]
  %v66 = vld [vmem:[%s0 + $0xe8] sm:$0xff]
  %v67 = vld [vmem:[%s0 + $0xf0] sm:$0xff]
  %v68 = vld [vmem:[%s0 + $0xf8] sm:$0xff]
  %v69 = vld [vmem:[%s0 + $0x100] sm:$0x33]
  %v70 = vld [vmem:[%s0 + $0x108] sm:$0x33]
  %v71 = vld [vmem:[%s0 + $0x110] sm:$0x33]
  %v72 = vld [vmem:[%s0 + $0x118] sm:$0x33]
  %v73 = vld [vmem:[%s0 + $0x120] sm:$0x33]
  %v74 = vld [vmem:[%s0 + $0x128] sm:$0x33]
  %v75 = vld [vmem:[%s0 + $0x130] sm:$0x33]
  %v76 = vld [vmem:[%s0 + $0x138] sm:$0x33]
  %v77 = vld [vmem:[%s0 + $0x140] sm:$0x33]
  %v78 = vld [vmem:[%s0 + $0x148] sm:$0x33]
  %v79 = vld [vmem:[%s0 + $0x150] sm:$0x33]
  %v80 = vld [vmem:[%s0 + $0x158] sm:$0x33]
  %v81 = vld [vmem:[%s0 + $0x160] sm:$0x33]
  %v82 = vld [vmem:[%s0 + $0x168] sm:$0x33]
  %v83 = vld [vmem:[%s0 + $0x170] sm:$0x33]
  %v84 = vld [vmem:[%s0 + $0x178] sm:$0x33]
  %v85 = vld [vmem:[%s0 + $0x180] sm:$0x33]
  %v86 = vld [vmem:[%s0 + $0x188] sm:$0x33]
  %v87 = vld [vmem:[%s0 + $0x190] sm:$0x33]
  %v88 = vld [vmem:[%s0 + $0x198] sm:$0x33]
  %v89 = vld [vmem:[%s0 + $0x1a0] sm:$0x33]
  %v90 = vld [vmem:[%s0 + $0x1a8] sm:$0x33]
  %v91 = vld [vmem:[%s0 + $0x1b0] sm:$0x33]
  %v92 = vld [vmem:[%s0 + $0x1b8] sm:$0x33]
  %v93 = vld [vmem:[%s0 + $0x1c0] sm:$0x33]
  %v94 = vld [vmem:[%s0 + $0x1c8] sm:$0x33]
  %v95 = vld [vmem:[%s0 + $0x1d0] sm:$0x33]
  %v96 = vld [vmem:[%s0 + $0x1d8] sm:$0x33]
  %v97 = vld [vmem:[%s0 + $0x1e0] sm:$0x33]
  %v98 = vld [vmem:[%s0 + $0x1e8] sm:$0x33]
  %v99 = vld [vmem:[%s0 + $0x1f0] sm:$0x33]
  %v100 = vld [vmem:[%s0 + $0x1f8] sm:$0x33]
  %v101 = vld [vmem:[%s1] sm:$0xf]
  %v102 = vld [vmem:[%s2] sm:$0xff]
  %104 = vset.pattern.permute.xlu0 0
  %105 = vperm.xlu0 %104, %v102
  %v106 = vpop.permute.xlu0 %105
  %v172 = vunpack.c.l.b16 %v37
  %v173 = vunpack.c.h.b16 %v37
  %v174 = vunpack.c.l.b16 %v38
  %v175 = vunpack.c.h.b16 %v38
  %v176 = vunpack.c.l.b16 %v39
  %v177 = vunpack.c.h.b16 %v39
  %v178 = vunpack.c.l.b16 %v40
  %v179 = vunpack.c.h.b16 %v40
  %v180 = vunpack.c.l.b16 %v41
  %v181 = vunpack.c.h.b16 %v41
  %v182 = vunpack.c.l.b16 %v42
  %v183 = vunpack.c.h.b16 %v42
  %v184 = vunpack.c.l.b16 %v43
  %v185 = vunpack.c.h.b16 %v43
  %v186 = vunpack.c.l.b16 %v44
  %v187 = vunpack.c.h.b16 %v44
  %v188 = vunpack.c.l.b16 %v45
  %v189 = vunpack.c.h.b16 %v45
  %v190 = vunpack.c.l.b16 %v46
  %v191 = vunpack.c.h.b16 %v46
  %v192 = vunpack.c.l.b16 %v47
  %v193 = vunpack.c.h.b16 %v47
  %v194 = vunpack.c.l.b16 %v48
  %v195 = vunpack.c.h.b16 %v48
  %v196 = vunpack.c.l.b16 %v49
  %v197 = vunpack.c.h.b16 %v49
  %v198 = vunpack.c.l.b16 %v50
  %v199 = vunpack.c.h.b16 %v50
  %v200 = vunpack.c.l.b16 %v51
  %v201 = vunpack.c.h.b16 %v51
  %v202 = vunpack.c.l.b16 %v52
  %v203 = vunpack.c.h.b16 %v52
  %v204 = vunpack.c.l.b16 %v53
  %v205 = vunpack.c.h.b16 %v53
  %v206 = vunpack.c.l.b16 %v54
  %v207 = vunpack.c.h.b16 %v54
  %v208 = vunpack.c.l.b16 %v55
  %v209 = vunpack.c.h.b16 %v55
  %v210 = vunpack.c.l.b16 %v56
  %v211 = vunpack.c.h.b16 %v56
  %v212 = vunpack.c.l.b16 %v57
  %v213 = vunpack.c.h.b16 %v57
  %v214 = vunpack.c.l.b16 %v58
  %v215 = vunpack.c.h.b16 %v58
  %v216 = vunpack.c.l.b16 %v59
  %v217 = vunpack.c.h.b16 %v59
  %v218 = vunpack.c.l.b16 %v60
  %v219 = vunpack.c.h.b16 %v60
  %v220 = vunpack.c.l.b16 %v61
  %v221 = vunpack.c.h.b16 %v61
  %v222 = vunpack.c.l.b16 %v62
  %v223 = vunpack.c.h.b16 %v62
  %v224 = vunpack.c.l.b16 %v63
  %v225 = vunpack.c.h.b16 %v63
  %v226 = vunpack.c.l.b16 %v64
  %v227 = vunpack.c.h.b16 %v64
  %v228 = vunpack.c.l.b16 %v65
  %v229 = vunpack.c.h.b16 %v65
  %v230 = vunpack.c.l.b16 %v66
  %v231 = vunpack.c.h.b16 %v66
  %v232 = vunpack.c.l.b16 %v67
  %v233 = vunpack.c.h.b16 %v67
  %v234 = vunpack.c.l.b16 %v68
  %v235 = vunpack.c.h.b16 %v68
  %v236 = vunpack.c.l.b16 %v69
  %v237 = vunpack.c.h.b16 %v69
  %v238 = vunpack.c.l.b16 %v70
  %v239 = vunpack.c.h.b16 %v70
  %v240 = vunpack.c.l.b16 %v71
  %v241 = vunpack.c.h.b16 %v71
  %v242 = vunpack.c.l.b16 %v72
  %v243 = vunpack.c.h.b16 %v72
  %v244 = vunpack.c.l.b16 %v73
  %v245 = vunpack.c.h.b16 %v73
  %v246 = vunpack.c.l.b16 %v74
  %v247 = vunpack.c.h.b16 %v74
  %v248 = vunpack.c.l.b16 %v75
  %v249 = vunpack.c.h.b16 %v75
  %v250 = vunpack.c.l.b16 %v76
  %v251 = vunpack.c.h.b16 %v76
  %v252 = vunpack.c.l.b16 %v77
  %v253 = vunpack.c.h.b16 %v77
  %v254 = vunpack.c.l.b16 %v78
  %v255 = vunpack.c.h.b16 %v78
  %v256 = vunpack.c.l.b16 %v79
  %v257 = vunpack.c.h.b16 %v79
  %v258 = vunpack.c.l.b16 %v80
  %v259 = vunpack.c.h.b16 %v80
  %v260 = vunpack.c.l.b16 %v81
  %v261 = vunpack.c.h.b16 %v81
  %v262 = vunpack.c.l.b16 %v82
  %v263 = vunpack.c.h.b16 %v82
  %v264 = vunpack.c.l.b16 %v83
  %v265 = vunpack.c.h.b16 %v83
  %v266 = vunpack.c.l.b16 %v84
  %v267 = vunpack.c.h.b16 %v84
  %v268 = vunpack.c.l.b16 %v85
  %v269 = vunpack.c.h.b16 %v85
  %v270 = vunpack.c.l.b16 %v86
  %v271 = vunpack.c.h.b16 %v86
  %v272 = vunpack.c.l.b16 %v87
  %v273 = vunpack.c.h.b16 %v87
  %v274 = vunpack.c.l.b16 %v88
  %v275 = vunpack.c.h.b16 %v88
  %v276 = vunpack.c.l.b16 %v89
  %v277 = vunpack.c.h.b16 %v89
  %v278 = vunpack.c.l.b16 %v90
  %v279 = vunpack.c.h.b16 %v90
  %v280 = vunpack.c.l.b16 %v91
  %v281 = vunpack.c.h.b16 %v91
  %v282 = vunpack.c.l.b16 %v92
  %v283 = vunpack.c.h.b16 %v92
  %v284 = vunpack.c.l.b16 %v93
  %v285 = vunpack.c.h.b16 %v93
  %v286 = vunpack.c.l.b16 %v94
  %v287 = vunpack.c.h.b16 %v94
  %v288 = vunpack.c.l.b16 %v95
  %v289 = vunpack.c.h.b16 %v95
  %v290 = vunpack.c.l.b16 %v96
  %v291 = vunpack.c.h.b16 %v96
  %v292 = vunpack.c.l.b16 %v97
  %v293 = vunpack.c.h.b16 %v97
  %v294 = vunpack.c.l.b16 %v98
  %v295 = vunpack.c.h.b16 %v98
  %v296 = vunpack.c.l.b16 %v99
  %v297 = vunpack.c.h.b16 %v99
  %v298 = vunpack.c.l.b16 %v100
  %v299 = vunpack.c.h.b16 %v100
  %v300 = vpack.c.b16 %v236, %v172
  %v301 = vpack.c.b16 %v237, %v173
  %v302 = vpack.c.b16 %v238, %v174
  %v303 = vpack.c.b16 %v239, %v175
  %v304 = vpack.c.b16 %v240, %v176
  %v305 = vpack.c.b16 %v241, %v177
  %v306 = vpack.c.b16 %v242, %v178
  %v307 = vpack.c.b16 %v243, %v179
  %v308 = vpack.c.b16 %v244, %v180
  %v309 = vpack.c.b16 %v245, %v181
  %v310 = vpack.c.b16 %v246, %v182
  %v311 = vpack.c.b16 %v247, %v183
  %v312 = vpack.c.b16 %v248, %v184
  %v313 = vpack.c.b16 %v249, %v185
  %v314 = vpack.c.b16 %v250, %v186
  %v315 = vpack.c.b16 %v251, %v187
  %v316 = vpack.c.b16 %v252, %v188
  %v317 = vpack.c.b16 %v253, %v189
  %v318 = vpack.c.b16 %v254, %v190
  %v319 = vpack.c.b16 %v255, %v191
  %v320 = vpack.c.b16 %v256, %v192
  %v321 = vpack.c.b16 %v257, %v193
  %v322 = vpack.c.b16 %v258, %v194
  %v323 = vpack.c.b16 %v259, %v195
  %v324 = vpack.c.b16 %v260, %v196
  %v325 = vpack.c.b16 %v261, %v197
  %v326 = vpack.c.b16 %v262, %v198
  %v327 = vpack.c.b16 %v263, %v199
  %v328 = vpack.c.b16 %v264, %v200
  %v329 = vpack.c.b16 %v265, %v201
  %v330 = vpack.c.b16 %v266, %v202
  %v331 = vpack.c.b16 %v267, %v203
  %v332 = vpack.c.b16 %v268, %v204
  %v333 = vpack.c.b16 %v269, %v205
  %v334 = vpack.c.b16 %v270, %v206
  %v335 = vpack.c.b16 %v271, %v207
  %v336 = vpack.c.b16 %v272, %v208
  %v337 = vpack.c.b16 %v273, %v209
  %v338 = vpack.c.b16 %v274, %v210
  %v339 = vpack.c.b16 %v275, %v211
  %v340 = vpack.c.b16 %v276, %v212
  %v341 = vpack.c.b16 %v277, %v213
  %v342 = vpack.c.b16 %v278, %v214
  %v343 = vpack.c.b16 %v279, %v215
  %v344 = vpack.c.b16 %v280, %v216
  %v345 = vpack.c.b16 %v281, %v217
  %v346 = vpack.c.b16 %v282, %v218
  %v347 = vpack.c.b16 %v283, %v219
  %v348 = vpack.c.b16 %v284, %v220
  %v349 = vpack.c.b16 %v285, %v221
  %v350 = vpack.c.b16 %v286, %v222
  %v351 = vpack.c.b16 %v287, %v223
  %v352 = vpack.c.b16 %v288, %v224
  %v353 = vpack.c.b16 %v289, %v225
  %v354 = vpack.c.b16 %v290, %v226
  %v355 = vpack.c.b16 %v291, %v227
  %v356 = vpack.c.b16 %v292, %v228
  %v357 = vpack.c.b16 %v293, %v229
  %v358 = vpack.c.b16 %v294, %v230
  %v359 = vpack.c.b16 %v295, %v231
  %v360 = vpack.c.b16 %v296, %v232
  %v361 = vpack.c.b16 %v297, %v233
  %v362 = vpack.c.b16 %v298, %v234
  %v363 = vpack.c.b16 %v299, %v235
  %vm364 = vcmask 97280
  %v366 = vsel %vm364, %v101, 0
  %vm368 = vcmask 1045504
  %v370 = vsel %vm368, %v300, 0
  %v373 = vsel %vm368, %v301, 0
  %v376 = vsel %vm368, %v302, 0
  %v379 = vsel %vm368, %v303, 0
  %v382 = vsel %vm368, %v304, 0
  %v385 = vsel %vm368, %v305, 0
  %v388 = vsel %vm368, %v306, 0
  %v391 = vsel %vm368, %v307, 0
  %v394 = vsel %vm368, %v308, 0
  %v397 = vsel %vm368, %v309, 0
  %v400 = vsel %vm368, %v310, 0
  %v403 = vsel %vm368, %v311, 0
  %v406 = vsel %vm368, %v312, 0
  %v409 = vsel %vm368, %v313, 0
  %v412 = vsel %vm368, %v314, 0
  %v415 = vsel %vm368, %v315, 0
  %v418 = vsel %vm368, %v316, 0
  %v421 = vsel %vm368, %v317, 0
  %v424 = vsel %vm368, %v318, 0
  %v427 = vsel %vm368, %v319, 0
  %v430 = vsel %vm368, %v320, 0
  %v433 = vsel %vm368, %v321, 0
  %v436 = vsel %vm368, %v322, 0
  %v439 = vsel %vm368, %v323, 0
  %v442 = vsel %vm368, %v324, 0
  %v445 = vsel %vm368, %v325, 0
  %v448 = vsel %vm368, %v326, 0
  %v451 = vsel %vm368, %v327, 0
  %v454 = vsel %vm368, %v328, 0
  %v457 = vsel %vm368, %v329, 0
  %v460 = vsel %vm368, %v330, 0
  %v463 = vsel %vm368, %v331, 0
  %v466 = vsel %vm368, %v332, 0
  %v469 = vsel %vm368, %v333, 0
  %v472 = vsel %vm368, %v334, 0
  %v475 = vsel %vm368, %v335, 0
  %v478 = vsel %vm368, %v336, 0
  %v481 = vsel %vm368, %v337, 0
  %v484 = vsel %vm368, %v338, 0
  %v487 = vsel %vm368, %v339, 0
  %v490 = vsel %vm368, %v340, 0
  %v493 = vsel %vm368, %v341, 0
  %v496 = vsel %vm368, %v342, 0
  %v499 = vsel %vm368, %v343, 0
  %v502 = vsel %vm368, %v344, 0
  %v505 = vsel %vm368, %v345, 0
  %v508 = vsel %vm368, %v346, 0
  %v511 = vsel %vm368, %v347, 0
  %v514 = vsel %vm368, %v348, 0
  %v517 = vsel %vm368, %v349, 0
  %v520 = vsel %vm368, %v350, 0
  %v523 = vsel %vm368, %v351, 0
  %v526 = vsel %vm368, %v352, 0
  %v529 = vsel %vm368, %v353, 0
  %v532 = vsel %vm368, %v354, 0
  %v535 = vsel %vm368, %v355, 0
  %v538 = vsel %vm368, %v356, 0
  %v541 = vsel %vm368, %v357, 0
  %v544 = vsel %vm368, %v358, 0
  %v547 = vsel %vm368, %v359, 0
  %v550 = vsel %vm368, %v360, 0
  %v553 = vsel %vm368, %v361, 0
  %v556 = vsel %vm368, %v362, 0
  %v559 = vsel %vm368, %v363, 0
  %561 = vmatprep.subr.bf16.mxu0 0
  %562 = vmatpush1.bf16.msra.mxu0 0
  %563 = vmatprep.subr.bf16.mxu0 0
  %564 = vmatpush1.bf16.msra.mxu0 0
  %565 = vmatprep.subr.bf16.mxu0 0
  %566 = vmatpush1.bf16.msra.mxu0 0
  %567 = vmatprep.subr.bf16.mxu0 0
  %568 = vmatpush1.bf16.msra.mxu0 0
  %569 = vmatprep.subr.bf16.mxu0 0
  %570 = vmatpush1.bf16.msra.mxu0 0
  %571 = vmatprep.subr.bf16.mxu0 0
  %572 = vmatpush1.bf16.msra.mxu0 0
  %573 = vmatprep.subr.bf16.mxu0 0
  %574 = vmatpush1.bf16.msra.mxu0 0
  %575 = vmatprep.subr.bf16.mxu0 %v373
  %576 = vmatpush1.bf16.msra.mxu0 %v370
  %577 = vmatprep.subr.bf16.mxu0 0
  %578 = vmatpush2.bf16.msra.mxu0 0
  %579 = vmatprep.subr.bf16.mxu0 0
  %580 = vmatpush2.bf16.msra.mxu0 0
  %581 = vmatprep.subr.bf16.mxu0 0
  %582 = vmatpush2.bf16.msra.mxu0 0
  %583 = vmatprep.subr.bf16.mxu0 0
  %584 = vmatpush2.bf16.msra.mxu0 0
  %585 = vmatprep.subr.bf16.mxu0 0
  %586 = vmatpush2.bf16.msra.mxu0 0
  %587 = vmatprep.subr.bf16.mxu0 0
  %588 = vmatpush2.bf16.msra.mxu0 0
  %589 = vmatprep.subr.bf16.mxu0 0
  %590 = vmatpush2.bf16.msra.mxu0 0
  %591 = vmatprep.subr.bf16.mxu0 0
  %592 = vmatpush2.bf16.msra.mxu0 0
  %593 = vmatprep.mubr.bf16.mxu0 0
  %594 = vmatmul.mubr.bf16.gmra.mxu0 %v366
  %v595 = vpop.f32.mrf.mxu0
  %v596 = vadd.f32 %v106, %v595
  %v597 = vpop.f32.mrf.mxu0
  %v598 = vadd.f32 %v106, %v597
  %v599 = vpop.f32.mrf.mxu0
  %v600 = vpop.f32.mrf.mxu0
  %601 = vdwg.mxu0
  %602 = vmatprep.subr.bf16.mxu0 0
  %603 = vmatpush1.bf16.msra.mxu0 0
  %604 = vmatprep.subr.bf16.mxu0 0
  %605 = vmatpush1.bf16.msra.mxu0 0
  %606 = vmatprep.subr.bf16.mxu0 0
  %607 = vmatpush1.bf16.msra.mxu0 0
  %608 = vmatprep.subr.bf16.mxu0 0
  %609 = vmatpush1.bf16.msra.mxu0 0
  %610 = vmatprep.subr.bf16.mxu0 0
  %611 = vmatpush1.bf16.msra.mxu0 0
  %612 = vmatprep.subr.bf16.mxu0 0
  %613 = vmatpush1.bf16.msra.mxu0 0
  %614 = vmatprep.subr.bf16.mxu0 0
  %615 = vmatpush1.bf16.msra.mxu0 0
  %616 = vmatprep.subr.bf16.mxu0 %v379
  %617 = vmatpush1.bf16.msra.mxu0 %v376
  %618 = vmatprep.subr.bf16.mxu0 0
  %619 = vmatpush2.bf16.msra.mxu0 0
  %620 = vmatprep.subr.bf16.mxu0 0
  %621 = vmatpush2.bf16.msra.mxu0 0
  %622 = vmatprep.subr.bf16.mxu0 0
  %623 = vmatpush2.bf16.msra.mxu0 0
  %624 = vmatprep.subr.bf16.mxu0 0
  %625 = vmatpush2.bf16.msra.mxu0 0
  %626 = vmatprep.subr.bf16.mxu0 0
  %627 = vmatpush2.bf16.msra.mxu0 0
  %628 = vmatprep.subr.bf16.mxu0 0
  %629 = vmatpush2.bf16.msra.mxu0 0
  %630 = vmatprep.subr.bf16.mxu0 0
  %631 = vmatpush2.bf16.msra.mxu0 0
  %632 = vmatprep.subr.bf16.mxu0 0
  %633 = vmatpush2.bf16.msra.mxu0 0
  %634 = vmatprep.mubr.bf16.mxu0 0
  %635 = vmatmul.mubr.bf16.gmra.mxu0 %v366
  %v636 = vpop.f32.mrf.mxu0
  %v637 = vadd.f32 %v106, %v636
  %v638 = vpop.f32.mrf.mxu0
  %v639 = vadd.f32 %v106, %v638
  %v640 = vpop.f32.mrf.mxu0
  %v641 = vpop.f32.mrf.mxu0
  %642 = vdwg.mxu0
  %643 = vmatprep.subr.bf16.mxu0 0
  %644 = vmatpush1.bf16.msra.mxu0 0
  %645 = vmatprep.subr.bf16.mxu0 0
  %646 = vmatpush1.bf16.msra.mxu0 0
  %647 = vmatprep.subr.bf16.mxu0 0
  %648 = vmatpush1.bf16.msra.mxu0 0
  %649 = vmatprep.subr.bf16.mxu0 0
  %650 = vmatpush1.bf16.msra.mxu0 0
  %651 = vmatprep.subr.bf16.mxu0 0
  %652 = vmatpush1.bf16.msra.mxu0 0
  %653 = vmatprep.subr.bf16.mxu0 0
  %654 = vmatpush1.bf16.msra.mxu0 0
  %655 = vmatprep.subr.bf16.mxu0 0
  %656 = vmatpush1.bf16.msra.mxu0 0
  %657 = vmatprep.subr.bf16.mxu0 %v385
  %658 = vmatpush1.bf16.msra.mxu0 %v382
  %659 = vmatprep.subr.bf16.mxu0 0
  %660 = vmatpush2.bf16.msra.mxu0 0
  %661 = vmatprep.subr.bf16.mxu0 0
  %662 = vmatpush2.bf16.msra.mxu0 0
  %663 = vmatprep.subr.bf16.mxu0 0
  %664 = vmatpush2.bf16.msra.mxu0 0
  %665 = vmatprep.subr.bf16.mxu0 0
  %666 = vmatpush2.bf16.msra.mxu0 0
  %667 = vmatprep.subr.bf16.mxu0 0
  %668 = vmatpush2.bf16.msra.mxu0 0
  %669 = vmatprep.subr.bf16.mxu0 0
  %670 = vmatpush2.bf16.msra.mxu0 0
  %671 = vmatprep.subr.bf16.mxu0 0
  %672 = vmatpush2.bf16.msra.mxu0 0
  %673 = vmatprep.subr.bf16.mxu0 0
  %674 = vmatpush2.bf16.msra.mxu0 0
  %675 = vmatprep.mubr.bf16.mxu0 0
  %676 = vmatmul.mubr.bf16.gmra.mxu0 %v366
  %v677 = vpop.f32.mrf.mxu0
  %v678 = vadd.f32 %v106, %v677
  %v679 = vpop.f32.mrf.mxu0
  %v680 = vadd.f32 %v106, %v679
  %v681 = vpop.f32.mrf.mxu0
  %v682 = vpop.f32.mrf.mxu0
  %683 = vdwg.mxu0
  %684 = vmatprep.subr.bf16.mxu0 0
  %685 = vmatpush1.bf16.msra.mxu0 0
  %686 = vmatprep.subr.bf16.mxu0 0
  %687 = vmatpush1.bf16.msra.mxu0 0
  %688 = vmatprep.subr.bf16.mxu0 0
  %689 = vmatpush1.bf16.msra.mxu0 0
  %690 = vmatprep.subr.bf16.mxu0 0
  %691 = vmatpush1.bf16.msra.mxu0 0
  %692 = vmatprep.subr.bf16.mxu0 0
  %693 = vmatpush1.bf16.msra.mxu0 0
  %694 = vmatprep.subr.bf16.mxu0 0
  %695 = vmatpush1.bf16.msra.mxu0 0
  %696 = vmatprep.subr.bf16.mxu0 0
  %697 = vmatpush1.bf16.msra.mxu0 0
  %698 = vmatprep.subr.bf16.mxu0 %v391
  %699 = vmatpush1.bf16.msra.mxu0 %v388
  %700 = vmatprep.subr.bf16.mxu0 0
  %701 = vmatpush2.bf16.msra.mxu0 0
  %702 = vmatprep.subr.bf16.mxu0 0
  %703 = vmatpush2.bf16.msra.mxu0 0
  %704 = vmatprep.subr.bf16.mxu0 0
  %705 = vmatpush2.bf16.msra.mxu0 0
  %706 = vmatprep.subr.bf16.mxu0 0
  %707 = vmatpush2.bf16.msra.mxu0 0
  %708 = vmatprep.subr.bf16.mxu0 0
  %709 = vmatpush2.bf16.msra.mxu0 0
  %710 = vmatprep.subr.bf16.mxu0 0
  %711 = vmatpush2.bf16.msra.mxu0 0
  %712 = vmatprep.subr.bf16.mxu0 0
  %713 = vmatpush2.bf16.msra.mxu0 0
  %714 = vmatprep.subr.bf16.mxu0 0
  %715 = vmatpush2.bf16.msra.mxu0 0
  %716 = vmatprep.mubr.bf16.mxu0 0
  %717 = vmatmul.mubr.bf16.gmra.mxu0 %v366
  %v718 = vpop.f32.mrf.mxu0
  %v719 = vadd.f32 %v106, %v718
  %v720 = vpop.f32.mrf.mxu0
  %v721 = vadd.f32 %v106, %v720
  %v722 = vpop.f32.mrf.mxu0
  %v723 = vpop.f32.mrf.mxu0
  %724 = vdwg.mxu0
  %725 = vmatprep.subr.bf16.mxu0 0
  %726 = vmatpush1.bf16.msra.mxu0 0
  %727 = vmatprep.subr.bf16.mxu0 0
  %728 = vmatpush1.bf16.msra.mxu0 0
  %729 = vmatprep.subr.bf16.mxu0 0
  %730 = vmatpush1.bf16.msra.mxu0 0
  %731 = vmatprep.subr.bf16.mxu0 0
  %732 = vmatpush1.bf16.msra.mxu0 0
  %733 = vmatprep.subr.bf16.mxu0 0
  %734 = vmatpush1.bf16.msra.mxu0 0
  %735 = vmatprep.subr.bf16.mxu0 0
  %736 = vmatpush1.bf16.msra.mxu0 0
  %737 = vmatprep.subr.bf16.mxu0 0
  %738 = vmatpush1.bf16.msra.mxu0 0
  %739 = vmatprep.subr.bf16.mxu0 %v397
  %740 = vmatpush1.bf16.msra.mxu0 %v394
  %741 = vmatprep.subr.bf16.mxu0 0
  %742 = vmatpush2.bf16.msra.mxu0 0
  %743 = vmatprep.subr.bf16.mxu0 0
  %744 = vmatpush2.bf16.msra.mxu0 0
  %745 = vmatprep.subr.bf16.mxu0 0
  %746 = vmatpush2.bf16.msra.mxu0 0
  %747 = vmatprep.subr.bf16.mxu0 0
  %748 = vmatpush2.bf16.msra.mxu0 0
  %749 = vmatprep.subr.bf16.mxu0 0
  %750 = vmatpush2.bf16.msra.mxu0 0
  %751 = vmatprep.subr.bf16.mxu0 0
  %752 = vmatpush2.bf16.msra.mxu0 0
  %753 = vmatprep.subr.bf16.mxu0 0
  %754 = vmatpush2.bf16.msra.mxu0 0
  %755 = vmatprep.subr.bf16.mxu0 0
  %756 = vmatpush2.bf16.msra.mxu0 0
  %757 = vmatprep.mubr.bf16.mxu0 0
  %758 = vmatmul.mubr.bf16.gmra.mxu0 %v366
  %v759 = vpop.f32.mrf.mxu0
  %v760 = vadd.f32 %v106, %v759
  %v761 = vpop.f32.mrf.mxu0
  %v762 = vadd.f32 %v106, %v761
  %v763 = vpop.f32.mrf.mxu0
  %v764 = vpop.f32.mrf.mxu0
  %765 = vdwg.mxu0
  %766 = vmatprep.subr.bf16.mxu0 0
  %767 = vmatpush1.bf16.msra.mxu0 0
  %768 = vmatprep.subr.bf16.mxu0 0
  %769 = vmatpush1.bf16.msra.mxu0 0
  %770 = vmatprep.subr.bf16.mxu0 0
  %771 = vmatpush1.bf16.msra.mxu0 0
  %772 = vmatprep.subr.bf16.mxu0 0
  %773 = vmatpush1.bf16.msra.mxu0 0
  %774 = vmatprep.subr.bf16.mxu0 0
  %775 = vmatpush1.bf16.msra.mxu0 0
  %776 = vmatprep.subr.bf16.mxu0 0
  %777 = vmatpush1.bf16.msra.mxu0 0
  %778 = vmatprep.subr.bf16.mxu0 0
  %779 = vmatpush1.bf16.msra.mxu0 0
  %780 = vmatprep.subr.bf16.mxu0 %v403
  %781 = vmatpush1.bf16.msra.mxu0 %v400
  %782 = vmatprep.subr.bf16.mxu0 0
  %783 = vmatpush2.bf16.msra.mxu0 0
  %784 = vmatprep.subr.bf16.mxu0 0
  %785 = vmatpush2.bf16.msra.mxu0 0
  %786 = vmatprep.subr.bf16.mxu0 0
  %787 = vmatpush2.bf16.msra.mxu0 0
  %788 = vmatprep.subr.bf16.mxu0 0
  %789 = vmatpush2.bf16.msra.mxu0 0
  %790 = vmatprep.subr.bf16.mxu0 0
  %791 = vmatpush2.bf16.msra.mxu0 0
  %792 = vmatprep.subr.bf16.mxu0 0
  %793 = vmatpush2.bf16.msra.mxu0 0
  %794 = vmatprep.subr.bf16.mxu0 0
  %795 = vmatpush2.bf16.msra.mxu0 0
  %796 = vmatprep.subr.bf16.mxu0 0
  %797 = vmatpush2.bf16.msra.mxu0 0
  %798 = vmatprep.mubr.bf16.mxu0 0
  %799 = vmatmul.mubr.bf16.gmra.mxu0 %v366
  %v800 = vpop.f32.mrf.mxu0
  %v801 = vadd.f32 %v106, %v800
  %v802 = vpop.f32.mrf.mxu0
  %v803 = vadd.f32 %v106, %v802
  %v804 = vpop.f32.mrf.mxu0
  %v805 = vpop.f32.mrf.mxu0
  %806 = vdwg.mxu0
  %807 = vmatprep.subr.bf16.mxu0 0
  %808 = vmatpush1.bf16.msra.mxu0 0
  %809 = vmatprep.subr.bf16.mxu0 0
  %810 = vmatpush1.bf16.msra.mxu0 0
  %811 = vmatprep.subr.bf16.mxu0 0
  %812 = vmatpush1.bf16.msra.mxu0 0
  %813 = vmatprep.subr.bf16.mxu0 0
  %814 = vmatpush1.bf16.msra.mxu0 0
  %815 = vmatprep.subr.bf16.mxu0 0
  %816 = vmatpush1.bf16.msra.mxu0 0
  %817 = vmatprep.subr.bf16.mxu0 0
  %818 = vmatpush1.bf16.msra.mxu0 0
  %819 = vmatprep.subr.bf16.mxu0 0
  %820 = vmatpush1.bf16.msra.mxu0 0
  %821 = vmatprep.subr.bf16.mxu0 %v409
  %822 = vmatpush1.bf16.msra.mxu0 %v406
  %823 = vmatprep.subr.bf16.mxu0 0
  %824 = vmatpush2.bf16.msra.mxu0 0
  %825 = vmatprep.subr.bf16.mxu0 0
  %826 = vmatpush2.bf16.msra.mxu0 0
  %827 = vmatprep.subr.bf16.mxu0 0
  %828 = vmatpush2.bf16.msra.mxu0 0
  %829 = vmatprep.subr.bf16.mxu0 0
  %830 = vmatpush2.bf16.msra.mxu0 0
  %831 = vmatprep.subr.bf16.mxu0 0
  %832 = vmatpush2.bf16.msra.mxu0 0
  %833 = vmatprep.subr.bf16.mxu0 0
  %834 = vmatpush2.bf16.msra.mxu0 0
  %835 = vmatprep.subr.bf16.mxu0 0
  %836 = vmatpush2.bf16.msra.mxu0 0
  %837 = vmatprep.subr.bf16.mxu0 0
  %838 = vmatpush2.bf16.msra.mxu0 0
  %839 = vmatprep.mubr.bf16.mxu0 0
  %840 = vmatmul.mubr.bf16.gmra.mxu0 %v366
  %v841 = vpop.f32.mrf.mxu0
  %v842 = vadd.f32 %v106, %v841
  %v843 = vpop.f32.mrf.mxu0
  %v844 = vadd.f32 %v106, %v843
  %v845 = vpop.f32.mrf.mxu0
  %v846 = vpop.f32.mrf.mxu0
  %847 = vdwg.mxu0
  %848 = vmatprep.subr.bf16.mxu0 0
  %849 = vmatpush1.bf16.msra.mxu0 0
  %850 = vmatprep.subr.bf16.mxu0 0
  %851 = vmatpush1.bf16.msra.mxu0 0
  %852 = vmatprep.subr.bf16.mxu0 0
  %853 = vmatpush1.bf16.msra.mxu0 0
  %854 = vmatprep.subr.bf16.mxu0 0
  %855 = vmatpush1.bf16.msra.mxu0 0
  %856 = vmatprep.subr.bf16.mxu0 0
  %857 = vmatpush1.bf16.msra.mxu0 0
  %858 = vmatprep.subr.bf16.mxu0 0
  %859 = vmatpush1.bf16.msra.mxu0 0
  %860 = vmatprep.subr.bf16.mxu0 0
  %861 = vmatpush1.bf16.msra.mxu0 0
  %862 = vmatprep.subr.bf16.mxu0 %v415
  %863 = vmatpush1.bf16.msra.mxu0 %v412
  %864 = vmatprep.subr.bf16.mxu0 0
  %865 = vmatpush2.bf16.msra.mxu0 0
  %866 = vmatprep.subr.bf16.mxu0 0
  %867 = vmatpush2.bf16.msra.mxu0 0
  %868 = vmatprep.subr.bf16.mxu0 0
  %869 = vmatpush2.bf16.msra.mxu0 0
  %870 = vmatprep.subr.bf16.mxu0 0
  %871 = vmatpush2.bf16.msra.mxu0 0
  %872 = vmatprep.subr.bf16.mxu0 0
  %873 = vmatpush2.bf16.msra.mxu0 0
  %874 = vmatprep.subr.bf16.mxu0 0
  %875 = vmatpush2.bf16.msra.mxu0 0
  %876 = vmatprep.subr.bf16.mxu0 0
  %877 = vmatpush2.bf16.msra.mxu0 0
  %878 = vmatprep.subr.bf16.mxu0 0
  %879 = vmatpush2.bf16.msra.mxu0 0
  %880 = vmatprep.mubr.bf16.mxu0 0
  %881 = vmatmul.mubr.bf16.gmra.mxu0 %v366
  %v882 = vpop.f32.mrf.mxu0
  %v883 = vadd.f32 %v106, %v882
  %v884 = vpop.f32.mrf.mxu0
  %v885 = vadd.f32 %v106, %v884
  %v886 = vpop.f32.mrf.mxu0
  %v887 = vpop.f32.mrf.mxu0
  %888 = vdwg.mxu0
  %889 = vmatprep.subr.bf16.mxu0 0
  %890 = vmatpush1.bf16.msra.mxu0 0
  %891 = vmatprep.subr.bf16.mxu0 0
  %892 = vmatpush1.bf16.msra.mxu0 0
  %893 = vmatprep.subr.bf16.mxu0 0
  %894 = vmatpush1.bf16.msra.mxu0 0
  %895 = vmatprep.subr.bf16.mxu0 0
  %896 = vmatpush1.bf16.msra.mxu0 0
  %897 = vmatprep.subr.bf16.mxu0 0
  %898 = vmatpush1.bf16.msra.mxu0 0
  %899 = vmatprep.subr.bf16.mxu0 0
  %900 = vmatpush1.bf16.msra.mxu0 0
  %901 = vmatprep.subr.bf16.mxu0 0
  %902 = vmatpush1.bf16.msra.mxu0 0
  %903 = vmatprep.subr.bf16.mxu0 %v421
  %904 = vmatpush1.bf16.msra.mxu0 %v418
  %905 = vmatprep.subr.bf16.mxu0 0
  %906 = vmatpush2.bf16.msra.mxu0 0
  %907 = vmatprep.subr.bf16.mxu0 0
  %908 = vmatpush2.bf16.msra.mxu0 0
  %909 = vmatprep.subr.bf16.mxu0 0
  %910 = vmatpush2.bf16.msra.mxu0 0
  %911 = vmatprep.subr.bf16.mxu0 0
  %912 = vmatpush2.bf16.msra.mxu0 0
  %913 = vmatprep.subr.bf16.mxu0 0
  %914 = vmatpush2.bf16.msra.mxu0 0
  %915 = vmatprep.subr.bf16.mxu0 0
  %916 = vmatpush2.bf16.msra.mxu0 0
  %917 = vmatprep.subr.bf16.mxu0 0
  %918 = vmatpush2.bf16.msra.mxu0 0
  %919 = vmatprep.subr.bf16.mxu0 0
  %920 = vmatpush2.bf16.msra.mxu0 0
  %921 = vmatprep.mubr.bf16.mxu0 0
  %922 = vmatmul.mubr.bf16.gmra.mxu0 %v366
  %v923 = vpop.f32.mrf.mxu0
  %v924 = vadd.f32 %v106, %v923
  %v925 = vpop.f32.mrf.mxu0
  %v926 = vadd.f32 %v106, %v925
  %v927 = vpop.f32.mrf.mxu0
  %v928 = vpop.f32.mrf.mxu0
  %929 = vdwg.mxu0
  %930 = vmatprep.subr.bf16.mxu0 0
  %931 = vmatpush1.bf16.msra.mxu0 0
  %932 = vmatprep.subr.bf16.mxu0 0
  %933 = vmatpush1.bf16.msra.mxu0 0
  %934 = vmatprep.subr.bf16.mxu0 0
  %935 = vmatpush1.bf16.msra.mxu0 0
  %936 = vmatprep.subr.bf16.mxu0 0
  %937 = vmatpush1.bf16.msra.mxu0 0
  %938 = vmatprep.subr.bf16.mxu0 0
  %939 = vmatpush1.bf16.msra.mxu0 0
  %940 = vmatprep.subr.bf16.mxu0 0
  %941 = vmatpush1.bf16.msra.mxu0 0
  %942 = vmatprep.subr.bf16.mxu0 0
  %943 = vmatpush1.bf16.msra.mxu0 0
  %944 = vmatprep.subr.bf16.mxu0 %v427
  %945 = vmatpush1.bf16.msra.mxu0 %v424
  %946 = vmatprep.subr.bf16.mxu0 0
  %947 = vmatpush2.bf16.msra.mxu0 0
  %948 = vmatprep.subr.bf16.mxu0 0
  %949 = vmatpush2.bf16.msra.mxu0 0
  %950 = vmatprep.subr.bf16.mxu0 0
  %951 = vmatpush2.bf16.msra.mxu0 0
  %952 = vmatprep.subr.bf16.mxu0 0
  %953 = vmatpush2.bf16.msra.mxu0 0
  %954 = vmatprep.subr.bf16.mxu0 0
  %955 = vmatpush2.bf16.msra.mxu0 0
  %956 = vmatprep.subr.bf16.mxu0 0
  %957 = vmatpush2.bf16.msra.mxu0 0
  %958 = vmatprep.subr.bf16.mxu0 0
  %959 = vmatpush2.bf16.msra.mxu0 0
  %960 = vmatprep.subr.bf16.mxu0 0
  %961 = vmatpush2.bf16.msra.mxu0 0
  %962 = vmatprep.mubr.bf16.mxu0 0
  %963 = vmatmul.mubr.bf16.gmra.mxu0 %v366
  %v964 = vpop.f32.mrf.mxu0
  %v965 = vadd.f32 %v106, %v964
  %v966 = vpop.f32.mrf.mxu0
  %v967 = vadd.f32 %v106, %v966
  %v968 = vpop.f32.mrf.mxu0
  %v969 = vpop.f32.mrf.mxu0
  %970 = vdwg.mxu0
  %971 = vmatprep.subr.bf16.mxu0 0
  %972 = vmatpush1.bf16.msra.mxu0 0
  %973 = vmatprep.subr.bf16.mxu0 0
  %974 = vmatpush1.bf16.msra.mxu0 0
  %975 = vmatprep.subr.bf16.mxu0 0
  %976 = vmatpush1.bf16.msra.mxu0 0
  %977 = vmatprep.subr.bf16.mxu0 0
  %978 = vmatpush1.bf16.msra.mxu0 0
  %979 = vmatprep.subr.bf16.mxu0 0
  %980 = vmatpush1.bf16.msra.mxu0 0
  %981 = vmatprep.subr.bf16.mxu0 0
  %982 = vmatpush1.bf16.msra.mxu0 0
  %983 = vmatprep.subr.bf16.mxu0 0
  %984 = vmatpush1.bf16.msra.mxu0 0
  %985 = vmatprep.subr.bf16.mxu0 %v433
  %986 = vmatpush1.bf16.msra.mxu0 %v430
  %987 = vmatprep.subr.bf16.mxu0 0
  %988 = vmatpush2.bf16.msra.mxu0 0
  %989 = vmatprep.subr.bf16.mxu0 0
  %990 = vmatpush2.bf16.msra.mxu0 0
  %991 = vmatprep.subr.bf16.mxu0 0
  %992 = vmatpush2.bf16.msra.mxu0 0
  %993 = vmatprep.subr.bf16.mxu0 0
  %994 = vmatpush2.bf16.msra.mxu0 0
  %995 = vmatprep.subr.bf16.mxu0 0
  %996 = vmatpush2.bf16.msra.mxu0 0
  %997 = vmatprep.subr.bf16.mxu0 0
  %998 = vmatpush2.bf16.msra.mxu0 0
  %999 = vmatprep.subr.bf16.mxu0 0
  %1000 = vmatpush2.bf16.msra.mxu0 0
  %1001 = vmatprep.subr.bf16.mxu0 0
  %1002 = vmatpush2.bf16.msra.mxu0 0
  %1003 = vmatprep.mubr.bf16.mxu0 0
  %1004 = vmatmul.mubr.bf16.gmra.mxu0 %v366
  %v1005 = vpop.f32.mrf.mxu0
  %v1006 = vadd.f32 %v106, %v1005
  %v1007 = vpop.f32.mrf.mxu0
  %v1008 = vadd.f32 %v106, %v1007
  %v1009 = vpop.f32.mrf.mxu0
  %v1010 = vpop.f32.mrf.mxu0
  %1011 = vdwg.mxu0
  %1012 = vmatprep.subr.bf16.mxu0 0
  %1013 = vmatpush1.bf16.msra.mxu0 0
  %1014 = vmatprep.subr.bf16.mxu0 0
  %1015 = vmatpush1.bf16.msra.mxu0 0
  %1016 = vmatprep.subr.bf16.mxu0 0
  %1017 = vmatpush1.bf16.msra.mxu0 0
  %1018 = vmatprep.subr.bf16.mxu0 0
  %1019 = vmatpush1.bf16.msra.mxu0 0
  %1020 = vmatprep.subr.bf16.mxu0 0
  %1021 = vmatpush1.bf16.msra.mxu0 0
  %1022 = vmatprep.subr.bf16.mxu0 0
  %1023 = vmatpush1.bf16.msra.mxu0 0
  %1024 = vmatprep.subr.bf16.mxu0 0
  %1025 = vmatpush1.bf16.msra.mxu0 0
  %1026 = vmatprep.subr.bf16.mxu0 %v439
  %1027 = vmatpush1.bf16.msra.mxu0 %v436
  %1028 = vmatprep.subr.bf16.mxu0 0
  %1029 = vmatpush2.bf16.msra.mxu0 0
  %1030 = vmatprep.subr.bf16.mxu0 0
  %1031 = vmatpush2.bf16.msra.mxu0 0
  %1032 = vmatprep.subr.bf16.mxu0 0
  %1033 = vmatpush2.bf16.msra.mxu0 0
  %1034 = vmatprep.subr.bf16.mxu0 0
  %1035 = vmatpush2.bf16.msra.mxu0 0
  %1036 = vmatprep.subr.bf16.mxu0 0
  %1037 = vmatpush2.bf16.msra.mxu0 0
  %1038 = vmatprep.subr.bf16.mxu0 0
  %1039 = vmatpush2.bf16.msra.mxu0 0
  %1040 = vmatprep.subr.bf16.mxu0 0
  %1041 = vmatpush2.bf16.msra.mxu0 0
  %1042 = vmatprep.subr.bf16.mxu0 0
  %1043 = vmatpush2.bf16.msra.mxu0 0
  %1044 = vmatprep.mubr.bf16.mxu0 0
  %1045 = vmatmul.mubr.bf16.gmra.mxu0 %v366
  %v1046 = vpop.f32.mrf.mxu0
  %v1047 = vadd.f32 %v106, %v1046
  %v1048 = vpop.f32.mrf.mxu0
  %v1049 = vadd.f32 %v106, %v1048
  %v1050 = vpop.f32.mrf.mxu0
  %v1051 = vpop.f32.mrf.mxu0
  %1052 = vdwg.mxu0
  %1053 = vmatprep.subr.bf16.mxu0 0
  %1054 = vmatpush1.bf16.msra.mxu0 0
  %1055 = vmatprep.subr.bf16.mxu0 0
  %1056 = vmatpush1.bf16.msra.mxu0 0
  %1057 = vmatprep.subr.bf16.mxu0 0
  %1058 = vmatpush1.bf16.msra.mxu0 0
  %1059 = vmatprep.subr.bf16.mxu0 0
  %1060 = vmatpush1.bf16.msra.mxu0 0
  %1061 = vmatprep.subr.bf16.mxu0 0
  %1062 = vmatpush1.bf16.msra.mxu0 0
  %1063 = vmatprep.subr.bf16.mxu0 0
  %1064 = vmatpush1.bf16.msra.mxu0 0
  %1065 = vmatprep.subr.bf16.mxu0 0
  %1066 = vmatpush1.bf16.msra.mxu0 0
  %1067 = vmatprep.subr.bf16.mxu0 %v445
  %1068 = vmatpush1.bf16.msra.mxu0 %v442
  %1069 = vmatprep.subr.bf16.mxu0 0
  %1070 = vmatpush2.bf16.msra.mxu0 0
  %1071 = vmatprep.subr.bf16.mxu0 0
  %1072 = vmatpush2.bf16.msra.mxu0 0
  %1073 = vmatprep.subr.bf16.mxu0 0
  %1074 = vmatpush2.bf16.msra.mxu0 0
  %1075 = vmatprep.subr.bf16.mxu0 0
  %1076 = vmatpush2.bf16.msra.mxu0 0
  %1077 = vmatprep.subr.bf16.mxu0 0
  %1078 = vmatpush2.bf16.msra.mxu0 0
  %1079 = vmatprep.subr.bf16.mxu0 0
  %1080 = vmatpush2.bf16.msra.mxu0 0
  %1081 = vmatprep.subr.bf16.mxu0 0
  %1082 = vmatpush2.bf16.msra.mxu0 0
  %1083 = vmatprep.subr.bf16.mxu0 0
  %1084 = vmatpush2.bf16.msra.mxu0 0
  %1085 = vmatprep.mubr.bf16.mxu0 0
  %1086 = vmatmul.mubr.bf16.gmra.mxu0 %v366
  %v1087 = vpop.f32.mrf.mxu0
  %v1088 = vadd.f32 %v106, %v1087
  %v1089 = vpop.f32.mrf.mxu0
  %v1090 = vadd.f32 %v106, %v1089
  %v1091 = vpop.f32.mrf.mxu0
  %v1092 = vpop.f32.mrf.mxu0
  %1093 = vdwg.mxu0
  %1094 = vmatprep.subr.bf16.mxu0 0
  %1095 = vmatpush1.bf16.msra.mxu0 0
  %1096 = vmatprep.subr.bf16.mxu0 0
  %1097 = vmatpush1.bf16.msra.mxu0 0
  %1098 = vmatprep.subr.bf16.mxu0 0
  %1099 = vmatpush1.bf16.msra.mxu0 0
  %1100 = vmatprep.subr.bf16.mxu0 0
  %1101 = vmatpush1.bf16.msra.mxu0 0
  %1102 = vmatprep.subr.bf16.mxu0 0
  %1103 = vmatpush1.bf16.msra.mxu0 0
  %1104 = vmatprep.subr.bf16.mxu0 0
  %1105 = vmatpush1.bf16.msra.mxu0 0
  %1106 = vmatprep.subr.bf16.mxu0 0
  %1107 = vmatpush1.bf16.msra.mxu0 0
  %1108 = vmatprep.subr.bf16.mxu0 %v451
  %1109 = vmatpush1.bf16.msra.mxu0 %v448
  %1110 = vmatprep.subr.bf16.mxu0 0
  %1111 = vmatpush2.bf16.msra.mxu0 0
  %1112 = vmatprep.subr.bf16.mxu0 0
  %1113 = vmatpush2.bf16.msra.mxu0 0
  %1114 = vmatprep.subr.bf16.mxu0 0
  %1115 = vmatpush2.bf16.msra.mxu0 0
  %1116 = vmatprep.subr.bf16.mxu0 0
  %1117 = vmatpush2.bf16.msra.mxu0 0
  %1118 = vmatprep.subr.bf16.mxu0 0
  %1119 = vmatpush2.bf16.msra.mxu0 0
  %1120 = vmatprep.subr.bf16.mxu0 0
  %1121 = vmatpush2.bf16.msra.mxu0 0
  %1122 = vmatprep.subr.bf16.mxu0 0
  %1123 = vmatpush2.bf16.msra.mxu0 0
  %1124 = vmatprep.subr.bf16.mxu0 0
  %1125 = vmatpush2.bf16.msra.mxu0 0
  %1126 = vmatprep.mubr.bf16.mxu0 0
  %1127 = vmatmul.mubr.bf16.gmra.mxu0 %v366
  %v1128 = vpop.f32.mrf.mxu0
  %v1129 = vadd.f32 %v106, %v1128
  %v1130 = vpop.f32.mrf.mxu0
  %v1131 = vadd.f32 %v106, %v1130
  %v1132 = vpop.f32.mrf.mxu0
  %v1133 = vpop.f32.mrf.mxu0
  %1134 = vdwg.mxu0
  %1135 = vmatprep.subr.bf16.mxu0 0
  %1136 = vmatpush1.bf16.msra.mxu0 0
  %1137 = vmatprep.subr.bf16.mxu0 0
  %1138 = vmatpush1.bf16.msra.mxu0 0
  %1139 = vmatprep.subr.bf16.mxu0 0
  %1140 = vmatpush1.bf16.msra.mxu0 0
  %1141 = vmatprep.subr.bf16.mxu0 0
  %1142 = vmatpush1.bf16.msra.mxu0 0
  %1143 = vmatprep.subr.bf16.mxu0 0
  %1144 = vmatpush1.bf16.msra.mxu0 0
  %1145 = vmatprep.subr.bf16.mxu0 0
  %1146 = vmatpush1.bf16.msra.mxu0 0
  %1147 = vmatprep.subr.bf16.mxu0 0
  %1148 = vmatpush1.bf16.msra.mxu0 0
  %1149 = vmatprep.subr.bf16.mxu0 %v457
  %1150 = vmatpush1.bf16.msra.mxu0 %v454
  %1151 = vmatprep.subr.bf16.mxu0 0
  %1152 = vmatpush2.bf16.msra.mxu0 0
  %1153 = vmatprep.subr.bf16.mxu0 0
  %1154 = vmatpush2.bf16.msra.mxu0 0
  %1155 = vmatprep.subr.bf16.mxu0 0
  %1156 = vmatpush2.bf16.msra.mxu0 0
  %1157 = vmatprep.subr.bf16.mxu0 0
  %1158 = vmatpush2.bf16.msra.mxu0 0
  %1159 = vmatprep.subr.bf16.mxu0 0
  %1160 = vmatpush2.bf16.msra.mxu0 0
  %1161 = vmatprep.subr.bf16.mxu0 0
  %1162 = vmatpush2.bf16.msra.mxu0 0
  %1163 = vmatprep.subr.bf16.mxu0 0
  %1164 = vmatpush2.bf16.msra.mxu0 0
  %1165 = vmatprep.subr.bf16.mxu0 0
  %1166 = vmatpush2.bf16.msra.mxu0 0
  %1167 = vmatprep.mubr.bf16.mxu0 0
  %1168 = vmatmul.mubr.bf16.gmra.mxu0 %v366
  %v1169 = vpop.f32.mrf.mxu0
  %v1170 = vadd.f32 %v106, %v1169
  %v1171 = vpop.f32.mrf.mxu0
  %v1172 = vadd.f32 %v106, %v1171
  %v1173 = vpop.f32.mrf.mxu0
  %v1174 = vpop.f32.mrf.mxu0
  %1175 = vdwg.mxu0
  %1176 = vmatprep.subr.bf16.mxu0 0
  %1177 = vmatpush1.bf16.msra.mxu0 0
  %1178 = vmatprep.subr.bf16.mxu0 0
  %1179 = vmatpush1.bf16.msra.mxu0 0
  %1180 = vmatprep.subr.bf16.mxu0 0
  %1181 = vmatpush1.bf16.msra.mxu0 0
  %1182 = vmatprep.subr.bf16.mxu0 0
  %1183 = vmatpush1.bf16.msra.mxu0 0
  %1184 = vmatprep.subr.bf16.mxu0 0
  %1185 = vmatpush1.bf16.msra.mxu0 0
  %1186 = vmatprep.subr.bf16.mxu0 0
  %1187 = vmatpush1.bf16.msra.mxu0 0
  %1188 = vmatprep.subr.bf16.mxu0 0
  %1189 = vmatpush1.bf16.msra.mxu0 0
  %1190 = vmatprep.subr.bf16.mxu0 %v463
  %1191 = vmatpush1.bf16.msra.mxu0 %v460
  %1192 = vmatprep.subr.bf16.mxu0 0
  %1193 = vmatpush2.bf16.msra.mxu0 0
  %1194 = vmatprep.subr.bf16.mxu0 0
  %1195 = vmatpush2.bf16.msra.mxu0 0
  %1196 = vmatprep.subr.bf16.mxu0 0
  %1197 = vmatpush2.bf16.msra.mxu0 0
  %1198 = vmatprep.subr.bf16.mxu0 0
  %1199 = vmatpush2.bf16.msra.mxu0 0
  %1200 = vmatprep.subr.bf16.mxu0 0
  %1201 = vmatpush2.bf16.msra.mxu0 0
  %1202 = vmatprep.subr.bf16.mxu0 0
  %1203 = vmatpush2.bf16.msra.mxu0 0
  %1204 = vmatprep.subr.bf16.mxu0 0
  %1205 = vmatpush2.bf16.msra.mxu0 0
  %1206 = vmatprep.subr.bf16.mxu0 0
  %1207 = vmatpush2.bf16.msra.mxu0 0
  %1208 = vmatprep.mubr.bf16.mxu0 0
  %1209 = vmatmul.mubr.bf16.gmra.mxu0 %v366
  %v1210 = vpop.f32.mrf.mxu0
  %v1211 = vadd.f32 %v106, %v1210
  %v1212 = vpop.f32.mrf.mxu0
  %v1213 = vadd.f32 %v106, %v1212
  %v1214 = vpop.f32.mrf.mxu0
  %v1215 = vpop.f32.mrf.mxu0
  %1216 = vdwg.mxu0
  %1217 = vmatprep.subr.bf16.mxu0 0
  %1218 = vmatpush1.bf16.msra.mxu0 0
  %1219 = vmatprep.subr.bf16.mxu0 0
  %1220 = vmatpush1.bf16.msra.mxu0 0
  %1221 = vmatprep.subr.bf16.mxu0 0
  %1222 = vmatpush1.bf16.msra.mxu0 0
  %1223 = vmatprep.subr.bf16.mxu0 0
  %1224 = vmatpush1.bf16.msra.mxu0 0
  %1225 = vmatprep.subr.bf16.mxu0 0
  %1226 = vmatpush1.bf16.msra.mxu0 0
  %1227 = vmatprep.subr.bf16.mxu0 0
  %1228 = vmatpush1.bf16.msra.mxu0 0
  %1229 = vmatprep.subr.bf16.mxu0 0
  %1230 = vmatpush1.bf16.msra.mxu0 0
  %1231 = vmatprep.subr.bf16.mxu0 %v469
  %1232 = vmatpush1.bf16.msra.mxu0 %v466
  %1233 = vmatprep.subr.bf16.mxu0 0
  %1234 = vmatpush2.bf16.msra.mxu0 0
  %1235 = vmatprep.subr.bf16.mxu0 0
  %1236 = vmatpush2.bf16.msra.mxu0 0
  %1237 = vmatprep.subr.bf16.mxu0 0
  %1238 = vmatpush2.bf16.msra.mxu0 0
  %1239 = vmatprep.subr.bf16.mxu0 0
  %1240 = vmatpush2.bf16.msra.mxu0 0
  %1241 = vmatprep.subr.bf16.mxu0 0
  %1242 = vmatpush2.bf16.msra.mxu0 0
  %1243 = vmatprep.subr.bf16.mxu0 0
  %1244 = vmatpush2.bf16.msra.mxu0 0
  %1245 = vmatprep.subr.bf16.mxu0 0
  %1246 = vmatpush2.bf16.msra.mxu0 0
  %1247 = vmatprep.subr.bf16.mxu0 0
  %1248 = vmatpush2.bf16.msra.mxu0 0
  %1249 = vmatprep.mubr.bf16.mxu0 0
  %1250 = vmatmul.mubr.bf16.gmra.mxu0 %v366
  %v1251 = vpop.f32.mrf.mxu0
  %v1252 = vadd.f32 %v106, %v1251
  %v1253 = vpop.f32.mrf.mxu0
  %v1254 = vadd.f32 %v106, %v1253
  %v1255 = vpop.f32.mrf.mxu0
  %v1256 = vpop.f32.mrf.mxu0
  %1257 = vdwg.mxu0
  %1258 = vmatprep.subr.bf16.mxu0 0
  %1259 = vmatpush1.bf16.msra.mxu0 0
  %1260 = vmatprep.subr.bf16.mxu0 0
  %1261 = vmatpush1.bf16.msra.mxu0 0
  %1262 = vmatprep.subr.bf16.mxu0 0
  %1263 = vmatpush1.bf16.msra.mxu0 0
  %1264 = vmatprep.subr.bf16.mxu0 0
  %1265 = vmatpush1.bf16.msra.mxu0 0
  %1266 = vmatprep.subr.bf16.mxu0 0
  %1267 = vmatpush1.bf16.msra.mxu0 0
  %1268 = vmatprep.subr.bf16.mxu0 0
  %1269 = vmatpush1.bf16.msra.mxu0 0
  %1270 = vmatprep.subr.bf16.mxu0 0
  %1271 = vmatpush1.bf16.msra.mxu0 0
  %1272 = vmatprep.subr.bf16.mxu0 %v475
  %1273 = vmatpush1.bf16.msra.mxu0 %v472
  %1274 = vmatprep.subr.bf16.mxu0 0
  %1275 = vmatpush2.bf16.msra.mxu0 0
  %1276 = vmatprep.subr.bf16.mxu0 0
  %1277 = vmatpush2.bf16.msra.mxu0 0
  %1278 = vmatprep.subr.bf16.mxu0 0
  %1279 = vmatpush2.bf16.msra.mxu0 0
  %1280 = vmatprep.subr.bf16.mxu0 0
  %1281 = vmatpush2.bf16.msra.mxu0 0
  %1282 = vmatprep.subr.bf16.mxu0 0
  %1283 = vmatpush2.bf16.msra.mxu0 0
  %1284 = vmatprep.subr.bf16.mxu0 0
  %1285 = vmatpush2.bf16.msra.mxu0 0
  %1286 = vmatprep.subr.bf16.mxu0 0
  %1287 = vmatpush2.bf16.msra.mxu0 0
  %1288 = vmatprep.subr.bf16.mxu0 0
  %1289 = vmatpush2.bf16.msra.mxu0 0
  %1290 = vmatprep.mubr.bf16.mxu0 0
  %1291 = vmatmul.mubr.bf16.gmra.mxu0 %v366
  %v1292 = vpop.f32.mrf.mxu0
  %v1293 = vadd.f32 %v106, %v1292
  %v1294 = vpop.f32.mrf.mxu0
  %v1295 = vadd.f32 %v106, %v1294
  %v1296 = vpop.f32.mrf.mxu0
  %v1297 = vpop.f32.mrf.mxu0
  %1298 = vdwg.mxu0
  %1299 = vmatprep.subr.bf16.mxu0 0
  %1300 = vmatpush1.bf16.msra.mxu0 0
  %1301 = vmatprep.subr.bf16.mxu0 0
  %1302 = vmatpush1.bf16.msra.mxu0 0
  %1303 = vmatprep.subr.bf16.mxu0 0
  %1304 = vmatpush1.bf16.msra.mxu0 0
  %1305 = vmatprep.subr.bf16.mxu0 0
  %1306 = vmatpush1.bf16.msra.mxu0 0
  %1307 = vmatprep.subr.bf16.mxu0 0
  %1308 = vmatpush1.bf16.msra.mxu0 0
  %1309 = vmatprep.subr.bf16.mxu0 0
  %1310 = vmatpush1.bf16.msra.mxu0 0
  %1311 = vmatprep.subr.bf16.mxu0 0
  %1312 = vmatpush1.bf16.msra.mxu0 0
  %1313 = vmatprep.subr.bf16.mxu0 %v481
  %1314 = vmatpush1.bf16.msra.mxu0 %v478
  %1315 = vmatprep.subr.bf16.mxu0 0
  %1316 = vmatpush2.bf16.msra.mxu0 0
  %1317 = vmatprep.subr.bf16.mxu0 0
  %1318 = vmatpush2.bf16.msra.mxu0 0
  %1319 = vmatprep.subr.bf16.mxu0 0
  %1320 = vmatpush2.bf16.msra.mxu0 0
  %1321 = vmatprep.subr.bf16.mxu0 0
  %1322 = vmatpush2.bf16.msra.mxu0 0
  %1323 = vmatprep.subr.bf16.mxu0 0
  %1324 = vmatpush2.bf16.msra.mxu0 0
  %1325 = vmatprep.subr.bf16.mxu0 0
  %1326 = vmatpush2.bf16.msra.mxu0 0
  %1327 = vmatprep.subr.bf16.mxu0 0
  %1328 = vmatpush2.bf16.msra.mxu0 0
  %1329 = vmatprep.subr.bf16.mxu0 0
  %1330 = vmatpush2.bf16.msra.mxu0 0
  %1331 = vmatprep.mubr.bf16.mxu0 0
  %1332 = vmatmul.mubr.bf16.gmra.mxu0 %v366
  %v1333 = vpop.f32.mrf.mxu0
  %v1334 = vadd.f32 %v106, %v1333
  %v1335 = vpop.f32.mrf.mxu0
  %v1336 = vadd.f32 %v106, %v1335
  %v1337 = vpop.f32.mrf.mxu0
  %v1338 = vpop.f32.mrf.mxu0
  %1339 = vdwg.mxu0
  %1340 = vmatprep.subr.bf16.mxu0 0
  %1341 = vmatpush1.bf16.msra.mxu0 0
  %1342 = vmatprep.subr.bf16.mxu0 0
  %1343 = vmatpush1.bf16.msra.mxu0 0
  %1344 = vmatprep.subr.bf16.mxu0 0
  %1345 = vmatpush1.bf16.msra.mxu0 0
  %1346 = vmatprep.subr.bf16.mxu0 0
  %1347 = vmatpush1.bf16.msra.mxu0 0
  %1348 = vmatprep.subr.bf16.mxu0 0
  %1349 = vmatpush1.bf16.msra.mxu0 0
  %1350 = vmatprep.subr.bf16.mxu0 0
  %1351 = vmatpush1.bf16.msra.mxu0 0
  %1352 = vmatprep.subr.bf16.mxu0 0
  %1353 = vmatpush1.bf16.msra.mxu0 0
  %1354 = vmatprep.subr.bf16.mxu0 %v487
  %1355 = vmatpush1.bf16.msra.mxu0 %v484
  %1356 = vmatprep.subr.bf16.mxu0 0
  %1357 = vmatpush2.bf16.msra.mxu0 0
  %1358 = vmatprep.subr.bf16.mxu0 0
  %1359 = vmatpush2.bf16.msra.mxu0 0
  %1360 = vmatprep.subr.bf16.mxu0 0
  %1361 = vmatpush2.bf16.msra.mxu0 0
  %1362 = vmatprep.subr.bf16.mxu0 0
  %1363 = vmatpush2.bf16.msra.mxu0 0
  %1364 = vmatprep.subr.bf16.mxu0 0
  %1365 = vmatpush2.bf16.msra.mxu0 0
  %1366 = vmatprep.subr.bf16.mxu0 0
  %1367 = vmatpush2.bf16.msra.mxu0 0
  %1368 = vmatprep.subr.bf16.mxu0 0
  %1369 = vmatpush2.bf16.msra.mxu0 0
  %1370 = vmatprep.subr.bf16.mxu0 0
  %1371 = vmatpush2.bf16.msra.mxu0 0
  %1372 = vmatprep.mubr.bf16.mxu0 0
  %1373 = vmatmul.mubr.bf16.gmra.mxu0 %v366
  %v1374 = vpop.f32.mrf.mxu0
  %v1375 = vadd.f32 %v106, %v1374
  %v1376 = vpop.f32.mrf.mxu0
  %v1377 = vadd.f32 %v106, %v1376
  %v1378 = vpop.f32.mrf.mxu0
  %v1379 = vpop.f32.mrf.mxu0
  %1380 = vdwg.mxu0
  %1381 = vmatprep.subr.bf16.mxu0 0
  %1382 = vmatpush1.bf16.msra.mxu0 0
  %1383 = vmatprep.subr.bf16.mxu0 0
  %1384 = vmatpush1.bf16.msra.mxu0 0
  %1385 = vmatprep.subr.bf16.mxu0 0
  %1386 = vmatpush1.bf16.msra.mxu0 0
  %1387 = vmatprep.subr.bf16.mxu0 0
  %1388 = vmatpush1.bf16.msra.mxu0 0
  %1389 = vmatprep.subr.bf16.mxu0 0
  %1390 = vmatpush1.bf16.msra.mxu0 0
  %1391 = vmatprep.subr.bf16.mxu0 0
  %1392 = vmatpush1.bf16.msra.mxu0 0
  %1393 = vmatprep.subr.bf16.mxu0 0
  %1394 = vmatpush1.bf16.msra.mxu0 0
  %1395 = vmatprep.subr.bf16.mxu0 %v493
  %1396 = vmatpush1.bf16.msra.mxu0 %v490
  %1397 = vmatprep.subr.bf16.mxu0 0
  %1398 = vmatpush2.bf16.msra.mxu0 0
  %1399 = vmatprep.subr.bf16.mxu0 0
  %1400 = vmatpush2.bf16.msra.mxu0 0
  %1401 = vmatprep.subr.bf16.mxu0 0
  %1402 = vmatpush2.bf16.msra.mxu0 0
  %1403 = vmatprep.subr.bf16.mxu0 0
  %1404 = vmatpush2.bf16.msra.mxu0 0
  %1405 = vmatprep.subr.bf16.mxu0 0
  %1406 = vmatpush2.bf16.msra.mxu0 0
  %1407 = vmatprep.subr.bf16.mxu0 0
  %1408 = vmatpush2.bf16.msra.mxu0 0
  %1409 = vmatprep.subr.bf16.mxu0 0
  %1410 = vmatpush2.bf16.msra.mxu0 0
  %1411 = vmatprep.subr.bf16.mxu0 0
  %1412 = vmatpush2.bf16.msra.mxu0 0
  %1413 = vmatprep.mubr.bf16.mxu0 0
  %1414 = vmatmul.mubr.bf16.gmra.mxu0 %v366
  %v1415 = vpop.f32.mrf.mxu0
  %v1416 = vadd.f32 %v106, %v1415
  %v1417 = vpop.f32.mrf.mxu0
  %v1418 = vadd.f32 %v106, %v1417
  %v1419 = vpop.f32.mrf.mxu0
  %v1420 = vpop.f32.mrf.mxu0
  %1421 = vdwg.mxu0
  %1422 = vmatprep.subr.bf16.mxu0 0
  %1423 = vmatpush1.bf16.msra.mxu0 0
  %1424 = vmatprep.subr.bf16.mxu0 0
  %1425 = vmatpush1.bf16.msra.mxu0 0
  %1426 = vmatprep.subr.bf16.mxu0 0
  %1427 = vmatpush1.bf16.msra.mxu0 0
  %1428 = vmatprep.subr.bf16.mxu0 0
  %1429 = vmatpush1.bf16.msra.mxu0 0
  %1430 = vmatprep.subr.bf16.mxu0 0
  %1431 = vmatpush1.bf16.msra.mxu0 0
  %1432 = vmatprep.subr.bf16.mxu0 0
  %1433 = vmatpush1.bf16.msra.mxu0 0
  %1434 = vmatprep.subr.bf16.mxu0 0
  %1435 = vmatpush1.bf16.msra.mxu0 0
  %1436 = vmatprep.subr.bf16.mxu0 %v499
  %1437 = vmatpush1.bf16.msra.mxu0 %v496
  %1438 = vmatprep.subr.bf16.mxu0 0
  %1439 = vmatpush2.bf16.msra.mxu0 0
  %1440 = vmatprep.subr.bf16.mxu0 0
  %1441 = vmatpush2.bf16.msra.mxu0 0
  %1442 = vmatprep.subr.bf16.mxu0 0
  %1443 = vmatpush2.bf16.msra.mxu0 0
  %1444 = vmatprep.subr.bf16.mxu0 0
  %1445 = vmatpush2.bf16.msra.mxu0 0
  %1446 = vmatprep.subr.bf16.mxu0 0
  %1447 = vmatpush2.bf16.msra.mxu0 0
  %1448 = vmatprep.subr.bf16.mxu0 0
  %1449 = vmatpush2.bf16.msra.mxu0 0
  %1450 = vmatprep.subr.bf16.mxu0 0
  %1451 = vmatpush2.bf16.msra.mxu0 0
  %1452 = vmatprep.subr.bf16.mxu0 0
  %1453 = vmatpush2.bf16.msra.mxu0 0
  %1454 = vmatprep.mubr.bf16.mxu0 0
  %1455 = vmatmul.mubr.bf16.gmra.mxu0 %v366
  %v1456 = vpop.f32.mrf.mxu0
  %v1457 = vadd.f32 %v106, %v1456
  %v1458 = vpop.f32.mrf.mxu0
  %v1459 = vadd.f32 %v106, %v1458
  %v1460 = vpop.f32.mrf.mxu0
  %v1461 = vpop.f32.mrf.mxu0
  %1462 = vdwg.mxu0
  %1463 = vmatprep.subr.bf16.mxu0 0
  %1464 = vmatpush1.bf16.msra.mxu0 0
  %1465 = vmatprep.subr.bf16.mxu0 0
  %1466 = vmatpush1.bf16.msra.mxu0 0
  %1467 = vmatprep.subr.bf16.mxu0 0
  %1468 = vmatpush1.bf16.msra.mxu0 0
  %1469 = vmatprep.subr.bf16.mxu0 0
  %1470 = vmatpush1.bf16.msra.mxu0 0
  %1471 = vmatprep.subr.bf16.mxu0 0
  %1472 = vmatpush1.bf16.msra.mxu0 0
  %1473 = vmatprep.subr.bf16.mxu0 0
  %1474 = vmatpush1.bf16.msra.mxu0 0
  %1475 = vmatprep.subr.bf16.mxu0 0
  %1476 = vmatpush1.bf16.msra.mxu0 0
  %1477 = vmatprep.subr.bf16.mxu0 %v505
  %1478 = vmatpush1.bf16.msra.mxu0 %v502
  %1479 = vmatprep.subr.bf16.mxu0 0
  %1480 = vmatpush2.bf16.msra.mxu0 0
  %1481 = vmatprep.subr.bf16.mxu0 0
  %1482 = vmatpush2.bf16.msra.mxu0 0
  %1483 = vmatprep.subr.bf16.mxu0 0
  %1484 = vmatpush2.bf16.msra.mxu0 0
  %1485 = vmatprep.subr.bf16.mxu0 0
  %1486 = vmatpush2.bf16.msra.mxu0 0
  %1487 = vmatprep.subr.bf16.mxu0 0
  %1488 = vmatpush2.bf16.msra.mxu0 0
  %1489 = vmatprep.subr.bf16.mxu0 0
  %1490 = vmatpush2.bf16.msra.mxu0 0
  %1491 = vmatprep.subr.bf16.mxu0 0
  %1492 = vmatpush2.bf16.msra.mxu0 0
  %1493 = vmatprep.subr.bf16.mxu0 0
  %1494 = vmatpush2.bf16.msra.mxu0 0
  %1495 = vmatprep.mubr.bf16.mxu0 0
  %1496 = vmatmul.mubr.bf16.gmra.mxu0 %v366
  %v1497 = vpop.f32.mrf.mxu0
  %v1498 = vadd.f32 %v106, %v1497
  %v1499 = vpop.f32.mrf.mxu0
  %v1500 = vadd.f32 %v106, %v1499
  %v1501 = vpop.f32.mrf.mxu0
  %v1502 = vpop.f32.mrf.mxu0
  %1503 = vdwg.mxu0
  %1504 = vmatprep.subr.bf16.mxu0 0
  %1505 = vmatpush1.bf16.msra.mxu0 0
  %1506 = vmatprep.subr.bf16.mxu0 0
  %1507 = vmatpush1.bf16.msra.mxu0 0
  %1508 = vmatprep.subr.bf16.mxu0 0
  %1509 = vmatpush1.bf16.msra.mxu0 0
  %1510 = vmatprep.subr.bf16.mxu0 0
  %1511 = vmatpush1.bf16.msra.mxu0 0
  %1512 = vmatprep.subr.bf16.mxu0 0
  %1513 = vmatpush1.bf16.msra.mxu0 0
  %1514 = vmatprep.subr.bf16.mxu0 0
  %1515 = vmatpush1.bf16.msra.mxu0 0
  %1516 = vmatprep.subr.bf16.mxu0 0
  %1517 = vmatpush1.bf16.msra.mxu0 0
  %1518 = vmatprep.subr.bf16.mxu0 %v511
  %1519 = vmatpush1.bf16.msra.mxu0 %v508
  %1520 = vmatprep.subr.bf16.mxu0 0
  %1521 = vmatpush2.bf16.msra.mxu0 0
  %1522 = vmatprep.subr.bf16.mxu0 0
  %1523 = vmatpush2.bf16.msra.mxu0 0
  %1524 = vmatprep.subr.bf16.mxu0 0
  %1525 = vmatpush2.bf16.msra.mxu0 0
  %1526 = vmatprep.subr.bf16.mxu0 0
  %1527 = vmatpush2.bf16.msra.mxu0 0
  %1528 = vmatprep.subr.bf16.mxu0 0
  %1529 = vmatpush2.bf16.msra.mxu0 0
  %1530 = vmatprep.subr.bf16.mxu0 0
  %1531 = vmatpush2.bf16.msra.mxu0 0
  %1532 = vmatprep.subr.bf16.mxu0 0
  %1533 = vmatpush2.bf16.msra.mxu0 0
  %1534 = vmatprep.subr.bf16.mxu0 0
  %1535 = vmatpush2.bf16.msra.mxu0 0
  %1536 = vmatprep.mubr.bf16.mxu0 0
  %1537 = vmatmul.mubr.bf16.gmra.mxu0 %v366
  %v1538 = vpop.f32.mrf.mxu0
  %v1539 = vadd.f32 %v106, %v1538
  %v1540 = vpop.f32.mrf.mxu0
  %v1541 = vadd.f32 %v106, %v1540
  %v1542 = vpop.f32.mrf.mxu0
  %v1543 = vpop.f32.mrf.mxu0
  %1544 = vdwg.mxu0
  %1545 = vmatprep.subr.bf16.mxu0 0
  %1546 = vmatpush1.bf16.msra.mxu0 0
  %1547 = vmatprep.subr.bf16.mxu0 0
  %1548 = vmatpush1.bf16.msra.mxu0 0
  %1549 = vmatprep.subr.bf16.mxu0 0
  %1550 = vmatpush1.bf16.msra.mxu0 0
  %1551 = vmatprep.subr.bf16.mxu0 0
  %1552 = vmatpush1.bf16.msra.mxu0 0
  %1553 = vmatprep.subr.bf16.mxu0 0
  %1554 = vmatpush1.bf16.msra.mxu0 0
  %1555 = vmatprep.subr.bf16.mxu0 0
  %1556 = vmatpush1.bf16.msra.mxu0 0
  %1557 = vmatprep.subr.bf16.mxu0 0
  %1558 = vmatpush1.bf16.msra.mxu0 0
  %1559 = vmatprep.subr.bf16.mxu0 %v517
  %1560 = vmatpush1.bf16.msra.mxu0 %v514
  %1561 = vmatprep.subr.bf16.mxu0 0
  %1562 = vmatpush2.bf16.msra.mxu0 0
  %1563 = vmatprep.subr.bf16.mxu0 0
  %1564 = vmatpush2.bf16.msra.mxu0 0
  %1565 = vmatprep.subr.bf16.mxu0 0
  %1566 = vmatpush2.bf16.msra.mxu0 0
  %1567 = vmatprep.subr.bf16.mxu0 0
  %1568 = vmatpush2.bf16.msra.mxu0 0
  %1569 = vmatprep.subr.bf16.mxu0 0
  %1570 = vmatpush2.bf16.msra.mxu0 0
  %1571 = vmatprep.subr.bf16.mxu0 0
  %1572 = vmatpush2.bf16.msra.mxu0 0
  %1573 = vmatprep.subr.bf16.mxu0 0
  %1574 = vmatpush2.bf16.msra.mxu0 0
  %1575 = vmatprep.subr.bf16.mxu0 0
  %1576 = vmatpush2.bf16.msra.mxu0 0
  %1577 = vmatprep.mubr.bf16.mxu0 0
  %1578 = vmatmul.mubr.bf16.gmra.mxu0 %v366
  %v1579 = vpop.f32.mrf.mxu0
  %v1580 = vadd.f32 %v106, %v1579
  %v1581 = vpop.f32.mrf.mxu0
  %v1582 = vadd.f32 %v106, %v1581
  %v1583 = vpop.f32.mrf.mxu0
  %v1584 = vpop.f32.mrf.mxu0
  %1585 = vdwg.mxu0
  %1586 = vmatprep.subr.bf16.mxu0 0
  %1587 = vmatpush1.bf16.msra.mxu0 0
  %1588 = vmatprep.subr.bf16.mxu0 0
  %1589 = vmatpush1.bf16.msra.mxu0 0
  %1590 = vmatprep.subr.bf16.mxu0 0
  %1591 = vmatpush1.bf16.msra.mxu0 0
  %1592 = vmatprep.subr.bf16.mxu0 0
  %1593 = vmatpush1.bf16.msra.mxu0 0
  %1594 = vmatprep.subr.bf16.mxu0 0
  %1595 = vmatpush1.bf16.msra.mxu0 0
  %1596 = vmatprep.subr.bf16.mxu0 0
  %1597 = vmatpush1.bf16.msra.mxu0 0
  %1598 = vmatprep.subr.bf16.mxu0 0
  %1599 = vmatpush1.bf16.msra.mxu0 0
  %1600 = vmatprep.subr.bf16.mxu0 %v523
  %1601 = vmatpush1.bf16.msra.mxu0 %v520
  %1602 = vmatprep.subr.bf16.mxu0 0
  %1603 = vmatpush2.bf16.msra.mxu0 0
  %1604 = vmatprep.subr.bf16.mxu0 0
  %1605 = vmatpush2.bf16.msra.mxu0 0
  %1606 = vmatprep.subr.bf16.mxu0 0
  %1607 = vmatpush2.bf16.msra.mxu0 0
  %1608 = vmatprep.subr.bf16.mxu0 0
  %1609 = vmatpush2.bf16.msra.mxu0 0
  %1610 = vmatprep.subr.bf16.mxu0 0
  %1611 = vmatpush2.bf16.msra.mxu0 0
  %1612 = vmatprep.subr.bf16.mxu0 0
  %1613 = vmatpush2.bf16.msra.mxu0 0
  %1614 = vmatprep.subr.bf16.mxu0 0
  %1615 = vmatpush2.bf16.msra.mxu0 0
  %1616 = vmatprep.subr.bf16.mxu0 0
  %1617 = vmatpush2.bf16.msra.mxu0 0
  %1618 = vmatprep.mubr.bf16.mxu0 0
  %1619 = vmatmul.mubr.bf16.gmra.mxu0 %v366
  %v1620 = vpop.f32.mrf.mxu0
  %v1621 = vadd.f32 %v106, %v1620
  %v1622 = vpop.f32.mrf.mxu0
  %v1623 = vadd.f32 %v106, %v1622
  %v1624 = vpop.f32.mrf.mxu0
  %v1625 = vpop.f32.mrf.mxu0
  %1626 = vdwg.mxu0
  %1627 = vmatprep.subr.bf16.mxu0 0
  %1628 = vmatpush1.bf16.msra.mxu0 0
  %1629 = vmatprep.subr.bf16.mxu0 0
  %1630 = vmatpush1.bf16.msra.mxu0 0
  %1631 = vmatprep.subr.bf16.mxu0 0
  %1632 = vmatpush1.bf16.msra.mxu0 0
  %1633 = vmatprep.subr.bf16.mxu0 0
  %1634 = vmatpush1.bf16.msra.mxu0 0
  %1635 = vmatprep.subr.bf16.mxu0 0
  %1636 = vmatpush1.bf16.msra.mxu0 0
  %1637 = vmatprep.subr.bf16.mxu0 0
  %1638 = vmatpush1.bf16.msra.mxu0 0
  %1639 = vmatprep.subr.bf16.mxu0 0
  %1640 = vmatpush1.bf16.msra.mxu0 0
  %1641 = vmatprep.subr.bf16.mxu0 %v529
  %1642 = vmatpush1.bf16.msra.mxu0 %v526
  %1643 = vmatprep.subr.bf16.mxu0 0
  %1644 = vmatpush2.bf16.msra.mxu0 0
  %1645 = vmatprep.subr.bf16.mxu0 0
  %1646 = vmatpush2.bf16.msra.mxu0 0
  %1647 = vmatprep.subr.bf16.mxu0 0
  %1648 = vmatpush2.bf16.msra.mxu0 0
  %1649 = vmatprep.subr.bf16.mxu0 0
  %1650 = vmatpush2.bf16.msra.mxu0 0
  %1651 = vmatprep.subr.bf16.mxu0 0
  %1652 = vmatpush2.bf16.msra.mxu0 0
  %1653 = vmatprep.subr.bf16.mxu0 0
  %1654 = vmatpush2.bf16.msra.mxu0 0
  %1655 = vmatprep.subr.bf16.mxu0 0
  %1656 = vmatpush2.bf16.msra.mxu0 0
  %1657 = vmatprep.subr.bf16.mxu0 0
  %1658 = vmatpush2.bf16.msra.mxu0 0
  %1659 = vmatprep.mubr.bf16.mxu0 0
  %1660 = vmatmul.mubr.bf16.gmra.mxu0 %v366
  %v1661 = vpop.f32.mrf.mxu0
  %v1662 = vadd.f32 %v106, %v1661
  %v1663 = vpop.f32.mrf.mxu0
  %v1664 = vadd.f32 %v106, %v1663
  %v1665 = vpop.f32.mrf.mxu0
  %v1666 = vpop.f32.mrf.mxu0
  %1667 = vdwg.mxu0
  %1668 = vmatprep.subr.bf16.mxu0 0
  %1669 = vmatpush1.bf16.msra.mxu0 0
  %1670 = vmatprep.subr.bf16.mxu0 0
  %1671 = vmatpush1.bf16.msra.mxu0 0
  %1672 = vmatprep.subr.bf16.mxu0 0
  %1673 = vmatpush1.bf16.msra.mxu0 0
  %1674 = vmatprep.subr.bf16.mxu0 0
  %1675 = vmatpush1.bf16.msra.mxu0 0
  %1676 = vmatprep.subr.bf16.mxu0 0
  %1677 = vmatpush1.bf16.msra.mxu0 0
  %1678 = vmatprep.subr.bf16.mxu0 0
  %1679 = vmatpush1.bf16.msra.mxu0 0
  %1680 = vmatprep.subr.bf16.mxu0 0
  %1681 = vmatpush1.bf16.msra.mxu0 0
  %1682 = vmatprep.subr.bf16.mxu0 %v535
  %1683 = vmatpush1.bf16.msra.mxu0 %v532
  %1684 = vmatprep.subr.bf16.mxu0 0
  %1685 = vmatpush2.bf16.msra.mxu0 0
  %1686 = vmatprep.subr.bf16.mxu0 0
  %1687 = vmatpush2.bf16.msra.mxu0 0
  %1688 = vmatprep.subr.bf16.mxu0 0
  %1689 = vmatpush2.bf16.msra.mxu0 0
  %1690 = vmatprep.subr.bf16.mxu0 0
  %1691 = vmatpush2.bf16.msra.mxu0 0
  %1692 = vmatprep.subr.bf16.mxu0 0
  %1693 = vmatpush2.bf16.msra.mxu0 0
  %1694 = vmatprep.subr.bf16.mxu0 0
  %1695 = vmatpush2.bf16.msra.mxu0 0
  %1696 = vmatprep.subr.bf16.mxu0 0
  %1697 = vmatpush2.bf16.msra.mxu0 0
  %1698 = vmatprep.subr.bf16.mxu0 0
  %1699 = vmatpush2.bf16.msra.mxu0 0
  %1700 = vmatprep.mubr.bf16.mxu0 0
  %1701 = vmatmul.mubr.bf16.gmra.mxu0 %v366
  %v1702 = vpop.f32.mrf.mxu0
  %v1703 = vadd.f32 %v106, %v1702
  %v1704 = vpop.f32.mrf.mxu0
  %v1705 = vadd.f32 %v106, %v1704
  %v1706 = vpop.f32.mrf.mxu0
  %v1707 = vpop.f32.mrf.mxu0
  %1708 = vdwg.mxu0
  %1709 = vmatprep.subr.bf16.mxu0 0
  %1710 = vmatpush1.bf16.msra.mxu0 0
  %1711 = vmatprep.subr.bf16.mxu0 0
  %1712 = vmatpush1.bf16.msra.mxu0 0
  %1713 = vmatprep.subr.bf16.mxu0 0
  %1714 = vmatpush1.bf16.msra.mxu0 0
  %1715 = vmatprep.subr.bf16.mxu0 0
  %1716 = vmatpush1.bf16.msra.mxu0 0
  %1717 = vmatprep.subr.bf16.mxu0 0
  %1718 = vmatpush1.bf16.msra.mxu0 0
  %1719 = vmatprep.subr.bf16.mxu0 0
  %1720 = vmatpush1.bf16.msra.mxu0 0
  %1721 = vmatprep.subr.bf16.mxu0 0
  %1722 = vmatpush1.bf16.msra.mxu0 0
  %1723 = vmatprep.subr.bf16.mxu0 %v541
  %1724 = vmatpush1.bf16.msra.mxu0 %v538
  %1725 = vmatprep.subr.bf16.mxu0 0
  %1726 = vmatpush2.bf16.msra.mxu0 0
  %1727 = vmatprep.subr.bf16.mxu0 0
  %1728 = vmatpush2.bf16.msra.mxu0 0
  %1729 = vmatprep.subr.bf16.mxu0 0
  %1730 = vmatpush2.bf16.msra.mxu0 0
  %1731 = vmatprep.subr.bf16.mxu0 0
  %1732 = vmatpush2.bf16.msra.mxu0 0
  %1733 = vmatprep.subr.bf16.mxu0 0
  %1734 = vmatpush2.bf16.msra.mxu0 0
  %1735 = vmatprep.subr.bf16.mxu0 0
  %1736 = vmatpush2.bf16.msra.mxu0 0
  %1737 = vmatprep.subr.bf16.mxu0 0
  %1738 = vmatpush2.bf16.msra.mxu0 0
  %1739 = vmatprep.subr.bf16.mxu0 0
  %1740 = vmatpush2.bf16.msra.mxu0 0
  %1741 = vmatprep.mubr.bf16.mxu0 0
  %1742 = vmatmul.mubr.bf16.gmra.mxu0 %v366
  %v1743 = vpop.f32.mrf.mxu0
  %v1744 = vadd.f32 %v106, %v1743
  %v1745 = vpop.f32.mrf.mxu0
  %v1746 = vadd.f32 %v106, %v1745
  %v1747 = vpop.f32.mrf.mxu0
  %v1748 = vpop.f32.mrf.mxu0
  %1749 = vdwg.mxu0
  %1750 = vmatprep.subr.bf16.mxu0 0
  %1751 = vmatpush1.bf16.msra.mxu0 0
  %1752 = vmatprep.subr.bf16.mxu0 0
  %1753 = vmatpush1.bf16.msra.mxu0 0
  %1754 = vmatprep.subr.bf16.mxu0 0
  %1755 = vmatpush1.bf16.msra.mxu0 0
  %1756 = vmatprep.subr.bf16.mxu0 0
  %1757 = vmatpush1.bf16.msra.mxu0 0
  %1758 = vmatprep.subr.bf16.mxu0 0
  %1759 = vmatpush1.bf16.msra.mxu0 0
  %1760 = vmatprep.subr.bf16.mxu0 0
  %1761 = vmatpush1.bf16.msra.mxu0 0
  %1762 = vmatprep.subr.bf16.mxu0 0
  %1763 = vmatpush1.bf16.msra.mxu0 0
  %1764 = vmatprep.subr.bf16.mxu0 %v547
  %1765 = vmatpush1.bf16.msra.mxu0 %v544
  %1766 = vmatprep.subr.bf16.mxu0 0
  %1767 = vmatpush2.bf16.msra.mxu0 0
  %1768 = vmatprep.subr.bf16.mxu0 0
  %1769 = vmatpush2.bf16.msra.mxu0 0
  %1770 = vmatprep.subr.bf16.mxu0 0
  %1771 = vmatpush2.bf16.msra.mxu0 0
  %1772 = vmatprep.subr.bf16.mxu0 0
  %1773 = vmatpush2.bf16.msra.mxu0 0
  %1774 = vmatprep.subr.bf16.mxu0 0
  %1775 = vmatpush2.bf16.msra.mxu0 0
  %1776 = vmatprep.subr.bf16.mxu0 0
  %1777 = vmatpush2.bf16.msra.mxu0 0
  %1778 = vmatprep.subr.bf16.mxu0 0
  %1779 = vmatpush2.bf16.msra.mxu0 0
  %1780 = vmatprep.subr.bf16.mxu0 0
  %1781 = vmatpush2.bf16.msra.mxu0 0
  %1782 = vmatprep.mubr.bf16.mxu0 0
  %1783 = vmatmul.mubr.bf16.gmra.mxu0 %v366
  %v1784 = vpop.f32.mrf.mxu0
  %v1785 = vadd.f32 %v106, %v1784
  %v1786 = vpop.f32.mrf.mxu0
  %v1787 = vadd.f32 %v106, %v1786
  %v1788 = vpop.f32.mrf.mxu0
  %v1789 = vpop.f32.mrf.mxu0
  %1790 = vdwg.mxu0
  %1791 = vmatprep.subr.bf16.mxu0 0
  %1792 = vmatpush1.bf16.msra.mxu0 0
  %1793 = vmatprep.subr.bf16.mxu0 0
  %1794 = vmatpush1.bf16.msra.mxu0 0
  %1795 = vmatprep.subr.bf16.mxu0 0
  %1796 = vmatpush1.bf16.msra.mxu0 0
  %1797 = vmatprep.subr.bf16.mxu0 0
  %1798 = vmatpush1.bf16.msra.mxu0 0
  %1799 = vmatprep.subr.bf16.mxu0 0
  %1800 = vmatpush1.bf16.msra.mxu0 0
  %1801 = vmatprep.subr.bf16.mxu0 0
  %1802 = vmatpush1.bf16.msra.mxu0 0
  %1803 = vmatprep.subr.bf16.mxu0 0
  %1804 = vmatpush1.bf16.msra.mxu0 0
  %1805 = vmatprep.subr.bf16.mxu0 %v553
  %1806 = vmatpush1.bf16.msra.mxu0 %v550
  %1807 = vmatprep.subr.bf16.mxu0 0
  %1808 = vmatpush2.bf16.msra.mxu0 0
  %1809 = vmatprep.subr.bf16.mxu0 0
  %1810 = vmatpush2.bf16.msra.mxu0 0
  %1811 = vmatprep.subr.bf16.mxu0 0
  %1812 = vmatpush2.bf16.msra.mxu0 0
  %1813 = vmatprep.subr.bf16.mxu0 0
  %1814 = vmatpush2.bf16.msra.mxu0 0
  %1815 = vmatprep.subr.bf16.mxu0 0
  %1816 = vmatpush2.bf16.msra.mxu0 0
  %1817 = vmatprep.subr.bf16.mxu0 0
  %1818 = vmatpush2.bf16.msra.mxu0 0
  %1819 = vmatprep.subr.bf16.mxu0 0
  %1820 = vmatpush2.bf16.msra.mxu0 0
  %1821 = vmatprep.subr.bf16.mxu0 0
  %1822 = vmatpush2.bf16.msra.mxu0 0
  %1823 = vmatprep.mubr.bf16.mxu0 0
  %1824 = vmatmul.mubr.bf16.gmra.mxu0 %v366
  %v1825 = vpop.f32.mrf.mxu0
  %v1826 = vadd.f32 %v106, %v1825
  %v1827 = vpop.f32.mrf.mxu0
  %v1828 = vadd.f32 %v106, %v1827
  %v1829 = vpop.f32.mrf.mxu0
  %v1830 = vpop.f32.mrf.mxu0
  %1831 = vdwg.mxu0
  %1832 = vmatprep.subr.bf16.mxu0 0
  %1833 = vmatpush1.bf16.msra.mxu0 0
  %1834 = vmatprep.subr.bf16.mxu0 0
  %1835 = vmatpush1.bf16.msra.mxu0 0
  %1836 = vmatprep.subr.bf16.mxu0 0
  %1837 = vmatpush1.bf16.msra.mxu0 0
  %1838 = vmatprep.subr.bf16.mxu0 0
  %1839 = vmatpush1.bf16.msra.mxu0 0
  %1840 = vmatprep.subr.bf16.mxu0 0
  %1841 = vmatpush1.bf16.msra.mxu0 0
  %1842 = vmatprep.subr.bf16.mxu0 0
  %1843 = vmatpush1.bf16.msra.mxu0 0
  %1844 = vmatprep.subr.bf16.mxu0 0
  %1845 = vmatpush1.bf16.msra.mxu0 0
  %1846 = vmatprep.subr.bf16.mxu0 %v559
  %1847 = vmatpush1.bf16.msra.mxu0 %v556
  %1848 = vmatprep.subr.bf16.mxu0 0
  %1849 = vmatpush2.bf16.msra.mxu0 0
  %1850 = vmatprep.subr.bf16.mxu0 0
  %1851 = vmatpush2.bf16.msra.mxu0 0
  %1852 = vmatprep.subr.bf16.mxu0 0
  %1853 = vmatpush2.bf16.msra.mxu0 0
  %1854 = vmatprep.subr.bf16.mxu0 0
  %1855 = vmatpush2.bf16.msra.mxu0 0
  %1856 = vmatprep.subr.bf16.mxu0 0
  %1857 = vmatpush2.bf16.msra.mxu0 0
  %1858 = vmatprep.subr.bf16.mxu0 0
  %1859 = vmatpush2.bf16.msra.mxu0 0
  %1860 = vmatprep.subr.bf16.mxu0 0
  %1861 = vmatpush2.bf16.msra.mxu0 0
  %1862 = vmatprep.subr.bf16.mxu0 0
  %1863 = vmatpush2.bf16.msra.mxu0 0
  %1864 = vmatprep.mubr.bf16.mxu0 0
  %1865 = vmatmul.mubr.bf16.gmra.mxu0 %v366
  %v1866 = vpop.f32.mrf.mxu0
  %v1867 = vadd.f32 %v106, %v1866
  %v1868 = vpop.f32.mrf.mxu0
  %v1869 = vadd.f32 %v106, %v1868
  %v1870 = vpop.f32.mrf.mxu0
  %v1871 = vpop.f32.mrf.mxu0
  %1872 = vdwg.mxu0
  %v1873 = vmax.f32 %v596, 0.0
  %v1874 = vmax.f32 %v598, 0.0
  %v1875 = vmax.f32 %v637, 0.0
  %v1876 = vmax.f32 %v639, 0.0
  %v1877 = vmax.f32 %v678, 0.0
  %v1878 = vmax.f32 %v680, 0.0
  %v1879 = vmax.f32 %v719, 0.0
  %v1880 = vmax.f32 %v721, 0.0
  %v1881 = vmax.f32 %v760, 0.0
  %v1882 = vmax.f32 %v762, 0.0
  %v1883 = vmax.f32 %v801, 0.0
  %v1884 = vmax.f32 %v803, 0.0
  %v1885 = vmax.f32 %v842, 0.0
  %v1886 = vmax.f32 %v844, 0.0
  %v1887 = vmax.f32 %v883, 0.0
  %v1888 = vmax.f32 %v885, 0.0
  %v1889 = vmax.f32 %v924, 0.0
  %v1890 = vmax.f32 %v926, 0.0
  %v1891 = vmax.f32 %v965, 0.0
  %v1892 = vmax.f32 %v967, 0.0
  %v1893 = vmax.f32 %v1006, 0.0
  %v1894 = vmax.f32 %v1008, 0.0
  %v1895 = vmax.f32 %v1047, 0.0
  %v1896 = vmax.f32 %v1049, 0.0
  %v1897 = vmax.f32 %v1088, 0.0
  %v1898 = vmax.f32 %v1090, 0.0
  %v1899 = vmax.f32 %v1129, 0.0
  %v1900 = vmax.f32 %v1131, 0.0
  %v1901 = vmax.f32 %v1170, 0.0
  %v1902 = vmax.f32 %v1172, 0.0
  %v1903 = vmax.f32 %v1211, 0.0
  %v1904 = vmax.f32 %v1213, 0.0
  %v1905 = vmax.f32 %v1252, 0.0
  %v1906 = vmax.f32 %v1254, 0.0
  %v1907 = vmax.f32 %v1293, 0.0
  %v1908 = vmax.f32 %v1295, 0.0
  %v1909 = vmax.f32 %v1334, 0.0
  %v1910 = vmax.f32 %v1336, 0.0
  %v1911 = vmax.f32 %v1375, 0.0
  %v1912 = vmax.f32 %v1377, 0.0
  %v1913 = vmax.f32 %v1416, 0.0
  %v1914 = vmax.f32 %v1418, 0.0
  %v1915 = vmax.f32 %v1457, 0.0
  %v1916 = vmax.f32 %v1459, 0.0
  %v1917 = vmax.f32 %v1498, 0.0
  %v1918 = vmax.f32 %v1500, 0.0
  %v1919 = vmax.f32 %v1539, 0.0
  %v1920 = vmax.f32 %v1541, 0.0
  %v1921 = vmax.f32 %v1580, 0.0
  %v1922 = vmax.f32 %v1582, 0.0
  %v1923 = vmax.f32 %v1621, 0.0
  %v1924 = vmax.f32 %v1623, 0.0
  %v1925 = vmax.f32 %v1662, 0.0
  %v1926 = vmax.f32 %v1664, 0.0
  %v1927 = vmax.f32 %v1703, 0.0
  %v1928 = vmax.f32 %v1705, 0.0
  %v1929 = vmax.f32 %v1744, 0.0
  %v1930 = vmax.f32 %v1746, 0.0
  %v1931 = vmax.f32 %v1785, 0.0
  %v1932 = vmax.f32 %v1787, 0.0
  %v1933 = vmax.f32 %v1826, 0.0
  %v1934 = vmax.f32 %v1828, 0.0
  %v1935 = vmax.f32 %v1867, 0.0
  %v1936 = vmax.f32 %v1869, 0.0
  %v1937 = vpack.c.bf16 %v1873, %v1873
  %v1938 = vpack.c.bf16 %v1874, %v1874
  %v1939 = vpack.c.bf16 %v1875, %v1875
  %v1940 = vpack.c.bf16 %v1876, %v1876
  %v1941 = vpack.c.bf16 %v1877, %v1877
  %v1942 = vpack.c.bf16 %v1878, %v1878
  %v1943 = vpack.c.bf16 %v1879, %v1879
  %v1944 = vpack.c.bf16 %v1880, %v1880
  %v1945 = vpack.c.bf16 %v1881, %v1881
  %v1946 = vpack.c.bf16 %v1882, %v1882
  %v1947 = vpack.c.bf16 %v1883, %v1883
  %v1948 = vpack.c.bf16 %v1884, %v1884
  %v1949 = vpack.c.bf16 %v1885, %v1885
  %v1950 = vpack.c.bf16 %v1886, %v1886
  %v1951 = vpack.c.bf16 %v1887, %v1887
  %v1952 = vpack.c.bf16 %v1888, %v1888
  %v1953 = vpack.c.bf16 %v1889, %v1889
  %v1954 = vpack.c.bf16 %v1890, %v1890
  %v1955 = vpack.c.bf16 %v1891, %v1891
  %v1956 = vpack.c.bf16 %v1892, %v1892
  %v1957 = vpack.c.bf16 %v1893, %v1893
  %v1958 = vpack.c.bf16 %v1894, %v1894
  %v1959 = vpack.c.bf16 %v1895, %v1895
  %v1960 = vpack.c.bf16 %v1896, %v1896
  %v1961 = vpack.c.bf16 %v1897, %v1897
  %v1962 = vpack.c.bf16 %v1898, %v1898
  %v1963 = vpack.c.bf16 %v1899, %v1899
  %v1964 = vpack.c.bf16 %v1900, %v1900
  %v1965 = vpack.c.bf16 %v1901, %v1901
  %v1966 = vpack.c.bf16 %v1902, %v1902
  %v1967 = vpack.c.bf16 %v1903, %v1903
  %v1968 = vpack.c.bf16 %v1904, %v1904
  %v1969 = vpack.c.bf16 %v1905, %v1905
  %v1970 = vpack.c.bf16 %v1906, %v1906
  %v1971 = vpack.c.bf16 %v1907, %v1907
  %v1972 = vpack.c.bf16 %v1908, %v1908
  %v1973 = vpack.c.bf16 %v1909, %v1909
  %v1974 = vpack.c.bf16 %v1910, %v1910
  %v1975 = vpack.c.bf16 %v1911, %v1911
  %v1976 = vpack.c.bf16 %v1912, %v1912
  %v1977 = vpack.c.bf16 %v1913, %v1913
  %v1978 = vpack.c.bf16 %v1914, %v1914
  %v1979 = vpack.c.bf16 %v1915, %v1915
  %v1980 = vpack.c.bf16 %v1916, %v1916
  %v1981 = vpack.c.bf16 %v1917, %v1917
  %v1982 = vpack.c.bf16 %v1918, %v1918
  %v1983 = vpack.c.bf16 %v1919, %v1919
  %v1984 = vpack.c.bf16 %v1920, %v1920
  %v1985 = vpack.c.bf16 %v1921, %v1921
  %v1986 = vpack.c.bf16 %v1922, %v1922
  %v1987 = vpack.c.bf16 %v1923, %v1923
  %v1988 = vpack.c.bf16 %v1924, %v1924
  %v1989 = vpack.c.bf16 %v1925, %v1925
  %v1990 = vpack.c.bf16 %v1926, %v1926
  %v1991 = vpack.c.bf16 %v1927, %v1927
  %v1992 = vpack.c.bf16 %v1928, %v1928
  %v1993 = vpack.c.bf16 %v1929, %v1929
  %v1994 = vpack.c.bf16 %v1930, %v1930
  %v1995 = vpack.c.bf16 %v1931, %v1931
  %v1996 = vpack.c.bf16 %v1932, %v1932
  %v1997 = vpack.c.bf16 %v1933, %v1933
  %v1998 = vpack.c.bf16 %v1934, %v1934
  %v1999 = vpack.c.bf16 %v1935, %v1935
  %v2000 = vpack.c.bf16 %v1936, %v1936
  %v2065 = vunpack.c.l.b16 %v1937
  %v2066 = vunpack.c.l.b16 %v1938
  %v2067 = vunpack.c.l.b16 %v1939
  %v2068 = vunpack.c.l.b16 %v1940
  %v2069 = vunpack.c.l.b16 %v1941
  %v2070 = vunpack.c.l.b16 %v1942
  %v2071 = vunpack.c.l.b16 %v1943
  %v2072 = vunpack.c.l.b16 %v1944
  %v2073 = vunpack.c.l.b16 %v1945
  %v2074 = vunpack.c.l.b16 %v1946
  %v2075 = vunpack.c.l.b16 %v1947
  %v2076 = vunpack.c.l.b16 %v1948
  %v2077 = vunpack.c.l.b16 %v1949
  %v2078 = vunpack.c.l.b16 %v1950
  %v2079 = vunpack.c.l.b16 %v1951
  %v2080 = vunpack.c.l.b16 %v1952
  %v2081 = vunpack.c.l.b16 %v1953
  %v2082 = vunpack.c.l.b16 %v1954
  %v2083 = vunpack.c.l.b16 %v1955
  %v2084 = vunpack.c.l.b16 %v1956
  %v2085 = vunpack.c.l.b16 %v1957
  %v2086 = vunpack.c.l.b16 %v1958
  %v2087 = vunpack.c.l.b16 %v1959
  %v2088 = vunpack.c.l.b16 %v1960
  %v2089 = vunpack.c.l.b16 %v1961
  %v2090 = vunpack.c.l.b16 %v1962
  %v2091 = vunpack.c.l.b16 %v1963
  %v2092 = vunpack.c.l.b16 %v1964
  %v2093 = vunpack.c.l.b16 %v1965
  %v2094 = vunpack.c.l.b16 %v1966
  %v2095 = vunpack.c.l.b16 %v1967
  %v2096 = vunpack.c.l.b16 %v1968
  %v2097 = vunpack.c.l.b16 %v1969
  %v2098 = vunpack.c.l.b16 %v1970
  %v2099 = vunpack.c.l.b16 %v1971
  %v2100 = vunpack.c.l.b16 %v1972
  %v2101 = vunpack.c.l.b16 %v1973
  %v2102 = vunpack.c.l.b16 %v1974
  %v2103 = vunpack.c.l.b16 %v1975
  %v2104 = vunpack.c.l.b16 %v1976
  %v2105 = vunpack.c.l.b16 %v1977
  %v2106 = vunpack.c.l.b16 %v1978
  %v2107 = vunpack.c.l.b16 %v1979
  %v2108 = vunpack.c.l.b16 %v1980
  %v2109 = vunpack.c.l.b16 %v1981
  %v2110 = vunpack.c.l.b16 %v1982
  %v2111 = vunpack.c.l.b16 %v1983
  %v2112 = vunpack.c.l.b16 %v1984
  %v2113 = vunpack.c.l.b16 %v1985
  %v2114 = vunpack.c.l.b16 %v1986
  %v2115 = vunpack.c.l.b16 %v1987
  %v2116 = vunpack.c.l.b16 %v1988
  %v2117 = vunpack.c.l.b16 %v1989
  %v2118 = vunpack.c.l.b16 %v1990
  %v2119 = vunpack.c.l.b16 %v1991
  %v2120 = vunpack.c.l.b16 %v1992
  %v2121 = vunpack.c.l.b16 %v1993
  %v2122 = vunpack.c.l.b16 %v1994
  %v2123 = vunpack.c.l.b16 %v1995
  %v2124 = vunpack.c.l.b16 %v1996
  %v2125 = vunpack.c.l.b16 %v1997
  %v2126 = vunpack.c.l.b16 %v1998
  %v2127 = vunpack.c.l.b16 %v1999
  %v2128 = vunpack.c.l.b16 %v2000
  %v2129 = vpack.c.b16 %v2066, %v2065
  %v2130 = vpack.c.b16 %v2068, %v2067
  %v2131 = vpack.c.b16 %v2070, %v2069
  %v2132 = vpack.c.b16 %v2072, %v2071
  %v2133 = vpack.c.b16 %v2074, %v2073
  %v2134 = vpack.c.b16 %v2076, %v2075
  %v2135 = vpack.c.b16 %v2078, %v2077
  %v2136 = vpack.c.b16 %v2080, %v2079
  %v2137 = vpack.c.b16 %v2082, %v2081
  %v2138 = vpack.c.b16 %v2084, %v2083
  %v2139 = vpack.c.b16 %v2086, %v2085
  %v2140 = vpack.c.b16 %v2088, %v2087
  %v2141 = vpack.c.b16 %v2090, %v2089
  %v2142 = vpack.c.b16 %v2092, %v2091
  %v2143 = vpack.c.b16 %v2094, %v2093
  %v2144 = vpack.c.b16 %v2096, %v2095
  %v2145 = vpack.c.b16 %v2098, %v2097
  %v2146 = vpack.c.b16 %v2100, %v2099
  %v2147 = vpack.c.b16 %v2102, %v2101
  %v2148 = vpack.c.b16 %v2104, %v2103
  %v2149 = vpack.c.b16 %v2106, %v2105
  %v2150 = vpack.c.b16 %v2108, %v2107
  %v2151 = vpack.c.b16 %v2110, %v2109
  %v2152 = vpack.c.b16 %v2112, %v2111
  %v2153 = vpack.c.b16 %v2114, %v2113
  %v2154 = vpack.c.b16 %v2116, %v2115
  %v2155 = vpack.c.b16 %v2118, %v2117
  %v2156 = vpack.c.b16 %v2120, %v2119
  %v2157 = vpack.c.b16 %v2122, %v2121
  %v2158 = vpack.c.b16 %v2124, %v2123
  %v2159 = vpack.c.b16 %v2126, %v2125
  %v2160 = vpack.c.b16 %v2128, %v2127
  %2193 = vst [vmem:[%s9] sm:$0xff] %v2129
  %2194 = vst [vmem:[%s9 + $0x8] sm:$0xff] %v2130
  %2195 = vst [vmem:[%s9 + $0x10] sm:$0xff] %v2131
  %2196 = vst [vmem:[%s9 + $0x18] sm:$0xff] %v2132
  %2197 = vst [vmem:[%s9 + $0x20] sm:$0xff] %v2133
  %2198 = vst [vmem:[%s9 + $0x28] sm:$0xff] %v2134
  %2199 = vst [vmem:[%s9 + $0x30] sm:$0xff] %v2135
  %2200 = vst [vmem:[%s9 + $0x38] sm:$0xff] %v2136
  %2201 = vst [vmem:[%s9 + $0x40] sm:$0xff] %v2137
  %2202 = vst [vmem:[%s9 + $0x48] sm:$0xff] %v2138
  %2203 = vst [vmem:[%s9 + $0x50] sm:$0xff] %v2139
  %2204 = vst [vmem:[%s9 + $0x58] sm:$0xff] %v2140
  %2205 = vst [vmem:[%s9 + $0x60] sm:$0xff] %v2141
  %2206 = vst [vmem:[%s9 + $0x68] sm:$0xff] %v2142
  %2207 = vst [vmem:[%s9 + $0x70] sm:$0xff] %v2143
  %2208 = vst [vmem:[%s9 + $0x78] sm:$0xff] %v2144
  %2209 = vst [vmem:[%s9 + $0x80] sm:$0xff] %v2145
  %2210 = vst [vmem:[%s9 + $0x88] sm:$0xff] %v2146
  %2211 = vst [vmem:[%s9 + $0x90] sm:$0xff] %v2147
  %2212 = vst [vmem:[%s9 + $0x98] sm:$0xff] %v2148
  %2213 = vst [vmem:[%s9 + $0xa0] sm:$0xff] %v2149
  %2214 = vst [vmem:[%s9 + $0xa8] sm:$0xff] %v2150
  %2215 = vst [vmem:[%s9 + $0xb0] sm:$0xff] %v2151
  %2216 = vst [vmem:[%s9 + $0xb8] sm:$0xff] %v2152
  %2217 = vst [vmem:[%s9 + $0xc0] sm:$0xff] %v2153
  %2218 = vst [vmem:[%s9 + $0xc8] sm:$0xff] %v2154
  %2219 = vst [vmem:[%s9 + $0xd0] sm:$0xff] %v2155
  %2220 = vst [vmem:[%s9 + $0xd8] sm:$0xff] %v2156
  %2221 = vst [vmem:[%s9 + $0xe0] sm:$0xff] %v2157
  %2222 = vst [vmem:[%s9 + $0xe8] sm:$0xff] %v2158
  %2223 = vst [vmem:[%s9 + $0xf0] sm:$0xff] %v2159
  %2224 = vst [vmem:[%s9 + $0xf8] sm:$0xff] %v2160
  %v2225 = vpack.c.bf16 %v1889, %v1873
  %v2226 = vpack.c.bf16 %v1890, %v1874
  %v2227 = vpack.c.bf16 %v1891, %v1875
  %v2228 = vpack.c.bf16 %v1892, %v1876
  %v2229 = vpack.c.bf16 %v1893, %v1877
  %v2230 = vpack.c.bf16 %v1894, %v1878
  %v2231 = vpack.c.bf16 %v1895, %v1879
  %v2232 = vpack.c.bf16 %v1896, %v1880
  %v2233 = vpack.c.bf16 %v1897, %v1881
  %v2234 = vpack.c.bf16 %v1898, %v1882
  %v2235 = vpack.c.bf16 %v1899, %v1883
  %v2236 = vpack.c.bf16 %v1900, %v1884
  %v2237 = vpack.c.bf16 %v1901, %v1885
  %v2238 = vpack.c.bf16 %v1902, %v1886
  %v2239 = vpack.c.bf16 %v1903, %v1887
  %v2240 = vpack.c.bf16 %v1904, %v1888
  %v2241 = vpack.c.bf16 %v1921, %v1905
  %v2242 = vpack.c.bf16 %v1922, %v1906
  %v2243 = vpack.c.bf16 %v1923, %v1907
  %v2244 = vpack.c.bf16 %v1924, %v1908
  %v2245 = vpack.c.bf16 %v1925, %v1909
  %v2246 = vpack.c.bf16 %v1926, %v1910
  %v2247 = vpack.c.bf16 %v1927, %v1911
  %v2248 = vpack.c.bf16 %v1928, %v1912
  %v2249 = vpack.c.bf16 %v1929, %v1913
  %v2250 = vpack.c.bf16 %v1930, %v1914
  %v2251 = vpack.c.bf16 %v1931, %v1915
  %v2252 = vpack.c.bf16 %v1932, %v1916
  %v2253 = vpack.c.bf16 %v1933, %v1917
  %v2254 = vpack.c.bf16 %v1934, %v1918
  %v2255 = vpack.c.bf16 %v1935, %v1919
  %v2256 = vpack.c.bf16 %v1936, %v1920
  %v2257 = vld [vmem:[%s3] sm:$0xf]
  %v2258 = vld [vmem:[%s3 + $0x4] sm:$0xf]
  %v2259 = vld [vmem:[%s4] sm:$0xff]
  %v2260 = vld [vmem:[%s4 + $0x8] sm:$0xff]
  %2262 = vset.pattern.permute.xlu0 0
  %2263 = vperm.xlu0 %2262, %v2259
  %v2264 = vpop.permute.xlu0 %2263
  %2267 = vset.pattern.permute.xlu0 0
  %2268 = vperm.xlu0 %2267, %v2260
  %v2269 = vpop.permute.xlu0 %2268
  %v2273 = vunpack.c.l.b16 %v2257
  %v2274 = vunpack.c.l.b16 %v2258
  %v2275 = vpack.c.b16 %v2274, %v2273
  %vm2276 = vcmask 261120
  %v2278 = vsel %vm2276, %v2275, 0
  %2280 = vmatprep.subr.bf16.mxu0 0
  %2281 = vmatpush1.bf16.msra.mxu0 0
  %2282 = vmatprep.subr.bf16.mxu0 0
  %2283 = vmatpush1.bf16.msra.mxu0 0
  %2284 = vmatprep.subr.bf16.mxu0 0
  %2285 = vmatpush1.bf16.msra.mxu0 0
  %2286 = vmatprep.subr.bf16.mxu0 0
  %2287 = vmatpush1.bf16.msra.mxu0 0
  %2288 = vmatprep.subr.bf16.mxu0 0
  %2289 = vmatpush1.bf16.msra.mxu0 0
  %2290 = vmatprep.subr.bf16.mxu0 0
  %2291 = vmatpush1.bf16.msra.mxu0 0
  %2292 = vmatprep.subr.bf16.mxu0 %v2242
  %2293 = vmatpush1.bf16.msra.mxu0 %v2241
  %2294 = vmatprep.subr.bf16.mxu0 %v2226
  %2295 = vmatpush1.bf16.msra.mxu0 %v2225
  %2296 = vmatprep.subr.bf16.mxu0 0
  %2297 = vmatpush2.bf16.msra.mxu0 0
  %2298 = vmatprep.subr.bf16.mxu0 0
  %2299 = vmatpush2.bf16.msra.mxu0 0
  %2300 = vmatprep.subr.bf16.mxu0 0
  %2301 = vmatpush2.bf16.msra.mxu0 0
  %2302 = vmatprep.subr.bf16.mxu0 0
  %2303 = vmatpush2.bf16.msra.mxu0 0
  %2304 = vmatprep.subr.bf16.mxu0 0
  %2305 = vmatpush2.bf16.msra.mxu0 0
  %2306 = vmatprep.subr.bf16.mxu0 0
  %2307 = vmatpush2.bf16.msra.mxu0 0
  %2308 = vmatprep.subr.bf16.mxu0 0
  %2309 = vmatpush2.bf16.msra.mxu0 0
  %2310 = vmatprep.subr.bf16.mxu0 0
  %2311 = vmatpush2.bf16.msra.mxu0 0
  %2312 = vmatprep.mubr.bf16.mxu0 0
  %2313 = vmatmul.mubr.bf16.gmra.mxu0 %v2278
  %v2314 = vpop.f32.mrf.mxu0
  %v2315 = vadd.f32 %v2264, %v2314
  %v2316 = vpop.f32.mrf.mxu0
  %v2317 = vadd.f32 %v2264, %v2316
  %v2318 = vpop.f32.mrf.mxu0
  %v2319 = vadd.f32 %v2269, %v2318
  %v2320 = vpop.f32.mrf.mxu0
  %v2321 = vadd.f32 %v2269, %v2320
  %2322 = vdwg.mxu0
  %2323 = vmatprep.subr.bf16.mxu0 0
  %2324 = vmatpush1.bf16.msra.mxu0 0
  %2325 = vmatprep.subr.bf16.mxu0 0
  %2326 = vmatpush1.bf16.msra.mxu0 0
  %2327 = vmatprep.subr.bf16.mxu0 0
  %2328 = vmatpush1.bf16.msra.mxu0 0
  %2329 = vmatprep.subr.bf16.mxu0 0
  %2330 = vmatpush1.bf16.msra.mxu0 0
  %2331 = vmatprep.subr.bf16.mxu0 0
  %2332 = vmatpush1.bf16.msra.mxu0 0
  %2333 = vmatprep.subr.bf16.mxu0 0
  %2334 = vmatpush1.bf16.msra.mxu0 0
  %2335 = vmatprep.subr.bf16.mxu0 %v2244
  %2336 = vmatpush1.bf16.msra.mxu0 %v2243
  %2337 = vmatprep.subr.bf16.mxu0 %v2228
  %2338 = vmatpush1.bf16.msra.mxu0 %v2227
  %2339 = vmatprep.subr.bf16.mxu0 0
  %2340 = vmatpush2.bf16.msra.mxu0 0
  %2341 = vmatprep.subr.bf16.mxu0 0
  %2342 = vmatpush2.bf16.msra.mxu0 0
  %2343 = vmatprep.subr.bf16.mxu0 0
  %2344 = vmatpush2.bf16.msra.mxu0 0
  %2345 = vmatprep.subr.bf16.mxu0 0
  %2346 = vmatpush2.bf16.msra.mxu0 0
  %2347 = vmatprep.subr.bf16.mxu0 0
  %2348 = vmatpush2.bf16.msra.mxu0 0
  %2349 = vmatprep.subr.bf16.mxu0 0
  %2350 = vmatpush2.bf16.msra.mxu0 0
  %2351 = vmatprep.subr.bf16.mxu0 0
  %2352 = vmatpush2.bf16.msra.mxu0 0
  %2353 = vmatprep.subr.bf16.mxu0 0
  %2354 = vmatpush2.bf16.msra.mxu0 0
  %2355 = vmatprep.mubr.bf16.mxu0 0
  %2356 = vmatmul.mubr.bf16.gmra.mxu0 %v2278
  %v2357 = vpop.f32.mrf.mxu0
  %v2358 = vadd.f32 %v2264, %v2357
  %v2359 = vpop.f32.mrf.mxu0
  %v2360 = vadd.f32 %v2264, %v2359
  %v2361 = vpop.f32.mrf.mxu0
  %v2362 = vadd.f32 %v2269, %v2361
  %v2363 = vpop.f32.mrf.mxu0
  %v2364 = vadd.f32 %v2269, %v2363
  %2365 = vdwg.mxu0
  %2366 = vmatprep.subr.bf16.mxu0 0
  %2367 = vmatpush1.bf16.msra.mxu0 0
  %2368 = vmatprep.subr.bf16.mxu0 0
  %2369 = vmatpush1.bf16.msra.mxu0 0
  %2370 = vmatprep.subr.bf16.mxu0 0
  %2371 = vmatpush1.bf16.msra.mxu0 0
  %2372 = vmatprep.subr.bf16.mxu0 0
  %2373 = vmatpush1.bf16.msra.mxu0 0
  %2374 = vmatprep.subr.bf16.mxu0 0
  %2375 = vmatpush1.bf16.msra.mxu0 0
  %2376 = vmatprep.subr.bf16.mxu0 0
  %2377 = vmatpush1.bf16.msra.mxu0 0
  %2378 = vmatprep.subr.bf16.mxu0 %v2246
  %2379 = vmatpush1.bf16.msra.mxu0 %v2245
  %2380 = vmatprep.subr.bf16.mxu0 %v2230
  %2381 = vmatpush1.bf16.msra.mxu0 %v2229
  %2382 = vmatprep.subr.bf16.mxu0 0
  %2383 = vmatpush2.bf16.msra.mxu0 0
  %2384 = vmatprep.subr.bf16.mxu0 0
  %2385 = vmatpush2.bf16.msra.mxu0 0
  %2386 = vmatprep.subr.bf16.mxu0 0
  %2387 = vmatpush2.bf16.msra.mxu0 0
  %2388 = vmatprep.subr.bf16.mxu0 0
  %2389 = vmatpush2.bf16.msra.mxu0 0
  %2390 = vmatprep.subr.bf16.mxu0 0
  %2391 = vmatpush2.bf16.msra.mxu0 0
  %2392 = vmatprep.subr.bf16.mxu0 0
  %2393 = vmatpush2.bf16.msra.mxu0 0
  %2394 = vmatprep.subr.bf16.mxu0 0
  %2395 = vmatpush2.bf16.msra.mxu0 0
  %2396 = vmatprep.subr.bf16.mxu0 0
  %2397 = vmatpush2.bf16.msra.mxu0 0
  %2398 = vmatprep.mubr.bf16.mxu0 0
  %2399 = vmatmul.mubr.bf16.gmra.mxu0 %v2278
  %v2400 = vpop.f32.mrf.mxu0
  %v2401 = vadd.f32 %v2264, %v2400
  %v2402 = vpop.f32.mrf.mxu0
  %v2403 = vadd.f32 %v2264, %v2402
  %v2404 = vpop.f32.mrf.mxu0
  %v2405 = vadd.f32 %v2269, %v2404
  %v2406 = vpop.f32.mrf.mxu0
  %v2407 = vadd.f32 %v2269, %v2406
  %2408 = vdwg.mxu0
  %2409 = vmatprep.subr.bf16.mxu0 0
  %2410 = vmatpush1.bf16.msra.mxu0 0
  %2411 = vmatprep.subr.bf16.mxu0 0
  %2412 = vmatpush1.bf16.msra.mxu0 0
  %2413 = vmatprep.subr.bf16.mxu0 0
  %2414 = vmatpush1.bf16.msra.mxu0 0
  %2415 = vmatprep.subr.bf16.mxu0 0
  %2416 = vmatpush1.bf16.msra.mxu0 0
  %2417 = vmatprep.subr.bf16.mxu0 0
  %2418 = vmatpush1.bf16.msra.mxu0 0
  %2419 = vmatprep.subr.bf16.mxu0 0
  %2420 = vmatpush1.bf16.msra.mxu0 0
  %2421 = vmatprep.subr.bf16.mxu0 %v2248
  %2422 = vmatpush1.bf16.msra.mxu0 %v2247
  %2423 = vmatprep.subr.bf16.mxu0 %v2232
  %2424 = vmatpush1.bf16.msra.mxu0 %v2231
  %2425 = vmatprep.subr.bf16.mxu0 0
  %2426 = vmatpush2.bf16.msra.mxu0 0
  %2427 = vmatprep.subr.bf16.mxu0 0
  %2428 = vmatpush2.bf16.msra.mxu0 0
  %2429 = vmatprep.subr.bf16.mxu0 0
  %2430 = vmatpush2.bf16.msra.mxu0 0
  %2431 = vmatprep.subr.bf16.mxu0 0
  %2432 = vmatpush2.bf16.msra.mxu0 0
  %2433 = vmatprep.subr.bf16.mxu0 0
  %2434 = vmatpush2.bf16.msra.mxu0 0
  %2435 = vmatprep.subr.bf16.mxu0 0
  %2436 = vmatpush2.bf16.msra.mxu0 0
  %2437 = vmatprep.subr.bf16.mxu0 0
  %2438 = vmatpush2.bf16.msra.mxu0 0
  %2439 = vmatprep.subr.bf16.mxu0 0
  %2440 = vmatpush2.bf16.msra.mxu0 0
  %2441 = vmatprep.mubr.bf16.mxu0 0
  %2442 = vmatmul.mubr.bf16.gmra.mxu0 %v2278
  %v2443 = vpop.f32.mrf.mxu0
  %v2444 = vadd.f32 %v2264, %v2443
  %v2445 = vpop.f32.mrf.mxu0
  %v2446 = vadd.f32 %v2264, %v2445
  %v2447 = vpop.f32.mrf.mxu0
  %v2448 = vadd.f32 %v2269, %v2447
  %v2449 = vpop.f32.mrf.mxu0
  %v2450 = vadd.f32 %v2269, %v2449
  %2451 = vdwg.mxu0
  %2452 = vmatprep.subr.bf16.mxu0 0
  %2453 = vmatpush1.bf16.msra.mxu0 0
  %2454 = vmatprep.subr.bf16.mxu0 0
  %2455 = vmatpush1.bf16.msra.mxu0 0
  %2456 = vmatprep.subr.bf16.mxu0 0
  %2457 = vmatpush1.bf16.msra.mxu0 0
  %2458 = vmatprep.subr.bf16.mxu0 0
  %2459 = vmatpush1.bf16.msra.mxu0 0
  %2460 = vmatprep.subr.bf16.mxu0 0
  %2461 = vmatpush1.bf16.msra.mxu0 0
  %2462 = vmatprep.subr.bf16.mxu0 0
  %2463 = vmatpush1.bf16.msra.mxu0 0
  %2464 = vmatprep.subr.bf16.mxu0 %v2250
  %2465 = vmatpush1.bf16.msra.mxu0 %v2249
  %2466 = vmatprep.subr.bf16.mxu0 %v2234
  %2467 = vmatpush1.bf16.msra.mxu0 %v2233
  %2468 = vmatprep.subr.bf16.mxu0 0
  %2469 = vmatpush2.bf16.msra.mxu0 0
  %2470 = vmatprep.subr.bf16.mxu0 0
  %2471 = vmatpush2.bf16.msra.mxu0 0
  %2472 = vmatprep.subr.bf16.mxu0 0
  %2473 = vmatpush2.bf16.msra.mxu0 0
  %2474 = vmatprep.subr.bf16.mxu0 0
  %2475 = vmatpush2.bf16.msra.mxu0 0
  %2476 = vmatprep.subr.bf16.mxu0 0
  %2477 = vmatpush2.bf16.msra.mxu0 0
  %2478 = vmatprep.subr.bf16.mxu0 0
  %2479 = vmatpush2.bf16.msra.mxu0 0
  %2480 = vmatprep.subr.bf16.mxu0 0
  %2481 = vmatpush2.bf16.msra.mxu0 0
  %2482 = vmatprep.subr.bf16.mxu0 0
  %2483 = vmatpush2.bf16.msra.mxu0 0
  %2484 = vmatprep.mubr.bf16.mxu0 0
  %2485 = vmatmul.mubr.bf16.gmra.mxu0 %v2278
  %v2486 = vpop.f32.mrf.mxu0
  %v2487 = vadd.f32 %v2264, %v2486
  %v2488 = vpop.f32.mrf.mxu0
  %v2489 = vadd.f32 %v2264, %v2488
  %v2490 = vpop.f32.mrf.mxu0
  %v2491 = vadd.f32 %v2269, %v2490
  %v2492 = vpop.f32.mrf.mxu0
  %v2493 = vadd.f32 %v2269, %v2492
  %2494 = vdwg.mxu0
  %2495 = vmatprep.subr.bf16.mxu0 0
  %2496 = vmatpush1.bf16.msra.mxu0 0
  %2497 = vmatprep.subr.bf16.mxu0 0
  %2498 = vmatpush1.bf16.msra.mxu0 0
  %2499 = vmatprep.subr.bf16.mxu0 0
  %2500 = vmatpush1.bf16.msra.mxu0 0
  %2501 = vmatprep.subr.bf16.mxu0 0
  %2502 = vmatpush1.bf16.msra.mxu0 0
  %2503 = vmatprep.subr.bf16.mxu0 0
  %2504 = vmatpush1.bf16.msra.mxu0 0
  %2505 = vmatprep.subr.bf16.mxu0 0
  %2506 = vmatpush1.bf16.msra.mxu0 0
  %2507 = vmatprep.subr.bf16.mxu0 %v2252
  %2508 = vmatpush1.bf16.msra.mxu0 %v2251
  %2509 = vmatprep.subr.bf16.mxu0 %v2236
  %2510 = vmatpush1.bf16.msra.mxu0 %v2235
  %2511 = vmatprep.subr.bf16.mxu0 0
  %2512 = vmatpush2.bf16.msra.mxu0 0
  %2513 = vmatprep.subr.bf16.mxu0 0
  %2514 = vmatpush2.bf16.msra.mxu0 0
  %2515 = vmatprep.subr.bf16.mxu0 0
  %2516 = vmatpush2.bf16.msra.mxu0 0
  %2517 = vmatprep.subr.bf16.mxu0 0
  %2518 = vmatpush2.bf16.msra.mxu0 0
  %2519 = vmatprep.subr.bf16.mxu0 0
  %2520 = vmatpush2.bf16.msra.mxu0 0
  %2521 = vmatprep.subr.bf16.mxu0 0
  %2522 = vmatpush2.bf16.msra.mxu0 0
  %2523 = vmatprep.subr.bf16.mxu0 0
  %2524 = vmatpush2.bf16.msra.mxu0 0
  %2525 = vmatprep.subr.bf16.mxu0 0
  %2526 = vmatpush2.bf16.msra.mxu0 0
  %2527 = vmatprep.mubr.bf16.mxu0 0
  %2528 = vmatmul.mubr.bf16.gmra.mxu0 %v2278
  %v2529 = vpop.f32.mrf.mxu0
  %v2530 = vadd.f32 %v2264, %v2529
  %v2531 = vpop.f32.mrf.mxu0
  %v2532 = vadd.f32 %v2264, %v2531
  %v2533 = vpop.f32.mrf.mxu0
  %v2534 = vadd.f32 %v2269, %v2533
  %v2535 = vpop.f32.mrf.mxu0
  %v2536 = vadd.f32 %v2269, %v2535
  %2537 = vdwg.mxu0
  %2538 = vmatprep.subr.bf16.mxu0 0
  %2539 = vmatpush1.bf16.msra.mxu0 0
  %2540 = vmatprep.subr.bf16.mxu0 0
  %2541 = vmatpush1.bf16.msra.mxu0 0
  %2542 = vmatprep.subr.bf16.mxu0 0
  %2543 = vmatpush1.bf16.msra.mxu0 0
  %2544 = vmatprep.subr.bf16.mxu0 0
  %2545 = vmatpush1.bf16.msra.mxu0 0
  %2546 = vmatprep.subr.bf16.mxu0 0
  %2547 = vmatpush1.bf16.msra.mxu0 0
  %2548 = vmatprep.subr.bf16.mxu0 0
  %2549 = vmatpush1.bf16.msra.mxu0 0
  %2550 = vmatprep.subr.bf16.mxu0 %v2254
  %2551 = vmatpush1.bf16.msra.mxu0 %v2253
  %2552 = vmatprep.subr.bf16.mxu0 %v2238
  %2553 = vmatpush1.bf16.msra.mxu0 %v2237
  %2554 = vmatprep.subr.bf16.mxu0 0
  %2555 = vmatpush2.bf16.msra.mxu0 0
  %2556 = vmatprep.subr.bf16.mxu0 0
  %2557 = vmatpush2.bf16.msra.mxu0 0
  %2558 = vmatprep.subr.bf16.mxu0 0
  %2559 = vmatpush2.bf16.msra.mxu0 0
  %2560 = vmatprep.subr.bf16.mxu0 0
  %2561 = vmatpush2.bf16.msra.mxu0 0
  %2562 = vmatprep.subr.bf16.mxu0 0
  %2563 = vmatpush2.bf16.msra.mxu0 0
  %2564 = vmatprep.subr.bf16.mxu0 0
  %2565 = vmatpush2.bf16.msra.mxu0 0
  %2566 = vmatprep.subr.bf16.mxu0 0
  %2567 = vmatpush2.bf16.msra.mxu0 0
  %2568 = vmatprep.subr.bf16.mxu0 0
  %2569 = vmatpush2.bf16.msra.mxu0 0
  %2570 = vmatprep.mubr.bf16.mxu0 0
  %2571 = vmatmul.mubr.bf16.gmra.mxu0 %v2278
  %v2572 = vpop.f32.mrf.mxu0
  %v2573 = vadd.f32 %v2264, %v2572
  %v2574 = vpop.f32.mrf.mxu0
  %v2575 = vadd.f32 %v2264, %v2574
  %v2576 = vpop.f32.mrf.mxu0
  %v2577 = vadd.f32 %v2269, %v2576
  %v2578 = vpop.f32.mrf.mxu0
  %v2579 = vadd.f32 %v2269, %v2578
  %2580 = vdwg.mxu0
  %2581 = vmatprep.subr.bf16.mxu0 0
  %2582 = vmatpush1.bf16.msra.mxu0 0
  %2583 = vmatprep.subr.bf16.mxu0 0
  %2584 = vmatpush1.bf16.msra.mxu0 0
  %2585 = vmatprep.subr.bf16.mxu0 0
  %2586 = vmatpush1.bf16.msra.mxu0 0
  %2587 = vmatprep.subr.bf16.mxu0 0
  %2588 = vmatpush1.bf16.msra.mxu0 0
  %2589 = vmatprep.subr.bf16.mxu0 0
  %2590 = vmatpush1.bf16.msra.mxu0 0
  %2591 = vmatprep.subr.bf16.mxu0 0
  %2592 = vmatpush1.bf16.msra.mxu0 0
  %2593 = vmatprep.subr.bf16.mxu0 %v2256
  %2594 = vmatpush1.bf16.msra.mxu0 %v2255
  %2595 = vmatprep.subr.bf16.mxu0 %v2240
  %2596 = vmatpush1.bf16.msra.mxu0 %v2239
  %2597 = vmatprep.subr.bf16.mxu0 0
  %2598 = vmatpush2.bf16.msra.mxu0 0
  %2599 = vmatprep.subr.bf16.mxu0 0
  %2600 = vmatpush2.bf16.msra.mxu0 0
  %2601 = vmatprep.subr.bf16.mxu0 0
  %2602 = vmatpush2.bf16.msra.mxu0 0
  %2603 = vmatprep.subr.bf16.mxu0 0
  %2604 = vmatpush2.bf16.msra.mxu0 0
  %2605 = vmatprep.subr.bf16.mxu0 0
  %2606 = vmatpush2.bf16.msra.mxu0 0
  %2607 = vmatprep.subr.bf16.mxu0 0
  %2608 = vmatpush2.bf16.msra.mxu0 0
  %2609 = vmatprep.subr.bf16.mxu0 0
  %2610 = vmatpush2.bf16.msra.mxu0 0
  %2611 = vmatprep.subr.bf16.mxu0 0
  %2612 = vmatpush2.bf16.msra.mxu0 0
  %2613 = vmatprep.mubr.bf16.mxu0 0
  %2614 = vmatmul.mubr.bf16.gmra.mxu0 %v2278
  %v2615 = vpop.f32.mrf.mxu0
  %v2616 = vadd.f32 %v2264, %v2615
  %v2617 = vpop.f32.mrf.mxu0
  %v2618 = vadd.f32 %v2264, %v2617
  %v2619 = vpop.f32.mrf.mxu0
  %v2620 = vadd.f32 %v2269, %v2619
  %v2621 = vpop.f32.mrf.mxu0
  %v2622 = vadd.f32 %v2269, %v2621
  %2623 = vdwg.mxu0
  %v2624 = vmax.f32 %v2315, 0.0
  %v2625 = vmax.f32 %v2317, 0.0
  %v2626 = vmax.f32 %v2358, 0.0
  %v2627 = vmax.f32 %v2360, 0.0
  %v2628 = vmax.f32 %v2401, 0.0
  %v2629 = vmax.f32 %v2403, 0.0
  %v2630 = vmax.f32 %v2444, 0.0
  %v2631 = vmax.f32 %v2446, 0.0
  %v2632 = vmax.f32 %v2487, 0.0
  %v2633 = vmax.f32 %v2489, 0.0
  %v2634 = vmax.f32 %v2530, 0.0
  %v2635 = vmax.f32 %v2532, 0.0
  %v2636 = vmax.f32 %v2573, 0.0
  %v2637 = vmax.f32 %v2575, 0.0
  %v2638 = vmax.f32 %v2616, 0.0
  %v2639 = vmax.f32 %v2618, 0.0
  %v2640 = vmax.f32 %v2319, 0.0
  %v2641 = vmax.f32 %v2321, 0.0
  %v2642 = vmax.f32 %v2362, 0.0
  %v2643 = vmax.f32 %v2364, 0.0
  %v2644 = vmax.f32 %v2405, 0.0
  %v2645 = vmax.f32 %v2407, 0.0
  %v2646 = vmax.f32 %v2448, 0.0
  %v2647 = vmax.f32 %v2450, 0.0
  %v2648 = vmax.f32 %v2491, 0.0
  %v2649 = vmax.f32 %v2493, 0.0
  %v2650 = vmax.f32 %v2534, 0.0
  %v2651 = vmax.f32 %v2536, 0.0
  %v2652 = vmax.f32 %v2577, 0.0
  %v2653 = vmax.f32 %v2579, 0.0
  %v2654 = vmax.f32 %v2620, 0.0
  %v2655 = vmax.f32 %v2622, 0.0
  %v2656 = vpack.c.bf16 %v2640, %v2624
  %v2657 = vpack.c.bf16 %v2641, %v2625
  %v2658 = vpack.c.bf16 %v2642, %v2626
  %v2659 = vpack.c.bf16 %v2643, %v2627
  %v2660 = vpack.c.bf16 %v2644, %v2628
  %v2661 = vpack.c.bf16 %v2645, %v2629
  %v2662 = vpack.c.bf16 %v2646, %v2630
  %v2663 = vpack.c.bf16 %v2647, %v2631
  %v2664 = vpack.c.bf16 %v2648, %v2632
  %v2665 = vpack.c.bf16 %v2649, %v2633
  %v2666 = vpack.c.bf16 %v2650, %v2634
  %v2667 = vpack.c.bf16 %v2651, %v2635
  %v2668 = vpack.c.bf16 %v2652, %v2636
  %v2669 = vpack.c.bf16 %v2653, %v2637
  %v2670 = vpack.c.bf16 %v2654, %v2638
  %v2671 = vpack.c.bf16 %v2655, %v2639
  %v2688 = vunpack.c.l.b16 %v2656
  %v2689 = vunpack.c.l.b16 %v2657
  %v2690 = vunpack.c.l.b16 %v2658
  %v2691 = vunpack.c.l.b16 %v2659
  %v2692 = vunpack.c.l.b16 %v2660
  %v2693 = vunpack.c.l.b16 %v2661
  %v2694 = vunpack.c.l.b16 %v2662
  %v2695 = vunpack.c.l.b16 %v2663
  %v2696 = vunpack.c.l.b16 %v2664
  %v2697 = vunpack.c.l.b16 %v2665
  %v2698 = vunpack.c.l.b16 %v2666
  %v2699 = vunpack.c.l.b16 %v2667
  %v2700 = vunpack.c.l.b16 %v2668
  %v2701 = vunpack.c.l.b16 %v2669
  %v2702 = vunpack.c.l.b16 %v2670
  %v2703 = vunpack.c.l.b16 %v2671
  %v2704 = vunpack.c.h.b16 %v2656
  %v2705 = vunpack.c.h.b16 %v2657
  %v2706 = vunpack.c.h.b16 %v2658
  %v2707 = vunpack.c.h.b16 %v2659
  %v2708 = vunpack.c.h.b16 %v2660
  %v2709 = vunpack.c.h.b16 %v2661
  %v2710 = vunpack.c.h.b16 %v2662
  %v2711 = vunpack.c.h.b16 %v2663
  %v2712 = vunpack.c.h.b16 %v2664
  %v2713 = vunpack.c.h.b16 %v2665
  %v2714 = vunpack.c.h.b16 %v2666
  %v2715 = vunpack.c.h.b16 %v2667
  %v2716 = vunpack.c.h.b16 %v2668
  %v2717 = vunpack.c.h.b16 %v2669
  %v2718 = vunpack.c.h.b16 %v2670
  %v2719 = vunpack.c.h.b16 %v2671
  %v2720 = vpack.c.b16 %v2689, %v2688
  %v2721 = vpack.c.b16 %v2691, %v2690
  %v2722 = vpack.c.b16 %v2693, %v2692
  %v2723 = vpack.c.b16 %v2695, %v2694
  %v2724 = vpack.c.b16 %v2697, %v2696
  %v2725 = vpack.c.b16 %v2699, %v2698
  %v2726 = vpack.c.b16 %v2701, %v2700
  %v2727 = vpack.c.b16 %v2703, %v2702
  %v2728 = vpack.c.b16 %v2705, %v2704
  %v2729 = vpack.c.b16 %v2707, %v2706
  %v2730 = vpack.c.b16 %v2709, %v2708
  %v2731 = vpack.c.b16 %v2711, %v2710
  %v2732 = vpack.c.b16 %v2713, %v2712
  %v2733 = vpack.c.b16 %v2715, %v2714
  %v2734 = vpack.c.b16 %v2717, %v2716
  %v2735 = vpack.c.b16 %v2719, %v2718
  %2752 = vst [vmem:[%s10] sm:$0xff] %v2720
  %2753 = vst [vmem:[%s10 + $0x8] sm:$0xff] %v2721
  %2754 = vst [vmem:[%s10 + $0x10] sm:$0xff] %v2722
  %2755 = vst [vmem:[%s10 + $0x18] sm:$0xff] %v2723
  %2756 = vst [vmem:[%s10 + $0x20] sm:$0xff] %v2724
  %2757 = vst [vmem:[%s10 + $0x28] sm:$0xff] %v2725
  %2758 = vst [vmem:[%s10 + $0x30] sm:$0xff] %v2726
  %2759 = vst [vmem:[%s10 + $0x38] sm:$0xff] %v2727
  %2760 = vst [vmem:[%s10 + $0x40] sm:$0xff] %v2728
  %2761 = vst [vmem:[%s10 + $0x48] sm:$0xff] %v2729
  %2762 = vst [vmem:[%s10 + $0x50] sm:$0xff] %v2730
  %2763 = vst [vmem:[%s10 + $0x58] sm:$0xff] %v2731
  %2764 = vst [vmem:[%s10 + $0x60] sm:$0xff] %v2732
  %2765 = vst [vmem:[%s10 + $0x68] sm:$0xff] %v2733
  %2766 = vst [vmem:[%s10 + $0x70] sm:$0xff] %v2734
  %2767 = vst [vmem:[%s10 + $0x78] sm:$0xff] %v2735
  %v2768 = vld [vmem:[%s5] sm:$0xf]
  %v2769 = vld [vmem:[%s5 + $0x4] sm:$0xf]
  %v2770 = vld [vmem:[%s5 + $0x8] sm:$0xf]
  %v2771 = vld [vmem:[%s5 + $0xc] sm:$0xf]
  %v2772 = vld [vmem:[%s6] sm:$0xff]
  %v2773 = vld [vmem:[%s6 + $0x8] sm:$0xff]
  %v2774 = vld [vmem:[%s6 + $0x10] sm:$0xff]
  %v2775 = vld [vmem:[%s6 + $0x18] sm:$0xff]
  %2777 = vset.pattern.permute.xlu0 0
  %2778 = vperm.xlu0 %2777, %v2772
  %v2779 = vpop.permute.xlu0 %2778
  %2782 = vset.pattern.permute.xlu0 0
  %2783 = vperm.xlu0 %2782, %v2773
  %v2784 = vpop.permute.xlu0 %2783
  %2787 = vset.pattern.permute.xlu0 0
  %2788 = vperm.xlu0 %2787, %v2774
  %v2789 = vpop.permute.xlu0 %2788
  %2792 = vset.pattern.permute.xlu0 0
  %2793 = vperm.xlu0 %2792, %v2775
  %v2794 = vpop.permute.xlu0 %2793
  %v2800 = vunpack.c.l.b16 %v2768
  %v2801 = vunpack.c.l.b16 %v2769
  %v2802 = vunpack.c.l.b16 %v2770
  %v2803 = vunpack.c.l.b16 %v2771
  %v2804 = vpack.c.b16 %v2801, %v2800
  %v2805 = vpack.c.b16 %v2803, %v2802
  %vm2806 = vcmask 523264
  %v2808 = vsel %vm2806, %v2804, 0
  %v2811 = vsel %vm2806, %v2805, 0
  %2813 = vmatprep.subr.bf16.mxu0 0
  %2814 = vmatpush1.bf16.msra.mxu0 0
  %2815 = vmatprep.subr.bf16.mxu0 0
  %2816 = vmatpush1.bf16.msra.mxu0 0
  %2817 = vmatprep.subr.bf16.mxu0 0
  %2818 = vmatpush1.bf16.msra.mxu0 0
  %2819 = vmatprep.subr.bf16.mxu0 0
  %2820 = vmatpush1.bf16.msra.mxu0 0
  %2821 = vmatprep.subr.bf16.mxu0 %v2669
  %2822 = vmatpush1.bf16.msra.mxu0 %v2668
  %2823 = vmatprep.subr.bf16.mxu0 %v2665
  %2824 = vmatpush1.bf16.msra.mxu0 %v2664
  %2825 = vmatprep.subr.bf16.mxu0 %v2661
  %2826 = vmatpush1.bf16.msra.mxu0 %v2660
  %2827 = vmatprep.subr.bf16.mxu0 %v2657
  %2828 = vmatpush1.bf16.msra.mxu0 %v2656
  %2829 = vmatprep.subr.bf16.mxu0 0
  %2830 = vmatpush2.bf16.msra.mxu0 0
  %2831 = vmatprep.subr.bf16.mxu0 0
  %2832 = vmatpush2.bf16.msra.mxu0 0
  %2833 = vmatprep.subr.bf16.mxu0 0
  %2834 = vmatpush2.bf16.msra.mxu0 0
  %2835 = vmatprep.subr.bf16.mxu0 0
  %2836 = vmatpush2.bf16.msra.mxu0 0
  %2837 = vmatprep.subr.bf16.mxu0 0
  %2838 = vmatpush2.bf16.msra.mxu0 0
  %2839 = vmatprep.subr.bf16.mxu0 0
  %2840 = vmatpush2.bf16.msra.mxu0 0
  %2841 = vmatprep.subr.bf16.mxu0 0
  %2842 = vmatpush2.bf16.msra.mxu0 0
  %2843 = vmatprep.subr.bf16.mxu0 0
  %2844 = vmatpush2.bf16.msra.mxu0 0
  %2845 = vmatprep.mubr.bf16.mxu0 0
  %2846 = vmatmul.mubr.bf16.gmra.mxu0 %v2808
  %v2847 = vpop.f32.mrf.mxu0
  %v2848 = vadd.f32 %v2779, %v2847
  %v2849 = vpop.f32.mrf.mxu0
  %v2850 = vadd.f32 %v2779, %v2849
  %v2851 = vpop.f32.mrf.mxu0
  %v2852 = vadd.f32 %v2784, %v2851
  %v2853 = vpop.f32.mrf.mxu0
  %v2854 = vadd.f32 %v2784, %v2853
  %2855 = vmatprep.mubr.bf16.mxu0 0
  %2856 = vmatmul.mubr.bf16.gmra.mxu0 %v2811
  %v2857 = vpop.f32.mrf.mxu0
  %v2858 = vadd.f32 %v2789, %v2857
  %v2859 = vpop.f32.mrf.mxu0
  %v2860 = vadd.f32 %v2789, %v2859
  %v2861 = vpop.f32.mrf.mxu0
  %v2862 = vadd.f32 %v2794, %v2861
  %v2863 = vpop.f32.mrf.mxu0
  %v2864 = vadd.f32 %v2794, %v2863
  %2865 = vdwg.mxu0
  %2866 = vmatprep.subr.bf16.mxu0 0
  %2867 = vmatpush1.bf16.msra.mxu0 0
  %2868 = vmatprep.subr.bf16.mxu0 0
  %2869 = vmatpush1.bf16.msra.mxu0 0
  %2870 = vmatprep.subr.bf16.mxu0 0
  %2871 = vmatpush1.bf16.msra.mxu0 0
  %2872 = vmatprep.subr.bf16.mxu0 0
  %2873 = vmatpush1.bf16.msra.mxu0 0
  %2874 = vmatprep.subr.bf16.mxu0 %v2671
  %2875 = vmatpush1.bf16.msra.mxu0 %v2670
  %2876 = vmatprep.subr.bf16.mxu0 %v2667
  %2877 = vmatpush1.bf16.msra.mxu0 %v2666
  %2878 = vmatprep.subr.bf16.mxu0 %v2663
  %2879 = vmatpush1.bf16.msra.mxu0 %v2662
  %2880 = vmatprep.subr.bf16.mxu0 %v2659
  %2881 = vmatpush1.bf16.msra.mxu0 %v2658
  %2882 = vmatprep.subr.bf16.mxu0 0
  %2883 = vmatpush2.bf16.msra.mxu0 0
  %2884 = vmatprep.subr.bf16.mxu0 0
  %2885 = vmatpush2.bf16.msra.mxu0 0
  %2886 = vmatprep.subr.bf16.mxu0 0
  %2887 = vmatpush2.bf16.msra.mxu0 0
  %2888 = vmatprep.subr.bf16.mxu0 0
  %2889 = vmatpush2.bf16.msra.mxu0 0
  %2890 = vmatprep.subr.bf16.mxu0 0
  %2891 = vmatpush2.bf16.msra.mxu0 0
  %2892 = vmatprep.subr.bf16.mxu0 0
  %2893 = vmatpush2.bf16.msra.mxu0 0
  %2894 = vmatprep.subr.bf16.mxu0 0
  %2895 = vmatpush2.bf16.msra.mxu0 0
  %2896 = vmatprep.subr.bf16.mxu0 0
  %2897 = vmatpush2.bf16.msra.mxu0 0
  %2898 = vmatprep.mubr.bf16.mxu0 0
  %2899 = vmatmul.mubr.bf16.gmra.mxu0 %v2808
  %v2900 = vpop.f32.mrf.mxu0
  %v2901 = vadd.f32 %v2779, %v2900
  %v2902 = vpop.f32.mrf.mxu0
  %v2903 = vadd.f32 %v2779, %v2902
  %v2904 = vpop.f32.mrf.mxu0
  %v2905 = vadd.f32 %v2784, %v2904
  %v2906 = vpop.f32.mrf.mxu0
  %v2907 = vadd.f32 %v2784, %v2906
  %2908 = vmatprep.mubr.bf16.mxu0 0
  %2909 = vmatmul.mubr.bf16.gmra.mxu0 %v2811
  %v2910 = vpop.f32.mrf.mxu0
  %v2911 = vadd.f32 %v2789, %v2910
  %v2912 = vpop.f32.mrf.mxu0
  %v2913 = vadd.f32 %v2789, %v2912
  %v2914 = vpop.f32.mrf.mxu0
  %v2915 = vadd.f32 %v2794, %v2914
  %v2916 = vpop.f32.mrf.mxu0
  %v2917 = vadd.f32 %v2794, %v2916
  %2918 = vdwg.mxu0
  %v2919 = vmax.f32 %v2848, 0.0
  %v2920 = vmax.f32 %v2850, 0.0
  %v2921 = vmax.f32 %v2901, 0.0
  %v2922 = vmax.f32 %v2903, 0.0
  %v2923 = vmax.f32 %v2852, 0.0
  %v2924 = vmax.f32 %v2854, 0.0
  %v2925 = vmax.f32 %v2905, 0.0
  %v2926 = vmax.f32 %v2907, 0.0
  %v2927 = vmax.f32 %v2858, 0.0
  %v2928 = vmax.f32 %v2860, 0.0
  %v2929 = vmax.f32 %v2911, 0.0
  %v2930 = vmax.f32 %v2913, 0.0
  %v2931 = vmax.f32 %v2862, 0.0
  %v2932 = vmax.f32 %v2864, 0.0
  %v2933 = vmax.f32 %v2915, 0.0
  %v2934 = vmax.f32 %v2917, 0.0
  %v2935 = vpack.c.bf16 %v2923, %v2919
  %v2936 = vpack.c.bf16 %v2924, %v2920
  %v2937 = vpack.c.bf16 %v2925, %v2921
  %v2938 = vpack.c.bf16 %v2926, %v2922
  %v2939 = vpack.c.bf16 %v2931, %v2927
  %v2940 = vpack.c.bf16 %v2932, %v2928
  %v2941 = vpack.c.bf16 %v2933, %v2929
  %v2942 = vpack.c.bf16 %v2934, %v2930
  %v2951 = vunpack.c.l.b16 %v2935
  %v2952 = vunpack.c.l.b16 %v2936
  %v2953 = vunpack.c.l.b16 %v2937
  %v2954 = vunpack.c.l.b16 %v2938
  %v2955 = vunpack.c.h.b16 %v2935
  %v2956 = vunpack.c.h.b16 %v2936
  %v2957 = vunpack.c.h.b16 %v2937
  %v2958 = vunpack.c.h.b16 %v2938
  %v2959 = vunpack.c.l.b16 %v2939
  %v2960 = vunpack.c.l.b16 %v2940
  %v2961 = vunpack.c.l.b16 %v2941
  %v2962 = vunpack.c.l.b16 %v2942
  %v2963 = vunpack.c.h.b16 %v2939
  %v2964 = vunpack.c.h.b16 %v2940
  %v2965 = vunpack.c.h.b16 %v2941
  %v2966 = vunpack.c.h.b16 %v2942
  %v2967 = vpack.c.b16 %v2952, %v2951
  %v2968 = vpack.c.b16 %v2954, %v2953
  %v2969 = vpack.c.b16 %v2956, %v2955
  %v2970 = vpack.c.b16 %v2958, %v2957
  %v2971 = vpack.c.b16 %v2960, %v2959
  %v2972 = vpack.c.b16 %v2962, %v2961
  %v2973 = vpack.c.b16 %v2964, %v2963
  %v2974 = vpack.c.b16 %v2966, %v2965
  %2983 = vst [vmem:[%s11] sm:$0xff] %v2967
  %2984 = vst [vmem:[%s11 + $0x8] sm:$0xff] %v2968
  %2985 = vst [vmem:[%s11 + $0x10] sm:$0xff] %v2969
  %2986 = vst [vmem:[%s11 + $0x18] sm:$0xff] %v2970
  %2987 = vst [vmem:[%s11 + $0x20] sm:$0xff] %v2971
  %2988 = vst [vmem:[%s11 + $0x28] sm:$0xff] %v2972
  %2989 = vst [vmem:[%s11 + $0x30] sm:$0xff] %v2973
  %2990 = vst [vmem:[%s11 + $0x38] sm:$0xff] %v2974
  %v2991 = vld [vmem:[%s7] sm:$0xf]
  %v2992 = vld [vmem:[%s7 + $0x4] sm:$0xf]
  %v2993 = vld [vmem:[%s7 + $0x8] sm:$0xf]
  %v2994 = vld [vmem:[%s7 + $0xc] sm:$0xf]
  %v2995 = vld [vmem:[%s7 + $0x10] sm:$0xf]
  %v2996 = vld [vmem:[%s7 + $0x14] sm:$0xf]
  %v2997 = vld [vmem:[%s7 + $0x18] sm:$0xf]
  %v2998 = vld [vmem:[%s7 + $0x1c] sm:$0xf]
  %v2999 = vld [vmem:[%s8] sm:$0xff]
  %v3000 = vld [vmem:[%s8 + $0x8] sm:$0xff]
  %v3001 = vld [vmem:[%s8 + $0x10] sm:$0xff]
  %v3002 = vld [vmem:[%s8 + $0x18] sm:$0xff]
  %v3003 = vld [vmem:[%s8 + $0x20] sm:$0xff]
  %v3004 = vld [vmem:[%s8 + $0x28] sm:$0xff]
  %v3005 = vld [vmem:[%s8 + $0x30] sm:$0xff]
  %v3006 = vld [vmem:[%s8 + $0x38] sm:$0xff]
  %3008 = vset.pattern.permute.xlu0 0
  %3009 = vperm.xlu0 %3008, %v2999
  %v3010 = vpop.permute.xlu0 %3009
  %3013 = vset.pattern.permute.xlu0 0
  %3014 = vperm.xlu0 %3013, %v3000
  %v3015 = vpop.permute.xlu0 %3014
  %3018 = vset.pattern.permute.xlu0 0
  %3019 = vperm.xlu0 %3018, %v3001
  %v3020 = vpop.permute.xlu0 %3019
  %3023 = vset.pattern.permute.xlu0 0
  %3024 = vperm.xlu0 %3023, %v3002
  %v3025 = vpop.permute.xlu0 %3024
  %3028 = vset.pattern.permute.xlu0 0
  %3029 = vperm.xlu0 %3028, %v3003
  %v3030 = vpop.permute.xlu0 %3029
  %3033 = vset.pattern.permute.xlu0 0
  %3034 = vperm.xlu0 %3033, %v3004
  %v3035 = vpop.permute.xlu0 %3034
  %3038 = vset.pattern.permute.xlu0 0
  %3039 = vperm.xlu0 %3038, %v3005
  %v3040 = vpop.permute.xlu0 %3039
  %3043 = vset.pattern.permute.xlu0 0
  %3044 = vperm.xlu0 %3043, %v3006
  %v3045 = vpop.permute.xlu0 %3044
  %v3055 = vunpack.c.l.b16 %v2991
  %v3056 = vunpack.c.l.b16 %v2992
  %v3057 = vunpack.c.l.b16 %v2993
  %v3058 = vunpack.c.l.b16 %v2994
  %v3059 = vunpack.c.l.b16 %v2995
  %v3060 = vunpack.c.l.b16 %v2996
  %v3061 = vunpack.c.l.b16 %v2997
  %v3062 = vunpack.c.l.b16 %v2998
  %v3063 = vpack.c.b16 %v3056, %v3055
  %v3064 = vpack.c.b16 %v3058, %v3057
  %v3065 = vpack.c.b16 %v3060, %v3059
  %v3066 = vpack.c.b16 %v3062, %v3061
  %3071 = vmatprep.subr.bf16.mxu0 0
  %3072 = vmatpush1.bf16.msra.mxu0 %v2942
  %3073 = vmatprep.subr.bf16.mxu0 0
  %3074 = vmatpush1.bf16.msra.mxu0 %v2938
  %3075 = vmatprep.subr.bf16.mxu0 0
  %3076 = vmatpush1.bf16.msra.mxu0 %v2941
  %3077 = vmatprep.subr.bf16.mxu0 0
  %3078 = vmatpush1.bf16.msra.mxu0 %v2937
  %3079 = vmatprep.subr.bf16.mxu0 0
  %3080 = vmatpush1.bf16.msra.mxu0 %v2940
  %3081 = vmatprep.subr.bf16.mxu0 0
  %3082 = vmatpush1.bf16.msra.mxu0 %v2936
  %3083 = vmatprep.subr.bf16.mxu0 0
  %3084 = vmatpush1.bf16.msra.mxu0 %v2939
  %3085 = vmatprep.subr.bf16.mxu0 0
  %3086 = vmatpush1.bf16.msra.mxu0 %v2935
  %3087 = vmatprep.subr.bf16.mxu0 0
  %3088 = vmatpush2.bf16.msra.mxu0 0
  %3089 = vmatprep.subr.bf16.mxu0 0
  %3090 = vmatpush2.bf16.msra.mxu0 0
  %3091 = vmatprep.subr.bf16.mxu0 0
  %3092 = vmatpush2.bf16.msra.mxu0 0
  %3093 = vmatprep.subr.bf16.mxu0 0
  %3094 = vmatpush2.bf16.msra.mxu0 0
  %3095 = vmatprep.subr.bf16.mxu0 0
  %3096 = vmatpush2.bf16.msra.mxu0 0
  %3097 = vmatprep.subr.bf16.mxu0 0
  %3098 = vmatpush2.bf16.msra.mxu0 0
  %3099 = vmatprep.subr.bf16.mxu0 0
  %3100 = vmatpush2.bf16.msra.mxu0 0
  %3101 = vmatprep.subr.bf16.mxu0 0
  %3102 = vmatpush2.bf16.msra.mxu0 0
  %3103 = vmatprep.mubr.bf16.mxu0 0
  %3104 = vmatmul.mubr.bf16.gmra.mxu0 %v3063
  %v3105 = vpop.f32.mrf.mxu0
  %v3106 = vadd.f32 %v3010, %v3105
  %v3107 = vpop.f32.mrf.mxu0
  %v3108 = vpop.f32.mrf.mxu0
  %v3109 = vadd.f32 %v3015, %v3108
  %v3110 = vpop.f32.mrf.mxu0
  %3111 = vmatprep.mubr.bf16.mxu0 0
  %3112 = vmatmul.mubr.bf16.gmra.mxu0 %v3064
  %v3113 = vpop.f32.mrf.mxu0
  %v3114 = vadd.f32 %v3020, %v3113
  %v3115 = vpop.f32.mrf.mxu0
  %v3116 = vpop.f32.mrf.mxu0
  %v3117 = vadd.f32 %v3025, %v3116
  %v3118 = vpop.f32.mrf.mxu0
  %3119 = vmatprep.mubr.bf16.mxu0 0
  %3120 = vmatmul.mubr.bf16.gmra.mxu0 %v3065
  %v3121 = vpop.f32.mrf.mxu0
  %v3122 = vadd.f32 %v3030, %v3121
  %v3123 = vpop.f32.mrf.mxu0
  %v3124 = vpop.f32.mrf.mxu0
  %v3125 = vadd.f32 %v3035, %v3124
  %v3126 = vpop.f32.mrf.mxu0
  %3127 = vmatprep.mubr.bf16.mxu0 0
  %3128 = vmatmul.mubr.bf16.gmra.mxu0 %v3066
  %v3129 = vpop.f32.mrf.mxu0
  %v3130 = vadd.f32 %v3040, %v3129
  %v3131 = vpop.f32.mrf.mxu0
  %v3132 = vpop.f32.mrf.mxu0
  %v3133 = vadd.f32 %v3045, %v3132
  %v3134 = vpop.f32.mrf.mxu0
  %3135 = vdwg.mxu0
  %v3136 = vmax.f32 %v3106, 0.0
  %v3137 = vmax.f32 %v3109, 0.0
  %v3138 = vmax.f32 %v3114, 0.0
  %v3139 = vmax.f32 %v3117, 0.0
  %v3140 = vmax.f32 %v3122, 0.0
  %v3141 = vmax.f32 %v3125, 0.0
  %v3142 = vmax.f32 %v3130, 0.0
  %v3143 = vmax.f32 %v3133, 0.0
  %v3144 = vpack.c.bf16 %v3137, %v3136
  %v3145 = vpack.c.bf16 %v3139, %v3138
  %v3146 = vpack.c.bf16 %v3141, %v3140
  %v3147 = vpack.c.bf16 %v3143, %v3142
  %v3152 = vunpack.c.l.b16 %v3144
  %v3153 = vunpack.c.h.b16 %v3144
  %v3154 = vunpack.c.l.b16 %v3145
  %v3155 = vunpack.c.h.b16 %v3145
  %v3156 = vunpack.c.l.b16 %v3146
  %v3157 = vunpack.c.h.b16 %v3146
  %v3158 = vunpack.c.l.b16 %v3147
  %v3159 = vunpack.c.h.b16 %v3147
  %v3160 = vpack.c.b16 %v3152, %v3152
  %v3161 = vpack.c.b16 %v3153, %v3153
  %v3162 = vpack.c.b16 %v3154, %v3154
  %v3163 = vpack.c.b16 %v3155, %v3155
  %v3164 = vpack.c.b16 %v3156, %v3156
  %v3165 = vpack.c.b16 %v3157, %v3157
  %v3166 = vpack.c.b16 %v3158, %v3158
  %v3167 = vpack.c.b16 %v3159, %v3159
  %3176 = vst [vmem:[%s12] sm:$0xf] %v3160
  %3177 = vst [vmem:[%s12 + $0x4] sm:$0xf] %v3161
  %3178 = vst [vmem:[%s12 + $0x8] sm:$0xf] %v3162
  %3179 = vst [vmem:[%s12 + $0xc] sm:$0xf] %v3163
  %3180 = vst [vmem:[%s12 + $0x10] sm:$0xf] %v3164
  %3181 = vst [vmem:[%s12 + $0x14] sm:$0xf] %v3165
  %3182 = vst [vmem:[%s12 + $0x18] sm:$0xf] %v3166
  %3183 = vst [vmem:[%s12 + $0x1c] sm:$0xf] %v3167
  // Predicated region
  $region38: #{_pyramid_forward.1} parent=0 // pred_check
    _
  $region39: #{_pyramid_forward.1} parent=0 // pred_check_branch
    %3185 = sbr.rel (0) target = $region41
  $region40: #{_pyramid_forward.1} parent=0 // pred_region
    _
  $region41: #{_pyramid_forward.1} parent=0 // pred_fallthru
    _
  // Predicated region
  $region42: #{_pyramid_forward.1} parent=0 // pred_check
    _
  $region43: #{_pyramid_forward.1} parent=0 // pred_check_branch
    %3187 = sbr.rel (0) target = $region45
  $region44: #{_pyramid_forward.1} parent=0 // pred_region
    _
  $region45: #{_pyramid_forward.1} parent=0 // pred_fallthru
    _
  // Predicated region
  $region46: #{_pyramid_forward.1} parent=0 // pred_check
    _
  $region47: #{_pyramid_forward.1} parent=0 // pred_check_branch
    %3189 = sbr.rel (0) target = $region49
  $region48: #{_pyramid_forward.1} parent=0 // pred_region
    _
  $region49: #{_pyramid_forward.1} parent=0 // pred_fallthru
    _
  // Predicated region
  $region50: #{_pyramid_forward.1} parent=0 // pred_check
    _
  $region51: #{_pyramid_forward.1} parent=0 // pred_check_branch
    %3191 = sbr.rel (0) target = $region53
  $region52: #{_pyramid_forward.1} parent=0 // pred_region
    _
  $region53: #{_pyramid_forward.1} parent=0 // pred_fallthru
    _
  // Predicated region
  $region54: #{_pyramid_forward.1} parent=0 // pred_check
    _
  $region55: #{_pyramid_forward.1} parent=0 // pred_check_branch
    %3193 = sbr.rel (0) target = $region57
  $region56: #{_pyramid_forward.1} parent=0 // pred_region
    _
  $region57: #{_pyramid_forward.1} parent=0 // pred_fallthru
    _
  // Predicated region
  $region58: #{_pyramid_forward.1} parent=0 // pred_check
    _
  $region59: #{_pyramid_forward.1} parent=0 // pred_check_branch
    %3195 = sbr.rel (0) target = $region61
  $region60: #{_pyramid_forward.1} parent=0 // pred_region
    _
  $region61: #{_pyramid_forward.1} parent=0 // pred_fallthru
    _
  // Predicated region
  $region62: #{_pyramid_forward.1} parent=0 // pred_check
    _
  $region63: #{_pyramid_forward.1} parent=0 // pred_check_branch
    %3197 = sbr.rel (0) target = $region65
  $region64: #{_pyramid_forward.1} parent=0 // pred_region
    _
  $region65: #{_pyramid_forward.1} parent=0 // pred_fallthru
    _
  // Predicated region
  $region66: #{_pyramid_forward.1} parent=0 // pred_check
    _
  $region67: #{_pyramid_forward.1} parent=0 // pred_check_branch
    %3199 = sbr.rel (0) target = $region69
  $region68: #{_pyramid_forward.1} parent=0 // pred_region
    _
  $region69: #{_pyramid_forward.1} parent=0 // pred_fallthru
    _

</llo_original>
